<compile_context>
chip_gen: v7x
topology: tpu7x:2x2x1
jax: 0.10.0
libtpu: 0.0.40
codegen_flags: <defaults>
</compile_context>

<pallas_src>
import numpy as np

import jax
import jax.numpy as jnp
from jax import lax
from jax.experimental import pallas as pl
from jax.experimental.pallas import tpu as pltpu

# ---------------------------------------------------------------------------
# Model hyper-parameters (small, consistent with the module)
# ---------------------------------------------------------------------------
B = 2            # batch
H = 8            # feature-map height
W = 8            # feature-map width
C = 32           # dim
NUM_HEADS = 4
WINDOW = 4       # window_size
SHIFT = 2        # shift_size (SW-MSA path, exercises mask_matrix)
MLP_RATIO = 4.0

L = H * W
N = WINDOW * WINDOW                      # tokens per window
HEAD_DIM = C // NUM_HEADS
SCALE = HEAD_DIM ** (-0.5)
HIDDEN = int(C * MLP_RATIO)
LN_EPS = 1e-5
NW_PER_IMG = (H // WINDOW) * (W // WINDOW)   # windows per image
R = NW_PER_IMG * N                           # token rows handled per grid step

F32 = jnp.float32
BF16 = jnp.bfloat16


# ---------------------------------------------------------------------------
# Exact-GELU helper (erf via Abramowitz & Stegun 7.1.26, |err| < 1.5e-7).
# TODO(synk): polynomial erf is used instead of lax.erf to guarantee a Mosaic
#             lowering; numerics match nn.GELU() to ~1e-7.
# ---------------------------------------------------------------------------
def _erf_poly(x):
    a1, a2, a3, a4, a5 = (0.254829592, -0.284496736, 1.421413741,
                          -1.453152027, 1.061405429)
    p = 0.3275911
    sign = jnp.where(x >= 0.0, 1.0, -1.0)
    ax = jnp.abs(x)
    t = 1.0 / (1.0 + p * ax)
    poly = ((((a5 * t + a4) * t + a3) * t + a2) * t + a1) * t
    y = 1.0 - poly * jnp.exp(-ax * ax)
    return sign * y


def _gelu_exact(x):
    return 0.5 * x * (1.0 + _erf_poly(x * 0.7071067811865476))


def _layernorm(x, gamma, beta):
    mu = jnp.mean(x, axis=-1, keepdims=True)
    var = jnp.mean((x - mu) * (x - mu), axis=-1, keepdims=True)
    return (x - mu) * lax.rsqrt(var + LN_EPS) * gamma + beta


def _mm_bf16(a, w, bias):
    """bf16-operand matmul with f32 accumulation + f32 bias add."""
    return jnp.dot(a.astype(BF16), w.astype(BF16),
                   preferred_element_type=F32) + bias


# NT matmul dimension numbers: contract last dim of both operands (q @ k.T
# without an explicit XLU transpose).
_NT_DIMS = (((1,), (1,)), ((), ()))


# ---------------------------------------------------------------------------
# The single fused Pallas kernel: one grid step == one image (4 windows,
# 64 token rows in shifted-window order).
# ---------------------------------------------------------------------------
def swin_block_kernel(x_ref, g1_ref, b1_ref, qkvw_ref, qkvb_ref,
                      projw_ref, projb_ref, abias_ref,
                      g2_ref, b2_ref, w1_ref, fb1_ref, w2_ref, fb2_ref,
                      o_ref):
    x = x_ref[...]                                               # (R, C) f32
    xn = _layernorm(x, g1_ref[...], b1_ref[...])

    # QKV projection for all windows of this image at once: (R, C) @ (C, 3C)
    qkv = _mm_bf16(xn, qkvw_ref[...], qkvb_ref[...])             # (R, 3C) f32

    q_all = qkv[:, :C] * SCALE                                   # (R, C)
    k_all = qkv[:, C:2 * C]                                      # (R, C)
    v_all = qkv[:, 2 * C:]                                       # (R, C)

    head_outs = []
    for h in range(NUM_HEADS):
        lo, hi = h * HEAD_DIM, (h + 1) * HEAD_DIM
        q = q_all[:, lo:hi]                                      # (R, d)
        k = k_all[:, lo:hi]                                      # (R, d)
        v = v_all[:, lo:hi]                                      # (R, d)

        # Block-diagonal scores across all 4 windows in one MXU push.
        s = lax.dot_general(q, k, _NT_DIMS,
                            preferred_element_type=F32)          # (R, R)
        # rel-pos bias + shift mask + cross-window -inf, precombined per head.
        s = s + abias_ref[h]
        s = s - jnp.max(s, axis=-1, keepdims=True)
        e = jnp.exp(s)
        inv = pl.reciprocal(jnp.sum(e, axis=-1, keepdims=True), approx=True)
        p = e * inv                                              # (R, R)
        head_outs.append(jnp.dot(p, v, preferred_element_type=F32))   # (R, d)

    a = jnp.concatenate(head_outs, axis=-1)                      # (R, C)
    a = _mm_bf16(a, projw_ref[...], projb_ref[...])              # (R, C)

    # residual + norm2 + MLP + residual, all resident in VMEM
    x1 = x + a
    h2 = _layernorm(x1, g2_ref[...], b2_ref[...])
    hm = _mm_bf16(h2, w1_ref[...], fb1_ref[...])                 # (R, HIDDEN)
    hm = _gelu_exact(hm)
    y = _mm_bf16(hm, w2_ref[...], fb2_ref[...])                  # (R, C)
    o_ref[...] = x1 + y


def run_swin_block(x_flat, attn_bias_full, params):
    """x_flat: (B*R, C) tokens in shifted-window order; returns same layout."""
    M, Cc = x_flat.shape
    R_ = attn_bias_full.shape[-1]
    grid = (M // R_,)                       # one step per image (=(B,))
    return pl.pallas_call(
        swin_block_kernel,
        out_shape=jax.ShapeDtypeStruct((M, Cc), F32),
        grid=grid,
        in_specs=[
            pl.BlockSpec((R_, Cc), lambda b: (b, 0)),                 # x rows
            pl.BlockSpec((1, Cc), lambda b: (0, 0)),                  # ln1 gamma
            pl.BlockSpec((1, Cc), lambda b: (0, 0)),                  # ln1 beta
            pl.BlockSpec((Cc, 3 * Cc), lambda b: (0, 0)),             # qkv_w
            pl.BlockSpec((1, 3 * Cc), lambda b: (0, 0)),              # qkv_b
            pl.BlockSpec((Cc, Cc), lambda b: (0, 0)),                 # proj_w
            pl.BlockSpec((1, Cc), lambda b: (0, 0)),                  # proj_b
            pl.BlockSpec((NUM_HEADS, R_, R_), lambda b: (0, 0, 0)),   # bias+mask
            pl.BlockSpec((1, Cc), lambda b: (0, 0)),                  # ln2 gamma
            pl.BlockSpec((1, Cc), lambda b: (0, 0)),                  # ln2 beta
            pl.BlockSpec((Cc, HIDDEN), lambda b: (0, 0)),             # fc1_w
            pl.BlockSpec((1, HIDDEN), lambda b: (0, 0)),              # fc1_b
            pl.BlockSpec((HIDDEN, Cc), lambda b: (0, 0)),             # fc2_w
            pl.BlockSpec((1, Cc), lambda b: (0, 0)),                  # fc2_b
        ],
        out_specs=pl.BlockSpec((R_, Cc), lambda b: (b, 0)),
        compiler_params=pltpu.CompilerParams(
            dimension_semantics=("parallel",)),                  # 2 TCs on v7x
    )(x_flat,
      params["ln1_g"], params["ln1_b"],
      params["qkv_w"], params["qkv_b"],
      params["proj_w"], params["proj_b"],
      attn_bias_full,
      params["ln2_g"], params["ln2_b"],
      params["fc1_w"], params["fc1_b"],
      params["fc2_w"], params["fc2_b"])


# ---------------------------------------------------------------------------
# Window partition / reverse (layout glue, plain JAX)
# ---------------------------------------------------------------------------
def window_partition(x, ws):
    b, h, w, c = x.shape
    x = x.reshape(b, h // ws, ws, w // ws, ws, c)
    return x.transpose(0, 1, 3, 2, 4, 5).reshape(-1, ws, ws, c)


def window_reverse(windows, ws, h, w):
    b = windows.shape[0] // (h * w // ws // ws)
    x = windows.reshape(b, h // ws, w // ws, ws, ws, -1)
    return x.transpose(0, 1, 3, 2, 4, 5).reshape(b, h, w, -1)


# ---------------------------------------------------------------------------
# Parameter construction (deterministic) + relative position bias / masks
# ---------------------------------------------------------------------------
def make_params(key):
    keys = jax.random.split(key, 12)
    p = {}
    p["ln1_g"] = (1.0 + 0.02 * jax.random.normal(keys[0], (1, C))).astype(F32)
    p["ln1_b"] = (0.02 * jax.random.normal(keys[1], (1, C))).astype(F32)
    p["qkv_w"] = (0.02 * jax.random.normal(keys[2], (C, 3 * C))).astype(F32)
    p["qkv_b"] = (0.02 * jax.random.normal(keys[3], (1, 3 * C))).astype(F32)
    p["proj_w"] = (0.02 * jax.random.normal(keys[4], (C, C))).astype(F32)
    p["proj_b"] = (0.02 * jax.random.normal(keys[5], (1, C))).astype(F32)
    p["rel_table"] = (0.02 * jax.random.normal(
        keys[6], ((2 * WINDOW - 1) * (2 * WINDOW - 1), NUM_HEADS))).astype(F32)
    p["ln2_g"] = (1.0 + 0.02 * jax.random.normal(keys[7], (1, C))).astype(F32)
    p["ln2_b"] = (0.02 * jax.random.normal(keys[8], (1, C))).astype(F32)
    p["fc1_w"] = (0.02 * jax.random.normal(keys[9], (C, HIDDEN))).astype(F32)
    p["fc1_b"] = (0.02 * jax.random.normal(keys[10], (1, HIDDEN))).astype(F32)
    p["fc2_w"] = (0.02 * jax.random.normal(keys[11], (HIDDEN, C))).astype(F32)
    p["fc2_b"] = jnp.zeros((1, C), F32)
    return p


def relative_position_index():
    coords = np.stack(np.meshgrid(np.arange(WINDOW), np.arange(WINDOW),
                                  indexing="ij"))               # (2, ws, ws)
    coords_flat = coords.reshape(2, -1)                          # (2, N)
    rel = coords_flat[:, :, None] - coords_flat[:, None, :]      # (2, N, N)
    rel = rel.transpose(1, 2, 0).astype(np.int64)                # (N, N, 2)
    rel[:, :, 0] += WINDOW - 1
    rel[:, :, 1] += WINDOW - 1
    rel[:, :, 0] *= 2 * WINDOW - 1
    return jnp.asarray(rel.sum(-1), jnp.int32)                   # (N, N)


def build_rel_bias(table, index):
    bias = table[index.reshape(-1)].reshape(N, N, NUM_HEADS)
    return bias.transpose(2, 0, 1).astype(F32)                   # (nH, N, N)


def build_shift_mask(Hp, Wp):
    """Standard Swin shifted-window attention mask, shape (nW, N, N)."""
    img_mask = np.zeros((1, Hp, Wp, 1), np.float32)
    h_slices = (slice(0, -WINDOW), slice(-WINDOW, -SHIFT), slice(-SHIFT, None))
    w_slices = (slice(0, -WINDOW), slice(-WINDOW, -SHIFT), slice(-SHIFT, None))
    cnt = 0
    for hs in h_slices:
        for wsl in w_slices:
            img_mask[:, hs, wsl, :] = cnt
            cnt += 1
    mw = np.asarray(window_partition(jnp.asarray(img_mask), WINDOW))
    mw = mw.reshape(-1, N)
    diff = mw[:, None, :] - mw[:, :, None]
    mask = np.where(diff != 0, -100.0, 0.0).astype(np.float32)
    return jnp.asarray(mask)


def build_full_attn_bias(rel_bias, shift_mask):
    """Combine rel-pos bias + shift mask + cross-window block mask into one
    (num_heads, nW*N, nW*N) additive bias (block-diagonal, -1e9 off-diagonal),
    hoisted out of the forward so it is built exactly once."""
    nH = rel_bias.shape[0]
    nW_ = shift_mask.shape[0]
    blocks = rel_bias[:, None, :, :] + shift_mask[None, :, :, :]   # (nH,nW,N,N)
    diag = jnp.eye(nW_, dtype=bool)[None, :, None, :, None]        # (1,nW,1,nW,1)
    blocks5 = blocks[:, :, :, None, :]                             # (nH,nW,N,1,N)
    full = jnp.where(diag, blocks5, jnp.float32(-1e9))             # (nH,nW,N,nW,N)
    return full.reshape(nH, nW_ * N, nW_ * N).astype(F32)


# ---------------------------------------------------------------------------
# SwinTransformerBlock forward (single fused Pallas kernel + permutation glue)
# ---------------------------------------------------------------------------
def swin_block_forward(x, params, attn_bias_full):
    """x: (B, L, C) float32; attn_bias_full: (nH, nW*N, nW*N) float32."""
    Bb, Ll, Cc = x.shape
    xr = x.reshape(Bb, H, W, Cc)

    pad_r = (WINDOW - W % WINDOW) % WINDOW
    pad_b = (WINDOW - H % WINDOW) % WINDOW
    # TODO(synk): norm1 is fused into the kernel, so window padding (which the
    # reference applies AFTER norm1) is only supported when it is a no-op;
    # true here since H, W are multiples of WINDOW.
    assert pad_r == 0 and pad_b == 0
    Hp, Wp = H + pad_b, W + pad_r

    # cyclic shift + window partition of the RAW (pre-norm) tokens; norm1,
    # attention, residuals and MLP all run per-token inside the fused kernel,
    # so the permutation can be undone after the kernel.
    if SHIFT > 0:
        shifted = jnp.roll(xr, shift=(-SHIFT, -SHIFT), axis=(1, 2))
    else:
        shifted = xr
    x_flat = window_partition(shifted, WINDOW).reshape(-1, Cc)   # (B*nW*N, C)

    y_flat = run_swin_block(x_flat, attn_bias_full, params)      # (B*nW*N, C)

    y_windows = y_flat.reshape(-1, WINDOW, WINDOW, Cc)
    y_img = window_reverse(y_windows, WINDOW, Hp, Wp)
    if SHIFT > 0:
        y_img = jnp.roll(y_img, shift=(SHIFT, SHIFT), axis=(1, 2))
    return y_img.reshape(Bb, Ll, Cc)


# ---------------------------------------------------------------------------
# Pure-JAX reference (mirrors the PyTorch module), used as a sanity check
# ---------------------------------------------------------------------------
def swin_block_reference(x, params, mask_matrix):
    Bb, Ll, Cc = x.shape
    shortcut = x
    xn = _layernorm(x, params["ln1_g"], params["ln1_b"]).reshape(Bb, H, W, Cc)
    pad_r = (WINDOW - W % WINDOW) % WINDOW
    pad_b = (WINDOW - H % WINDOW) % WINDOW
    xp = jnp.pad(xn, ((0, 0), (0, pad_b), (0, pad_r), (0, 0)))
    Hp, Wp = H + pad_b, W + pad_r
    if SHIFT > 0:
        shifted = jnp.roll(xp, shift=(-SHIFT, -SHIFT), axis=(1, 2))
        attn_mask = mask_matrix
    else:
        shifted = xp
        attn_mask = None
    nW = (Hp // WINDOW) * (Wp // WINDOW)
    xw = window_partition(shifted, WINDOW).reshape(-1, N, Cc)
    B_ = xw.shape[0]

    qkv = xw @ params["qkv_w"] + params["qkv_b"]
    qkv = qkv.reshape(B_, N, 3, NUM_HEADS, HEAD_DIM).transpose(2, 0, 3, 1, 4)
    q, k, v = qkv[0] * SCALE, qkv[1], qkv[2]
    attn = q @ k.transpose(0, 1, 3, 2)
    rel_bias = build_rel_bias(params["rel_table"], relative_position_index())
    attn = attn + rel_bias[None]
    if attn_mask is not None:
        attn = attn.reshape(B_ // nW, nW, NUM_HEADS, N, N) + \
            attn_mask[None, :, None]
        attn = attn.reshape(B_, NUM_HEADS, N, N)
    attn = jax.nn.softmax(attn, axis=-1)
    out = (attn @ v).transpose(0, 2, 1, 3).reshape(B_, N, Cc)
    out = out @ params["proj_w"] + params["proj_b"]

    out = window_reverse(out.reshape(-1, WINDOW, WINDOW, Cc), WINDOW, Hp, Wp)
    if SHIFT > 0:
        out = jnp.roll(out, shift=(SHIFT, SHIFT), axis=(1, 2))
    out = out[:, :H, :W, :].reshape(Bb, Ll, Cc)

    x1 = shortcut + out
    h = _layernorm(x1, params["ln2_g"], params["ln2_b"])
    h = _gelu_exact(h @ params["fc1_w"] + params["fc1_b"])
    return x1 + (h @ params["fc2_w"] + params["fc2_b"])


# ---------------------------------------------------------------------------
if __name__ == "__main__":
    key = jax.random.PRNGKey(0)
    kx, kp = jax.random.split(key)
    x = jax.random.normal(kx, (B, L, C), dtype=F32)
    params = make_params(kp)

    # Hoisted constants: built exactly once, not per forward.
    mask_matrix = build_shift_mask(H, W)                                 # (nW,N,N)
    rel_bias = build_rel_bias(params["rel_table"], relative_position_index())
    shift_mask = mask_matrix if SHIFT > 0 else jnp.zeros_like(mask_matrix)
    attn_bias_full = build_full_attn_bias(rel_bias, shift_mask)          # (nH,R,R)

    fwd = jax.jit(swin_block_forward)
    out = jax.block_until_ready(fwd(x, params, attn_bias_full))

    ref = jax.block_until_ready(swin_block_reference(x, params, mask_matrix))
    assert out.shape == (B, L, C)
    assert bool(jnp.allclose(out, ref, atol=2e-3, rtol=2e-3)), \
        float(jnp.max(jnp.abs(out - ref)))

    print("KERNEL_OK")
</pallas_src>

<mosaic_0001>
module attributes {stable_mosaic.version = 11 : i64} {
  func.func @swin_block_kernel(%arg0: i32, %arg1: memref<64x32xf32, #tpu.memory_space<vmem>>, %arg2: memref<1x32xf32, #tpu.memory_space<vmem>>, %arg3: memref<1x32xf32, #tpu.memory_space<vmem>>, %arg4: memref<32x96xf32, #tpu.memory_space<vmem>>, %arg5: memref<1x96xf32, #tpu.memory_space<vmem>>, %arg6: memref<32x32xf32, #tpu.memory_space<vmem>>, %arg7: memref<1x32xf32, #tpu.memory_space<vmem>>, %arg8: memref<4x64x64xf32, #tpu.memory_space<vmem>>, %arg9: memref<1x32xf32, #tpu.memory_space<vmem>>, %arg10: memref<1x32xf32, #tpu.memory_space<vmem>>, %arg11: memref<32x128xf32, #tpu.memory_space<vmem>>, %arg12: memref<1x128xf32, #tpu.memory_space<vmem>>, %arg13: memref<128x32xf32, #tpu.memory_space<vmem>>, %arg14: memref<1x32xf32, #tpu.memory_space<vmem>>, %arg15: memref<64x32xf32, #tpu.memory_space<vmem>>) attributes {dimension_semantics = [#tpu.dimension_semantics<parallel>], iteration_bounds = array<i64: 2>, scalar_prefetch = 0 : i64, scratch_operands = 0 : i64, tpu.core_type = #tpu.core_type<tc>, window_params = [{transform_indices = @transform_0, window_bounds = array<i64: 64, 32>}, {pipeline_mode = #tpu.pipeline_mode<synchronous>, transform_indices = @transform_1, window_bounds = array<i64: 1, 32>}, {pipeline_mode = #tpu.pipeline_mode<synchronous>, transform_indices = @transform_2, window_bounds = array<i64: 1, 32>}, {pipeline_mode = #tpu.pipeline_mode<synchronous>, transform_indices = @transform_3, window_bounds = array<i64: 32, 96>}, {pipeline_mode = #tpu.pipeline_mode<synchronous>, transform_indices = @transform_4, window_bounds = array<i64: 1, 96>}, {pipeline_mode = #tpu.pipeline_mode<synchronous>, transform_indices = @transform_5, window_bounds = array<i64: 32, 32>}, {pipeline_mode = #tpu.pipeline_mode<synchronous>, transform_indices = @transform_6, window_bounds = array<i64: 1, 32>}, {pipeline_mode = #tpu.pipeline_mode<synchronous>, transform_indices = @transform_7, window_bounds = array<i64: 4, 64, 64>}, {pipeline_mode = #tpu.pipeline_mode<synchronous>, transform_indices = @transform_8, window_bounds = array<i64: 1, 32>}, {pipeline_mode = #tpu.pipeline_mode<synchronous>, transform_indices = @transform_9, window_bounds = array<i64: 1, 32>}, {pipeline_mode = #tpu.pipeline_mode<synchronous>, transform_indices = @transform_10, window_bounds = array<i64: 32, 128>}, {pipeline_mode = #tpu.pipeline_mode<synchronous>, transform_indices = @transform_11, window_bounds = array<i64: 1, 128>}, {pipeline_mode = #tpu.pipeline_mode<synchronous>, transform_indices = @transform_12, window_bounds = array<i64: 128, 32>}, {pipeline_mode = #tpu.pipeline_mode<synchronous>, transform_indices = @transform_13, window_bounds = array<i64: 1, 32>}, {transform_indices = @transform_14, window_bounds = array<i64: 64, 32>}]} {
    %c0 = arith.constant 0 : index
    %c0_0 = arith.constant 0 : index
    %0 = vector.load %arg1[%c0, %c0_0] : memref<64x32xf32, #tpu.memory_space<vmem>>, vector<64x32xf32>
    %c0_1 = arith.constant 0 : index
    %c0_2 = arith.constant 0 : index
    %1 = vector.load %arg2[%c0_1, %c0_2] : memref<1x32xf32, #tpu.memory_space<vmem>>, vector<1x32xf32>
    %c0_3 = arith.constant 0 : index
    %c0_4 = arith.constant 0 : index
    %2 = vector.load %arg3[%c0_3, %c0_4] : memref<1x32xf32, #tpu.memory_space<vmem>>, vector<1x32xf32>
    %cst = arith.constant dense<0.000000e+00> : vector<64xf32>
    %3 = vector.multi_reduction <add>, %0, %cst [1] : vector<64x32xf32> to vector<64xf32>
    %4 = vector.shape_cast %3 : vector<64xf32> to vector<64x1xf32>
    %cst_5 = arith.constant 3.200000e+01 : f32
    %5 = vector.broadcast %cst_5 : f32 to vector<64x1xf32>
    %6 = arith.divf %4, %5 : vector<64x1xf32>
    %7 = vector.broadcast %6 : vector<64x1xf32> to vector<64x32xf32>
    %8 = arith.subf %0, %7 : vector<64x32xf32>
    %9 = vector.broadcast %6 : vector<64x1xf32> to vector<64x32xf32>
    %10 = arith.subf %0, %9 : vector<64x32xf32>
    %11 = arith.mulf %8, %10 : vector<64x32xf32>
    %cst_6 = arith.constant dense<0.000000e+00> : vector<64xf32>
    %12 = vector.multi_reduction <add>, %11, %cst_6 [1] : vector<64x32xf32> to vector<64xf32>
    %13 = vector.shape_cast %12 : vector<64xf32> to vector<64x1xf32>
    %cst_7 = arith.constant 3.200000e+01 : f32
    %14 = vector.broadcast %cst_7 : f32 to vector<64x1xf32>
    %15 = arith.divf %13, %14 : vector<64x1xf32>
    %16 = vector.broadcast %6 : vector<64x1xf32> to vector<64x32xf32>
    %17 = arith.subf %0, %16 : vector<64x32xf32>
    %cst_8 = arith.constant 9.99999974E-6 : f32
    %18 = vector.broadcast %cst_8 : f32 to vector<64x1xf32>
    %19 = arith.addf %15, %18 : vector<64x1xf32>
    %20 = math.rsqrt %19 : vector<64x1xf32>
    %21 = vector.broadcast %20 : vector<64x1xf32> to vector<64x32xf32>
    %22 = arith.mulf %17, %21 : vector<64x32xf32>
    %23 = vector.broadcast %1 : vector<1x32xf32> to vector<64x32xf32>
    %24 = arith.mulf %22, %23 : vector<64x32xf32>
    %25 = vector.broadcast %2 : vector<1x32xf32> to vector<64x32xf32>
    %26 = arith.addf %24, %25 : vector<64x32xf32>
    %c0_9 = arith.constant 0 : index
    %c0_10 = arith.constant 0 : index
    %27 = vector.load %arg4[%c0_9, %c0_10] : memref<32x96xf32, #tpu.memory_space<vmem>>, vector<32x96xf32>
    %c0_11 = arith.constant 0 : index
    %c0_12 = arith.constant 0 : index
    %28 = vector.load %arg5[%c0_11, %c0_12] : memref<1x96xf32, #tpu.memory_space<vmem>>, vector<1x96xf32>
    %29 = arith.truncf %26 : vector<64x32xf32> to vector<64x32xbf16>
    %30 = arith.truncf %27 : vector<32x96xf32> to vector<32x96xbf16>
    %cst_13 = arith.constant dense<0.000000e+00> : vector<64x96xf32>
    %31 = tpu.matmul %29, %30, %cst_13 {dimension_numbers = #tpu.dot_dimension_numbers<[1], [0], [0], [1], [0, 0, 1, 1], [], []>} : vector<64x32xbf16>, vector<32x96xbf16>, vector<64x96xf32> -> vector<64x96xf32>
    %32 = vector.broadcast %28 : vector<1x96xf32> to vector<64x96xf32>
    %33 = arith.addf %31, %32 : vector<64x96xf32>
    %34 = vector.extract_strided_slice %33 {offsets = [0, 0], sizes = [64, 32], strides = [1, 1]} : vector<64x96xf32> to vector<64x32xf32>
    %cst_14 = arith.constant 0.353553385 : f32
    %35 = vector.broadcast %cst_14 : f32 to vector<64x32xf32>
    %36 = arith.mulf %34, %35 : vector<64x32xf32>
    %37 = vector.extract_strided_slice %33 {offsets = [0, 32], sizes = [64, 32], strides = [1, 1]} : vector<64x96xf32> to vector<64x32xf32>
    %38 = vector.extract_strided_slice %33 {offsets = [0, 64], sizes = [64, 32], strides = [1, 1]} : vector<64x96xf32> to vector<64x32xf32>
    %39 = vector.extract_strided_slice %36 {offsets = [0, 0], sizes = [64, 8], strides = [1, 1]} : vector<64x32xf32> to vector<64x8xf32>
    %40 = vector.extract_strided_slice %37 {offsets = [0, 0], sizes = [64, 8], strides = [1, 1]} : vector<64x32xf32> to vector<64x8xf32>
    %41 = vector.extract_strided_slice %38 {offsets = [0, 0], sizes = [64, 8], strides = [1, 1]} : vector<64x32xf32> to vector<64x8xf32>
    %cst_15 = arith.constant dense<0.000000e+00> : vector<64x64xf32>
    %42 = tpu.matmul %39, %40, %cst_15 {dimension_numbers = #tpu.dot_dimension_numbers<[1], [1], [0], [0], [0, 0, 1, 0], [], []>} : vector<64x8xf32>, vector<64x8xf32>, vector<64x64xf32> -> vector<64x64xf32>
    %c0_16 = arith.constant 0 : index
    %c0_17 = arith.constant 0 : index
    %c0_18 = arith.constant 0 : index
    %43 = vector.load %arg8[%c0_16, %c0_17, %c0_18] : memref<4x64x64xf32, #tpu.memory_space<vmem>>, vector<1x64x64xf32>
    %44 = vector.shape_cast %43 : vector<1x64x64xf32> to vector<64x64xf32>
    %45 = arith.addf %42, %44 : vector<64x64xf32>
    %cst_19 = arith.constant dense<0xFF800000> : vector<64xf32>
    %46 = vector.multi_reduction <maximumf>, %45, %cst_19 [1] : vector<64x64xf32> to vector<64xf32>
    %47 = vector.shape_cast %46 : vector<64xf32> to vector<64x1xf32>
    %48 = vector.broadcast %47 : vector<64x1xf32> to vector<64x64xf32>
    %49 = arith.subf %45, %48 : vector<64x64xf32>
    %50 = math.exp %49 : vector<64x64xf32>
    %cst_20 = arith.constant dense<0.000000e+00> : vector<64xf32>
    %51 = vector.multi_reduction <add>, %50, %cst_20 [1] : vector<64x64xf32> to vector<64xf32>
    %52 = vector.shape_cast %51 : vector<64xf32> to vector<64x1xf32>
    %53 = tpu.reciprocal %52 {approx = true} : vector<64x1xf32> -> vector<64x1xf32>
    %54 = vector.broadcast %53 : vector<64x1xf32> to vector<64x64xf32>
    %55 = arith.mulf %50, %54 : vector<64x64xf32>
    %cst_21 = arith.constant dense<0.000000e+00> : vector<64x8xf32>
    %56 = tpu.matmul %55, %41, %cst_21 {dimension_numbers = #tpu.dot_dimension_numbers<[1], [0], [0], [1], [0, 0, 1, 1], [], []>} : vector<64x64xf32>, vector<64x8xf32>, vector<64x8xf32> -> vector<64x8xf32>
    %57 = vector.extract_strided_slice %36 {offsets = [0, 8], sizes = [64, 8], strides = [1, 1]} : vector<64x32xf32> to vector<64x8xf32>
    %58 = vector.extract_strided_slice %37 {offsets = [0, 8], sizes = [64, 8], strides = [1, 1]} : vector<64x32xf32> to vector<64x8xf32>
    %59 = vector.extract_strided_slice %38 {offsets = [0, 8], sizes = [64, 8], strides = [1, 1]} : vector<64x32xf32> to vector<64x8xf32>
    %cst_22 = arith.constant dense<0.000000e+00> : vector<64x64xf32>
    %60 = tpu.matmul %57, %58, %cst_22 {dimension_numbers = #tpu.dot_dimension_numbers<[1], [1], [0], [0], [0, 0, 1, 0], [], []>} : vector<64x8xf32>, vector<64x8xf32>, vector<64x64xf32> -> vector<64x64xf32>
    %c1 = arith.constant 1 : index
    %c0_23 = arith.constant 0 : index
    %c0_24 = arith.constant 0 : index
    %61 = vector.load %arg8[%c1, %c0_23, %c0_24] : memref<4x64x64xf32, #tpu.memory_space<vmem>>, vector<1x64x64xf32>
    %62 = vector.shape_cast %61 : vector<1x64x64xf32> to vector<64x64xf32>
    %63 = arith.addf %60, %62 : vector<64x64xf32>
    %cst_25 = arith.constant dense<0xFF800000> : vector<64xf32>
    %64 = vector.multi_reduction <maximumf>, %63, %cst_25 [1] : vector<64x64xf32> to vector<64xf32>
    %65 = vector.shape_cast %64 : vector<64xf32> to vector<64x1xf32>
    %66 = vector.broadcast %65 : vector<64x1xf32> to vector<64x64xf32>
    %67 = arith.subf %63, %66 : vector<64x64xf32>
    %68 = math.exp %67 : vector<64x64xf32>
    %cst_26 = arith.constant dense<0.000000e+00> : vector<64xf32>
    %69 = vector.multi_reduction <add>, %68, %cst_26 [1] : vector<64x64xf32> to vector<64xf32>
    %70 = vector.shape_cast %69 : vector<64xf32> to vector<64x1xf32>
    %71 = tpu.reciprocal %70 {approx = true} : vector<64x1xf32> -> vector<64x1xf32>
    %72 = vector.broadcast %71 : vector<64x1xf32> to vector<64x64xf32>
    %73 = arith.mulf %68, %72 : vector<64x64xf32>
    %cst_27 = arith.constant dense<0.000000e+00> : vector<64x8xf32>
    %74 = tpu.matmul %73, %59, %cst_27 {dimension_numbers = #tpu.dot_dimension_numbers<[1], [0], [0], [1], [0, 0, 1, 1], [], []>} : vector<64x64xf32>, vector<64x8xf32>, vector<64x8xf32> -> vector<64x8xf32>
    %75 = vector.extract_strided_slice %36 {offsets = [0, 16], sizes = [64, 8], strides = [1, 1]} : vector<64x32xf32> to vector<64x8xf32>
    %76 = vector.extract_strided_slice %37 {offsets = [0, 16], sizes = [64, 8], strides = [1, 1]} : vector<64x32xf32> to vector<64x8xf32>
    %77 = vector.extract_strided_slice %38 {offsets = [0, 16], sizes = [64, 8], strides = [1, 1]} : vector<64x32xf32> to vector<64x8xf32>
    %cst_28 = arith.constant dense<0.000000e+00> : vector<64x64xf32>
    %78 = tpu.matmul %75, %76, %cst_28 {dimension_numbers = #tpu.dot_dimension_numbers<[1], [1], [0], [0], [0, 0, 1, 0], [], []>} : vector<64x8xf32>, vector<64x8xf32>, vector<64x64xf32> -> vector<64x64xf32>
    %c2 = arith.constant 2 : index
    %c0_29 = arith.constant 0 : index
    %c0_30 = arith.constant 0 : index
    %79 = vector.load %arg8[%c2, %c0_29, %c0_30] : memref<4x64x64xf32, #tpu.memory_space<vmem>>, vector<1x64x64xf32>
    %80 = vector.shape_cast %79 : vector<1x64x64xf32> to vector<64x64xf32>
    %81 = arith.addf %78, %80 : vector<64x64xf32>
    %cst_31 = arith.constant dense<0xFF800000> : vector<64xf32>
    %82 = vector.multi_reduction <maximumf>, %81, %cst_31 [1] : vector<64x64xf32> to vector<64xf32>
    %83 = vector.shape_cast %82 : vector<64xf32> to vector<64x1xf32>
    %84 = vector.broadcast %83 : vector<64x1xf32> to vector<64x64xf32>
    %85 = arith.subf %81, %84 : vector<64x64xf32>
    %86 = math.exp %85 : vector<64x64xf32>
    %cst_32 = arith.constant dense<0.000000e+00> : vector<64xf32>
    %87 = vector.multi_reduction <add>, %86, %cst_32 [1] : vector<64x64xf32> to vector<64xf32>
    %88 = vector.shape_cast %87 : vector<64xf32> to vector<64x1xf32>
    %89 = tpu.reciprocal %88 {approx = true} : vector<64x1xf32> -> vector<64x1xf32>
    %90 = vector.broadcast %89 : vector<64x1xf32> to vector<64x64xf32>
    %91 = arith.mulf %86, %90 : vector<64x64xf32>
    %cst_33 = arith.constant dense<0.000000e+00> : vector<64x8xf32>
    %92 = tpu.matmul %91, %77, %cst_33 {dimension_numbers = #tpu.dot_dimension_numbers<[1], [0], [0], [1], [0, 0, 1, 1], [], []>} : vector<64x64xf32>, vector<64x8xf32>, vector<64x8xf32> -> vector<64x8xf32>
    %93 = vector.extract_strided_slice %36 {offsets = [0, 24], sizes = [64, 8], strides = [1, 1]} : vector<64x32xf32> to vector<64x8xf32>
    %94 = vector.extract_strided_slice %37 {offsets = [0, 24], sizes = [64, 8], strides = [1, 1]} : vector<64x32xf32> to vector<64x8xf32>
    %95 = vector.extract_strided_slice %38 {offsets = [0, 24], sizes = [64, 8], strides = [1, 1]} : vector<64x32xf32> to vector<64x8xf32>
    %cst_34 = arith.constant dense<0.000000e+00> : vector<64x64xf32>
    %96 = tpu.matmul %93, %94, %cst_34 {dimension_numbers = #tpu.dot_dimension_numbers<[1], [1], [0], [0], [0, 0, 1, 0], [], []>} : vector<64x8xf32>, vector<64x8xf32>, vector<64x64xf32> -> vector<64x64xf32>
    %c3 = arith.constant 3 : index
    %c0_35 = arith.constant 0 : index
    %c0_36 = arith.constant 0 : index
    %97 = vector.load %arg8[%c3, %c0_35, %c0_36] : memref<4x64x64xf32, #tpu.memory_space<vmem>>, vector<1x64x64xf32>
    %98 = vector.shape_cast %97 : vector<1x64x64xf32> to vector<64x64xf32>
    %99 = arith.addf %96, %98 : vector<64x64xf32>
    %cst_37 = arith.constant dense<0xFF800000> : vector<64xf32>
    %100 = vector.multi_reduction <maximumf>, %99, %cst_37 [1] : vector<64x64xf32> to vector<64xf32>
    %101 = vector.shape_cast %100 : vector<64xf32> to vector<64x1xf32>
    %102 = vector.broadcast %101 : vector<64x1xf32> to vector<64x64xf32>
    %103 = arith.subf %99, %102 : vector<64x64xf32>
    %104 = math.exp %103 : vector<64x64xf32>
    %cst_38 = arith.constant dense<0.000000e+00> : vector<64xf32>
    %105 = vector.multi_reduction <add>, %104, %cst_38 [1] : vector<64x64xf32> to vector<64xf32>
    %106 = vector.shape_cast %105 : vector<64xf32> to vector<64x1xf32>
    %107 = tpu.reciprocal %106 {approx = true} : vector<64x1xf32> -> vector<64x1xf32>
    %108 = vector.broadcast %107 : vector<64x1xf32> to vector<64x64xf32>
    %109 = arith.mulf %104, %108 : vector<64x64xf32>
    %cst_39 = arith.constant dense<0.000000e+00> : vector<64x8xf32>
    %110 = tpu.matmul %109, %95, %cst_39 {dimension_numbers = #tpu.dot_dimension_numbers<[1], [0], [0], [1], [0, 0, 1, 1], [], []>} : vector<64x64xf32>, vector<64x8xf32>, vector<64x8xf32> -> vector<64x8xf32>
    %111 = tpu.concatenate %56, %74, %92, %110 in 1 : vector<64x8xf32>, vector<64x8xf32>, vector<64x8xf32>, vector<64x8xf32> -> vector<64x32xf32>
    %c0_40 = arith.constant 0 : index
    %c0_41 = arith.constant 0 : index
    %112 = vector.load %arg6[%c0_40, %c0_41] : memref<32x32xf32, #tpu.memory_space<vmem>>, vector<32x32xf32>
    %c0_42 = arith.constant 0 : index
    %c0_43 = arith.constant 0 : index
    %113 = vector.load %arg7[%c0_42, %c0_43] : memref<1x32xf32, #tpu.memory_space<vmem>>, vector<1x32xf32>
    %114 = arith.truncf %111 : vector<64x32xf32> to vector<64x32xbf16>
    %115 = arith.truncf %112 : vector<32x32xf32> to vector<32x32xbf16>
    %cst_44 = arith.constant dense<0.000000e+00> : vector<64x32xf32>
    %116 = tpu.matmul %114, %115, %cst_44 {dimension_numbers = #tpu.dot_dimension_numbers<[1], [0], [0], [1], [0, 0, 1, 1], [], []>} : vector<64x32xbf16>, vector<32x32xbf16>, vector<64x32xf32> -> vector<64x32xf32>
    %117 = vector.broadcast %113 : vector<1x32xf32> to vector<64x32xf32>
    %118 = arith.addf %116, %117 : vector<64x32xf32>
    %119 = arith.addf %0, %118 : vector<64x32xf32>
    %c0_45 = arith.constant 0 : index
    %c0_46 = arith.constant 0 : index
    %120 = vector.load %arg9[%c0_45, %c0_46] : memref<1x32xf32, #tpu.memory_space<vmem>>, vector<1x32xf32>
    %c0_47 = arith.constant 0 : index
    %c0_48 = arith.constant 0 : index
    %121 = vector.load %arg10[%c0_47, %c0_48] : memref<1x32xf32, #tpu.memory_space<vmem>>, vector<1x32xf32>
    %cst_49 = arith.constant dense<0.000000e+00> : vector<64xf32>
    %122 = vector.multi_reduction <add>, %119, %cst_49 [1] : vector<64x32xf32> to vector<64xf32>
    %123 = vector.shape_cast %122 : vector<64xf32> to vector<64x1xf32>
    %cst_50 = arith.constant 3.200000e+01 : f32
    %124 = vector.broadcast %cst_50 : f32 to vector<64x1xf32>
    %125 = arith.divf %123, %124 : vector<64x1xf32>
    %126 = vector.broadcast %125 : vector<64x1xf32> to vector<64x32xf32>
    %127 = arith.subf %119, %126 : vector<64x32xf32>
    %128 = vector.broadcast %125 : vector<64x1xf32> to vector<64x32xf32>
    %129 = arith.subf %119, %128 : vector<64x32xf32>
    %130 = arith.mulf %127, %129 : vector<64x32xf32>
    %cst_51 = arith.constant dense<0.000000e+00> : vector<64xf32>
    %131 = vector.multi_reduction <add>, %130, %cst_51 [1] : vector<64x32xf32> to vector<64xf32>
    %132 = vector.shape_cast %131 : vector<64xf32> to vector<64x1xf32>
    %cst_52 = arith.constant 3.200000e+01 : f32
    %133 = vector.broadcast %cst_52 : f32 to vector<64x1xf32>
    %134 = arith.divf %132, %133 : vector<64x1xf32>
    %135 = vector.broadcast %125 : vector<64x1xf32> to vector<64x32xf32>
    %136 = arith.subf %119, %135 : vector<64x32xf32>
    %cst_53 = arith.constant 9.99999974E-6 : f32
    %137 = vector.broadcast %cst_53 : f32 to vector<64x1xf32>
    %138 = arith.addf %134, %137 : vector<64x1xf32>
    %139 = math.rsqrt %138 : vector<64x1xf32>
    %140 = vector.broadcast %139 : vector<64x1xf32> to vector<64x32xf32>
    %141 = arith.mulf %136, %140 : vector<64x32xf32>
    %142 = vector.broadcast %120 : vector<1x32xf32> to vector<64x32xf32>
    %143 = arith.mulf %141, %142 : vector<64x32xf32>
    %144 = vector.broadcast %121 : vector<1x32xf32> to vector<64x32xf32>
    %145 = arith.addf %143, %144 : vector<64x32xf32>
    %c0_54 = arith.constant 0 : index
    %c0_55 = arith.constant 0 : index
    %146 = vector.load %arg11[%c0_54, %c0_55] : memref<32x128xf32, #tpu.memory_space<vmem>>, vector<32x128xf32>
    %c0_56 = arith.constant 0 : index
    %c0_57 = arith.constant 0 : index
    %147 = vector.load %arg12[%c0_56, %c0_57] : memref<1x128xf32, #tpu.memory_space<vmem>>, vector<1x128xf32>
    %148 = arith.truncf %145 : vector<64x32xf32> to vector<64x32xbf16>
    %149 = arith.truncf %146 : vector<32x128xf32> to vector<32x128xbf16>
    %cst_58 = arith.constant dense<0.000000e+00> : vector<64x128xf32>
    %150 = tpu.matmul %148, %149, %cst_58 {dimension_numbers = #tpu.dot_dimension_numbers<[1], [0], [0], [1], [0, 0, 1, 1], [], []>} : vector<64x32xbf16>, vector<32x128xbf16>, vector<64x128xf32> -> vector<64x128xf32>
    %151 = vector.broadcast %147 : vector<1x128xf32> to vector<64x128xf32>
    %152 = arith.addf %150, %151 : vector<64x128xf32>
    %cst_59 = arith.constant 5.000000e-01 : f32
    %153 = vector.broadcast %cst_59 : f32 to vector<64x128xf32>
    %154 = arith.mulf %153, %152 : vector<64x128xf32>
    %cst_60 = arith.constant 0.707106769 : f32
    %155 = vector.broadcast %cst_60 : f32 to vector<64x128xf32>
    %156 = arith.mulf %152, %155 : vector<64x128xf32>
    %cst_61 = arith.constant 0.000000e+00 : f32
    %157 = vector.broadcast %cst_61 : f32 to vector<64x128xf32>
    %158 = arith.cmpf oge, %156, %157 : vector<64x128xf32>
    %cst_62 = arith.constant 1.000000e+00 : f32
    %cst_63 = arith.constant -1.000000e+00 : f32
    %159 = vector.broadcast %cst_62 : f32 to vector<64x128xf32>
    %160 = vector.broadcast %cst_63 : f32 to vector<64x128xf32>
    %161 = arith.select %158, %159, %160 : vector<64x128xi1>, vector<64x128xf32>
    %162 = math.absf %156 : vector<64x128xf32>
    %cst_64 = arith.constant 0.327591091 : f32
    %163 = vector.broadcast %cst_64 : f32 to vector<64x128xf32>
    %164 = arith.mulf %163, %162 : vector<64x128xf32>
    %cst_65 = arith.constant 1.000000e+00 : f32
    %165 = vector.broadcast %cst_65 : f32 to vector<64x128xf32>
    %166 = arith.addf %165, %164 : vector<64x128xf32>
    %cst_66 = arith.constant 1.000000e+00 : f32
    %167 = vector.broadcast %cst_66 : f32 to vector<64x128xf32>
    %168 = arith.divf %167, %166 : vector<64x128xf32>
    %cst_67 = arith.constant 1.06140542 : f32
    %169 = vector.broadcast %cst_67 : f32 to vector<64x128xf32>
    %170 = arith.mulf %169, %168 : vector<64x128xf32>
    %cst_68 = arith.constant -1.45315206 : f32
    %171 = vector.broadcast %cst_68 : f32 to vector<64x128xf32>
    %172 = arith.addf %170, %171 : vector<64x128xf32>
    %173 = arith.mulf %172, %168 : vector<64x128xf32>
    %cst_69 = arith.constant 1.42141378 : f32
    %174 = vector.broadcast %cst_69 : f32 to vector<64x128xf32>
    %175 = arith.addf %173, %174 : vector<64x128xf32>
    %176 = arith.mulf %175, %168 : vector<64x128xf32>
    %cst_70 = arith.constant -0.284496725 : f32
    %177 = vector.broadcast %cst_70 : f32 to vector<64x128xf32>
    %178 = arith.addf %176, %177 : vector<64x128xf32>
    %179 = arith.mulf %178, %168 : vector<64x128xf32>
    %cst_71 = arith.constant 0.254829586 : f32
    %180 = vector.broadcast %cst_71 : f32 to vector<64x128xf32>
    %181 = arith.addf %179, %180 : vector<64x128xf32>
    %182 = arith.mulf %181, %168 : vector<64x128xf32>
    %cst_72 = arith.constant 0.000000e+00 : f32
    %183 = vector.broadcast %cst_72 : f32 to vector<64x128xf32>
    %184 = arith.subf %183, %162 : vector<64x128xf32>
    %185 = arith.mulf %184, %162 : vector<64x128xf32>
    %186 = math.exp %185 : vector<64x128xf32>
    %187 = arith.mulf %182, %186 : vector<64x128xf32>
    %cst_73 = arith.constant 1.000000e+00 : f32
    %188 = vector.broadcast %cst_73 : f32 to vector<64x128xf32>
    %189 = arith.subf %188, %187 : vector<64x128xf32>
    %190 = arith.mulf %161, %189 : vector<64x128xf32>
    %cst_74 = arith.constant 1.000000e+00 : f32
    %191 = vector.broadcast %cst_74 : f32 to vector<64x128xf32>
    %192 = arith.addf %191, %190 : vector<64x128xf32>
    %193 = arith.mulf %154, %192 : vector<64x128xf32>
    %c0_75 = arith.constant 0 : index
    %c0_76 = arith.constant 0 : index
    %194 = vector.load %arg13[%c0_75, %c0_76] : memref<128x32xf32, #tpu.memory_space<vmem>>, vector<128x32xf32>
    %c0_77 = arith.constant 0 : index
    %c0_78 = arith.constant 0 : index
    %195 = vector.load %arg14[%c0_77, %c0_78] : memref<1x32xf32, #tpu.memory_space<vmem>>, vector<1x32xf32>
    %196 = arith.truncf %193 : vector<64x128xf32> to vector<64x128xbf16>
    %197 = arith.truncf %194 : vector<128x32xf32> to vector<128x32xbf16>
    %cst_79 = arith.constant dense<0.000000e+00> : vector<64x32xf32>
    %198 = tpu.matmul %196, %197, %cst_79 {dimension_numbers = #tpu.dot_dimension_numbers<[1], [0], [0], [1], [0, 0, 1, 1], [], []>} : vector<64x128xbf16>, vector<128x32xbf16>, vector<64x32xf32> -> vector<64x32xf32>
    %199 = vector.broadcast %195 : vector<1x32xf32> to vector<64x32xf32>
    %200 = arith.addf %198, %199 : vector<64x32xf32>
    %201 = arith.addf %119, %200 : vector<64x32xf32>
    %c0_80 = arith.constant 0 : index
    %c0_81 = arith.constant 0 : index
    %202 = vector.load %arg15[%c0_80, %c0_81] : memref<64x32xf32, #tpu.memory_space<vmem>>, vector<64x32xf32>
    tpu.vector_store %arg15[%c0_80, %c0_81], %201 {strides = array<i32>} : memref<64x32xf32, #tpu.memory_space<vmem>>, vector<64x32xf32>,
    return
  }
  func.func @transform_0(%arg0: i32) -> (i32, i32) {
    %c0_i32 = arith.constant 0 : i32
    %c0_i32_0 = arith.constant 0 : i32
    return %arg0, %c0_i32 : i32, i32
  }
  func.func @transform_1(%arg0: i32) -> (i32, i32) {
    %c0_i32 = arith.constant 0 : i32
    %c0_i32_0 = arith.constant 0 : i32
    %c0_i32_1 = arith.constant 0 : i32
    return %c0_i32, %c0_i32_0 : i32, i32
  }
  func.func @transform_2(%arg0: i32) -> (i32, i32) {
    %c0_i32 = arith.constant 0 : i32
    %c0_i32_0 = arith.constant 0 : i32
    %c0_i32_1 = arith.constant 0 : i32
    return %c0_i32, %c0_i32_0 : i32, i32
  }
  func.func @transform_3(%arg0: i32) -> (i32, i32) {
    %c0_i32 = arith.constant 0 : i32
    %c0_i32_0 = arith.constant 0 : i32
    %c0_i32_1 = arith.constant 0 : i32
    return %c0_i32, %c0_i32_0 : i32, i32
  }
  func.func @transform_4(%arg0: i32) -> (i32, i32) {
    %c0_i32 = arith.constant 0 : i32
    %c0_i32_0 = arith.constant 0 : i32
    %c0_i32_1 = arith.constant 0 : i32
    return %c0_i32, %c0_i32_0 : i32, i32
  }
  func.func @transform_5(%arg0: i32) -> (i32, i32) {
    %c0_i32 = arith.constant 0 : i32
    %c0_i32_0 = arith.constant 0 : i32
    %c0_i32_1 = arith.constant 0 : i32
    return %c0_i32, %c0_i32_0 : i32, i32
  }
  func.func @transform_6(%arg0: i32) -> (i32, i32) {
    %c0_i32 = arith.constant 0 : i32
    %c0_i32_0 = arith.constant 0 : i32
    %c0_i32_1 = arith.constant 0 : i32
    return %c0_i32, %c0_i32_0 : i32, i32
  }
  func.func @transform_7(%arg0: i32) -> (i32, i32, i32) {
    %c0_i32 = arith.constant 0 : i32
    %c0_i32_0 = arith.constant 0 : i32
    %c0_i32_1 = arith.constant 0 : i32
    %c0_i32_2 = arith.constant 0 : i32
    return %c0_i32, %c0_i32_0, %c0_i32_1 : i32, i32, i32
  }
  func.func @transform_8(%arg0: i32) -> (i32, i32) {
    %c0_i32 = arith.constant 0 : i32
    %c0_i32_0 = arith.constant 0 : i32
    %c0_i32_1 = arith.constant 0 : i32
    return %c0_i32, %c0_i32_0 : i32, i32
  }
  func.func @transform_9(%arg0: i32) -> (i32, i32) {
    %c0_i32 = arith.constant 0 : i32
    %c0_i32_0 = arith.constant 0 : i32
    %c0_i32_1 = arith.constant 0 : i32
    return %c0_i32, %c0_i32_0 : i32, i32
  }
  func.func @transform_10(%arg0: i32) -> (i32, i32) {
    %c0_i32 = arith.constant 0 : i32
    %c0_i32_0 = arith.constant 0 : i32
    %c0_i32_1 = arith.constant 0 : i32
    return %c0_i32, %c0_i32_0 : i32, i32
  }
  func.func @transform_11(%arg0: i32) -> (i32, i32) {
    %c0_i32 = arith.constant 0 : i32
    %c0_i32_0 = arith.constant 0 : i32
    %c0_i32_1 = arith.constant 0 : i32
    return %c0_i32, %c0_i32_0 : i32, i32
  }
  func.func @transform_12(%arg0: i32) -> (i32, i32) {
    %c0_i32 = arith.constant 0 : i32
    %c0_i32_0 = arith.constant 0 : i32
    %c0_i32_1 = arith.constant 0 : i32
    return %c0_i32, %c0_i32_0 : i32, i32
  }
  func.func @transform_13(%arg0: i32) -> (i32, i32) {
    %c0_i32 = arith.constant 0 : i32
    %c0_i32_0 = arith.constant 0 : i32
    %c0_i32_1 = arith.constant 0 : i32
    return %c0_i32, %c0_i32_0 : i32, i32
  }
  func.func @transform_14(%arg0: i32) -> (i32, i32) {
    %c0_i32 = arith.constant 0 : i32
    %c0_i32_0 = arith.constant 0 : i32
    return %arg0, %c0_i32 : i32, i32
  }
}

</mosaic_0001>

<llo_original>
// kernel: swin_block_forward.1
$region0: #{swin_block_forward.1}
  #allocation0 [shape = 'u32[]', space=smem, size = 0x4, offset = 0x4, fixed_abs, tag = 'smem constant byte address 0x4 - core index']
  #allocation1 [shape = 'u32[144,128]{1,0:T(1,128)}', space=vmem, size = 0x12000, scoped, tag = 'internal scratch']
  %s0 = inlined_call_operand.vmem [shape: f32[128,32], index: 0, kind: input, shape index: {}]
  %s1 = inlined_call_operand.vmem [shape: f32[1,32], index: 1, kind: input, shape index: {}]
  %s2 = inlined_call_operand.vmem [shape: f32[1,32], index: 2, kind: input, shape index: {}]
  %s3 = inlined_call_operand.vmem [shape: f32[32,96], index: 3, kind: input, shape index: {}]
  %s4 = inlined_call_operand.vmem [shape: f32[1,96], index: 4, kind: input, shape index: {}]
  %s5 = inlined_call_operand.vmem [shape: f32[32,32], index: 5, kind: input, shape index: {}]
  %s6 = inlined_call_operand.vmem [shape: f32[1,32], index: 6, kind: input, shape index: {}]
  %s7 = inlined_call_operand.vmem [shape: f32[4,64,64], index: 7, kind: input, shape index: {}]
  %s8 = inlined_call_operand.vmem [shape: f32[1,32], index: 8, kind: input, shape index: {}]
  %s9 = inlined_call_operand.vmem [shape: f32[1,32], index: 9, kind: input, shape index: {}]
  %s10 = inlined_call_operand.vmem [shape: f32[32,128], index: 10, kind: input, shape index: {}]
  %s11 = inlined_call_operand.vmem [shape: f32[1,128], index: 11, kind: input, shape index: {}]
  %s12 = inlined_call_operand.vmem [shape: f32[128,32], index: 12, kind: input, shape index: {}]
  %s13 = inlined_call_operand.vmem [shape: f32[1,32], index: 13, kind: input, shape index: {}]
  %s14 = inlined_call_operand.vmem [shape: f32[128,32], index: 14, kind: output, shape index: {}]
  %s15 = sld [smem:[#allocation0]]
  $region89: #{swin_block_forward.1} parent=0
    _
  %s17 = ssub.s32 1, %s15
  %s18 = scalar_select 0, %s17, %s15
  loop: start=0, step=1, limit=4
  $region2: #{swin_block_forward.1} parent=0 // loop_pre_header
    _
  $region3: #{swin_block_forward.1} parent=0 // loop_header
    %s20 = sphi 0, %s24
    %p21 = scmp.ge.s32.totalorder %s20, 4
    %s30 = sphi 0, %s32
    %s33 = sphi 0, %s30
    %s34 = sphi 0, %s33
    %s50 = sphi 0, %s34
    %s54 = sphi 0, %s54
    %s56 = sphi 0, %s54
    %s57 = sphi 0, %s56
    %s71 = sphi 0, %s57
    %s75 = sphi 0, %s75
    %s77 = sphi 0, %s75
    %s78 = sphi 0, %s77
    %s92 = sphi 0, %s78
    %s96 = sphi 0, %s96
    %s98 = sphi 0, %s96
    %s99 = sphi 0, %s98
    %s113 = sphi 0, %s99
    %s117 = sphi 0, %s117
    %s119 = sphi 0, %s117
    %s120 = sphi 0, %s119
    %s134 = sphi 0, %s120
    %s138 = sphi 0, %s138
    %s140 = sphi 0, %s138
    %s141 = sphi 0, %s140
    %s155 = sphi 0, %s141
    %s159 = sphi 0, %s159
    %s161 = sphi 0, %s159
    %s162 = sphi 0, %s161
    %s176 = sphi 0, %s162
    %s180 = sphi 0, %s180
    %s182 = sphi 0, %s180
    %s183 = sphi 0, %s182
    %s197 = sphi 0, %s183
    %s201 = sphi 0, %s201
    %s203 = sphi 0, %s201
    %s204 = sphi 0, %s203
    %s218 = sphi 0, %s204
    %s222 = sphi 0, %s222
    %s224 = sphi 0, %s222
    %s225 = sphi 0, %s224
    %s239 = sphi 0, %s225
    %s243 = sphi 0, %s243
    %s245 = sphi 0, %s243
    %s246 = sphi 0, %s245
    %s260 = sphi 0, %s246
    %s264 = sphi 0, %s264
    %s266 = sphi 0, %s264
    %s267 = sphi 0, %s266
    %s281 = sphi 0, %s267
    %s285 = sphi 0, %s285
    %s287 = sphi 0, %s285
    %s288 = sphi 0, %s287
    %s302 = sphi 0, %s288
    %s306 = sphi 0, %s306
    %s308 = sphi 0, %s306
    %s309 = sphi 0, %s308
    %s323 = sphi 0, %s309
    %s329 = sphi 0, %s331
    %s332 = sphi 0, %s329
    %s333 = sphi 0, %s332
    %s349 = sphi 0, %s333
  $region4: #{swin_block_forward.1} parent=0 // loop_header_branch
    %23 = sbr.rel (%p21) target = $region8
  $region5: #{swin_block_forward.1} parent=0 // loop_body
    %s25 = ssub.s32 %s20, 1
    %s26 = ssub.s32 %s20, 2
    %s27 = sadd.s32 %s20, 1
    %s28 = ssub.s32 %s20, %s27
    %p29 = scmp.eq.s32.totalorder %s28, 0
    %s31 = sadd.s32 %s30, 1
    %s32 = scalar_select %p29, %s30, %s31
    %p35 = pneg %p29
    %p36 = scmp.eq.s32.totalorder %s20, 1
    %p37 = por %p35, %p36
    %p38 = scmp.ne.s32.totalorder %s30, %s33
    %p39 = scmp.eq.s32.totalorder %s20, 0
    %p40 = por %p38, %p39
    %p41 = scmp.ne.s32.totalorder %s30, %s33
    %p42 = scmp.eq.s32.totalorder %s25, 1
    %p43 = por %p41, %p42
    %p44 = scmp.ne.s32.totalorder %s33, %s34
    %p45 = scmp.eq.s32.totalorder %s25, 0
    %p46 = por %p44, %p45
    %p47 = scmp.ne.s32.totalorder %s33, %s34
    %p48 = scmp.eq.s32.totalorder %s26, 1
    %p49 = por %p47, %p48
    %p51 = scmp.ne.s32.totalorder %s34, %s50
    %p52 = scmp.eq.s32.totalorder %s26, 0
    %p53 = por %p51, %p52
    %s55 = sadd.s32 %s54, 1
    %p58 = scmp.eq.s32.totalorder %s20, 1
    %p59 = scmp.ne.s32.totalorder %s54, %s56
    %p60 = scmp.eq.s32.totalorder %s20, 0
    %p61 = por %p59, %p60
    %p62 = scmp.ne.s32.totalorder %s54, %s56
    %p63 = scmp.eq.s32.totalorder %s25, 1
    %p64 = por %p62, %p63
    %p65 = scmp.ne.s32.totalorder %s56, %s57
    %p66 = scmp.eq.s32.totalorder %s25, 0
    %p67 = por %p65, %p66
    %p68 = scmp.ne.s32.totalorder %s56, %s57
    %p69 = scmp.eq.s32.totalorder %s26, 1
    %p70 = por %p68, %p69
    %p72 = scmp.ne.s32.totalorder %s57, %s71
    %p73 = scmp.eq.s32.totalorder %s26, 0
    %p74 = por %p72, %p73
    %s76 = sadd.s32 %s75, 1
    %p79 = scmp.eq.s32.totalorder %s20, 1
    %p80 = scmp.ne.s32.totalorder %s75, %s77
    %p81 = scmp.eq.s32.totalorder %s20, 0
    %p82 = por %p80, %p81
    %p83 = scmp.ne.s32.totalorder %s75, %s77
    %p84 = scmp.eq.s32.totalorder %s25, 1
    %p85 = por %p83, %p84
    %p86 = scmp.ne.s32.totalorder %s77, %s78
    %p87 = scmp.eq.s32.totalorder %s25, 0
    %p88 = por %p86, %p87
    %p89 = scmp.ne.s32.totalorder %s77, %s78
    %p90 = scmp.eq.s32.totalorder %s26, 1
    %p91 = por %p89, %p90
    %p93 = scmp.ne.s32.totalorder %s78, %s92
    %p94 = scmp.eq.s32.totalorder %s26, 0
    %p95 = por %p93, %p94
    %s97 = sadd.s32 %s96, 1
    %p100 = scmp.eq.s32.totalorder %s20, 1
    %p101 = scmp.ne.s32.totalorder %s96, %s98
    %p102 = scmp.eq.s32.totalorder %s20, 0
    %p103 = por %p101, %p102
    %p104 = scmp.ne.s32.totalorder %s96, %s98
    %p105 = scmp.eq.s32.totalorder %s25, 1
    %p106 = por %p104, %p105
    %p107 = scmp.ne.s32.totalorder %s98, %s99
    %p108 = scmp.eq.s32.totalorder %s25, 0
    %p109 = por %p107, %p108
    %p110 = scmp.ne.s32.totalorder %s98, %s99
    %p111 = scmp.eq.s32.totalorder %s26, 1
    %p112 = por %p110, %p111
    %p114 = scmp.ne.s32.totalorder %s99, %s113
    %p115 = scmp.eq.s32.totalorder %s26, 0
    %p116 = por %p114, %p115
    %s118 = sadd.s32 %s117, 1
    %p121 = scmp.eq.s32.totalorder %s20, 1
    %p122 = scmp.ne.s32.totalorder %s117, %s119
    %p123 = scmp.eq.s32.totalorder %s20, 0
    %p124 = por %p122, %p123
    %p125 = scmp.ne.s32.totalorder %s117, %s119
    %p126 = scmp.eq.s32.totalorder %s25, 1
    %p127 = por %p125, %p126
    %p128 = scmp.ne.s32.totalorder %s119, %s120
    %p129 = scmp.eq.s32.totalorder %s25, 0
    %p130 = por %p128, %p129
    %p131 = scmp.ne.s32.totalorder %s119, %s120
    %p132 = scmp.eq.s32.totalorder %s26, 1
    %p133 = por %p131, %p132
    %p135 = scmp.ne.s32.totalorder %s120, %s134
    %p136 = scmp.eq.s32.totalorder %s26, 0
    %p137 = por %p135, %p136
    %s139 = sadd.s32 %s138, 1
    %p142 = scmp.eq.s32.totalorder %s20, 1
    %p143 = scmp.ne.s32.totalorder %s138, %s140
    %p144 = scmp.eq.s32.totalorder %s20, 0
    %p145 = por %p143, %p144
    %p146 = scmp.ne.s32.totalorder %s138, %s140
    %p147 = scmp.eq.s32.totalorder %s25, 1
    %p148 = por %p146, %p147
    %p149 = scmp.ne.s32.totalorder %s140, %s141
    %p150 = scmp.eq.s32.totalorder %s25, 0
    %p151 = por %p149, %p150
    %p152 = scmp.ne.s32.totalorder %s140, %s141
    %p153 = scmp.eq.s32.totalorder %s26, 1
    %p154 = por %p152, %p153
    %p156 = scmp.ne.s32.totalorder %s141, %s155
    %p157 = scmp.eq.s32.totalorder %s26, 0
    %p158 = por %p156, %p157
    %s160 = sadd.s32 %s159, 1
    %p163 = scmp.eq.s32.totalorder %s20, 1
    %p164 = scmp.ne.s32.totalorder %s159, %s161
    %p165 = scmp.eq.s32.totalorder %s20, 0
    %p166 = por %p164, %p165
    %p167 = scmp.ne.s32.totalorder %s159, %s161
    %p168 = scmp.eq.s32.totalorder %s25, 1
    %p169 = por %p167, %p168
    %p170 = scmp.ne.s32.totalorder %s161, %s162
    %p171 = scmp.eq.s32.totalorder %s25, 0
    %p172 = por %p170, %p171
    %p173 = scmp.ne.s32.totalorder %s161, %s162
    %p174 = scmp.eq.s32.totalorder %s26, 1
    %p175 = por %p173, %p174
    %p177 = scmp.ne.s32.totalorder %s162, %s176
    %p178 = scmp.eq.s32.totalorder %s26, 0
    %p179 = por %p177, %p178
    %s181 = sadd.s32 %s180, 1
    %p184 = scmp.eq.s32.totalorder %s20, 1
    %p185 = scmp.ne.s32.totalorder %s180, %s182
    %p186 = scmp.eq.s32.totalorder %s20, 0
    %p187 = por %p185, %p186
    %p188 = scmp.ne.s32.totalorder %s180, %s182
    %p189 = scmp.eq.s32.totalorder %s25, 1
    %p190 = por %p188, %p189
    %p191 = scmp.ne.s32.totalorder %s182, %s183
    %p192 = scmp.eq.s32.totalorder %s25, 0
    %p193 = por %p191, %p192
    %p194 = scmp.ne.s32.totalorder %s182, %s183
    %p195 = scmp.eq.s32.totalorder %s26, 1
    %p196 = por %p194, %p195
    %p198 = scmp.ne.s32.totalorder %s183, %s197
    %p199 = scmp.eq.s32.totalorder %s26, 0
    %p200 = por %p198, %p199
    %s202 = sadd.s32 %s201, 1
    %p205 = scmp.eq.s32.totalorder %s20, 1
    %p206 = scmp.ne.s32.totalorder %s201, %s203
    %p207 = scmp.eq.s32.totalorder %s20, 0
    %p208 = por %p206, %p207
    %p209 = scmp.ne.s32.totalorder %s201, %s203
    %p210 = scmp.eq.s32.totalorder %s25, 1
    %p211 = por %p209, %p210
    %p212 = scmp.ne.s32.totalorder %s203, %s204
    %p213 = scmp.eq.s32.totalorder %s25, 0
    %p214 = por %p212, %p213
    %p215 = scmp.ne.s32.totalorder %s203, %s204
    %p216 = scmp.eq.s32.totalorder %s26, 1
    %p217 = por %p215, %p216
    %p219 = scmp.ne.s32.totalorder %s204, %s218
    %p220 = scmp.eq.s32.totalorder %s26, 0
    %p221 = por %p219, %p220
    %s223 = sadd.s32 %s222, 1
    %p226 = scmp.eq.s32.totalorder %s20, 1
    %p227 = scmp.ne.s32.totalorder %s222, %s224
    %p228 = scmp.eq.s32.totalorder %s20, 0
    %p229 = por %p227, %p228
    %p230 = scmp.ne.s32.totalorder %s222, %s224
    %p231 = scmp.eq.s32.totalorder %s25, 1
    %p232 = por %p230, %p231
    %p233 = scmp.ne.s32.totalorder %s224, %s225
    %p234 = scmp.eq.s32.totalorder %s25, 0
    %p235 = por %p233, %p234
    %p236 = scmp.ne.s32.totalorder %s224, %s225
    %p237 = scmp.eq.s32.totalorder %s26, 1
    %p238 = por %p236, %p237
    %p240 = scmp.ne.s32.totalorder %s225, %s239
    %p241 = scmp.eq.s32.totalorder %s26, 0
    %p242 = por %p240, %p241
    %s244 = sadd.s32 %s243, 1
    %p247 = scmp.eq.s32.totalorder %s20, 1
    %p248 = scmp.ne.s32.totalorder %s243, %s245
    %p249 = scmp.eq.s32.totalorder %s20, 0
    %p250 = por %p248, %p249
    %p251 = scmp.ne.s32.totalorder %s243, %s245
    %p252 = scmp.eq.s32.totalorder %s25, 1
    %p253 = por %p251, %p252
    %p254 = scmp.ne.s32.totalorder %s245, %s246
    %p255 = scmp.eq.s32.totalorder %s25, 0
    %p256 = por %p254, %p255
    %p257 = scmp.ne.s32.totalorder %s245, %s246
    %p258 = scmp.eq.s32.totalorder %s26, 1
    %p259 = por %p257, %p258
    %p261 = scmp.ne.s32.totalorder %s246, %s260
    %p262 = scmp.eq.s32.totalorder %s26, 0
    %p263 = por %p261, %p262
    %s265 = sadd.s32 %s264, 1
    %p268 = scmp.eq.s32.totalorder %s20, 1
    %p269 = scmp.ne.s32.totalorder %s264, %s266
    %p270 = scmp.eq.s32.totalorder %s20, 0
    %p271 = por %p269, %p270
    %p272 = scmp.ne.s32.totalorder %s264, %s266
    %p273 = scmp.eq.s32.totalorder %s25, 1
    %p274 = por %p272, %p273
    %p275 = scmp.ne.s32.totalorder %s266, %s267
    %p276 = scmp.eq.s32.totalorder %s25, 0
    %p277 = por %p275, %p276
    %p278 = scmp.ne.s32.totalorder %s266, %s267
    %p279 = scmp.eq.s32.totalorder %s26, 1
    %p280 = por %p278, %p279
    %p282 = scmp.ne.s32.totalorder %s267, %s281
    %p283 = scmp.eq.s32.totalorder %s26, 0
    %p284 = por %p282, %p283
    %s286 = sadd.s32 %s285, 1
    %p289 = scmp.eq.s32.totalorder %s20, 1
    %p290 = scmp.ne.s32.totalorder %s285, %s287
    %p291 = scmp.eq.s32.totalorder %s20, 0
    %p292 = por %p290, %p291
    %p293 = scmp.ne.s32.totalorder %s285, %s287
    %p294 = scmp.eq.s32.totalorder %s25, 1
    %p295 = por %p293, %p294
    %p296 = scmp.ne.s32.totalorder %s287, %s288
    %p297 = scmp.eq.s32.totalorder %s25, 0
    %p298 = por %p296, %p297
    %p299 = scmp.ne.s32.totalorder %s287, %s288
    %p300 = scmp.eq.s32.totalorder %s26, 1
    %p301 = por %p299, %p300
    %p303 = scmp.ne.s32.totalorder %s288, %s302
    %p304 = scmp.eq.s32.totalorder %s26, 0
    %p305 = por %p303, %p304
    %s307 = sadd.s32 %s306, 1
    %p310 = scmp.eq.s32.totalorder %s20, 1
    %p311 = scmp.ne.s32.totalorder %s306, %s308
    %p312 = scmp.eq.s32.totalorder %s20, 0
    %p313 = por %p311, %p312
    %p314 = scmp.ne.s32.totalorder %s306, %s308
    %p315 = scmp.eq.s32.totalorder %s25, 1
    %p316 = por %p314, %p315
    %p317 = scmp.ne.s32.totalorder %s308, %s309
    %p318 = scmp.eq.s32.totalorder %s25, 0
    %p319 = por %p317, %p318
    %p320 = scmp.ne.s32.totalorder %s308, %s309
    %p321 = scmp.eq.s32.totalorder %s26, 1
    %p322 = por %p320, %p321
    %p324 = scmp.ne.s32.totalorder %s309, %s323
    %p325 = scmp.eq.s32.totalorder %s26, 0
    %p326 = por %p324, %p325
    %s327 = ssub.s32 %s20, %s27
    %p328 = scmp.eq.s32.totalorder %s327, 0
    %s330 = sadd.s32 %s329, 1
    %s331 = scalar_select %p328, %s329, %s330
    %p334 = pneg %p328
    %p335 = scmp.eq.s32.totalorder %s20, 1
    %p336 = por %p334, %p335
    %p337 = scmp.ne.s32.totalorder %s329, %s332
    %p338 = scmp.eq.s32.totalorder %s20, 0
    %p339 = por %p337, %p338
    %p340 = scmp.ne.s32.totalorder %s329, %s332
    %p341 = scmp.eq.s32.totalorder %s25, 1
    %p342 = por %p340, %p341
    %p343 = scmp.ne.s32.totalorder %s332, %s333
    %p344 = scmp.eq.s32.totalorder %s25, 0
    %p345 = por %p343, %p344
    %p346 = scmp.ne.s32.totalorder %s332, %s333
    %p347 = scmp.eq.s32.totalorder %s26, 1
    %p348 = por %p346, %p347
    %p350 = scmp.ne.s32.totalorder %s333, %s349
    %p351 = scmp.eq.s32.totalorder %s26, 0
    %p352 = por %p350, %p351
    %p353 = scmp.le.s32.totalorder 1, %s20
    %p354 = scmp.lt.s32.totalorder %s20, 3
    %p355 = pnand %p353, %p354
    %p356 = pneg %p355
    // Predicated region
    $region9: #{swin_block_forward.1} parent=5 // pred_check
      _
    $region10: #{swin_block_forward.1} parent=5 // pred_check_branch
      %358 = sbr.rel (%p355) target = $region12
    $region11: #{swin_block_forward.1} parent=5 // pred_region
      %s359 = ssub.s32 %s20, 1
      // Predicated region
      $region13: #{swin_block_forward.1} parent=11 // pred_check
        %p360 = pneg %p67
      $region14: #{swin_block_forward.1} parent=11 // pred_check_branch
        %362 = sbr.rel (%p360) target = $region16
      $region15: #{swin_block_forward.1} parent=11 // pred_region
        _
      $region16: #{swin_block_forward.1} parent=11 // pred_fallthru
        _
      // Predicated region
      $region17: #{swin_block_forward.1} parent=11 // pred_check
        %p363 = pneg %p88
      $region18: #{swin_block_forward.1} parent=11 // pred_check_branch
        %365 = sbr.rel (%p363) target = $region20
      $region19: #{swin_block_forward.1} parent=11 // pred_region
        _
      $region20: #{swin_block_forward.1} parent=11 // pred_fallthru
        _
      // Predicated region
      $region21: #{swin_block_forward.1} parent=11 // pred_check
        %p366 = pneg %p109
      $region22: #{swin_block_forward.1} parent=11 // pred_check_branch
        %368 = sbr.rel (%p366) target = $region24
      $region23: #{swin_block_forward.1} parent=11 // pred_region
        _
      $region24: #{swin_block_forward.1} parent=11 // pred_fallthru
        _
      // Predicated region
      $region25: #{swin_block_forward.1} parent=11 // pred_check
        %p369 = pneg %p130
      $region26: #{swin_block_forward.1} parent=11 // pred_check_branch
        %371 = sbr.rel (%p369) target = $region28
      $region27: #{swin_block_forward.1} parent=11 // pred_region
        _
      $region28: #{swin_block_forward.1} parent=11 // pred_fallthru
        _
      // Predicated region
      $region29: #{swin_block_forward.1} parent=11 // pred_check
        %p372 = pneg %p151
      $region30: #{swin_block_forward.1} parent=11 // pred_check_branch
        %374 = sbr.rel (%p372) target = $region32
      $region31: #{swin_block_forward.1} parent=11 // pred_region
        _
      $region32: #{swin_block_forward.1} parent=11 // pred_fallthru
        _
      // Predicated region
      $region33: #{swin_block_forward.1} parent=11 // pred_check
        %p375 = pneg %p172
      $region34: #{swin_block_forward.1} parent=11 // pred_check_branch
        %377 = sbr.rel (%p375) target = $region36
      $region35: #{swin_block_forward.1} parent=11 // pred_region
        _
      $region36: #{swin_block_forward.1} parent=11 // pred_fallthru
        _
      // Predicated region
      $region37: #{swin_block_forward.1} parent=11 // pred_check
        %p378 = pneg %p193
      $region38: #{swin_block_forward.1} parent=11 // pred_check_branch
        %380 = sbr.rel (%p378) target = $region40
      $region39: #{swin_block_forward.1} parent=11 // pred_region
        _
      $region40: #{swin_block_forward.1} parent=11 // pred_fallthru
        _
      // Predicated region
      $region41: #{swin_block_forward.1} parent=11 // pred_check
        %p381 = pneg %p214
      $region42: #{swin_block_forward.1} parent=11 // pred_check_branch
        %383 = sbr.rel (%p381) target = $region44
      $region43: #{swin_block_forward.1} parent=11 // pred_region
        _
      $region44: #{swin_block_forward.1} parent=11 // pred_fallthru
        _
      // Predicated region
      $region45: #{swin_block_forward.1} parent=11 // pred_check
        %p384 = pneg %p235
      $region46: #{swin_block_forward.1} parent=11 // pred_check_branch
        %386 = sbr.rel (%p384) target = $region48
      $region47: #{swin_block_forward.1} parent=11 // pred_region
        _
      $region48: #{swin_block_forward.1} parent=11 // pred_fallthru
        _
      // Predicated region
      $region49: #{swin_block_forward.1} parent=11 // pred_check
        %p387 = pneg %p256
      $region50: #{swin_block_forward.1} parent=11 // pred_check_branch
        %389 = sbr.rel (%p387) target = $region52
      $region51: #{swin_block_forward.1} parent=11 // pred_region
        _
      $region52: #{swin_block_forward.1} parent=11 // pred_fallthru
        _
      // Predicated region
      $region53: #{swin_block_forward.1} parent=11 // pred_check
        %p390 = pneg %p277
      $region54: #{swin_block_forward.1} parent=11 // pred_check_branch
        %392 = sbr.rel (%p390) target = $region56
      $region55: #{swin_block_forward.1} parent=11 // pred_region
        _
      $region56: #{swin_block_forward.1} parent=11 // pred_fallthru
        _
      // Predicated region
      $region57: #{swin_block_forward.1} parent=11 // pred_check
        %p393 = pneg %p298
      $region58: #{swin_block_forward.1} parent=11 // pred_check_branch
        %395 = sbr.rel (%p393) target = $region60
      $region59: #{swin_block_forward.1} parent=11 // pred_region
        _
      $region60: #{swin_block_forward.1} parent=11 // pred_fallthru
        _
      // Predicated region
      $region61: #{swin_block_forward.1} parent=11 // pred_check
        %p396 = pneg %p319
      $region62: #{swin_block_forward.1} parent=11 // pred_check_branch
        %398 = sbr.rel (%p396) target = $region64
      $region63: #{swin_block_forward.1} parent=11 // pred_region
        _
      $region64: #{swin_block_forward.1} parent=11 // pred_fallthru
        _
    $region12: #{swin_block_forward.1} parent=5 // pred_fallthru
      _
    %p399 = scmp.lt.s32.totalorder %s20, 2
    // Predicated region
    $region65: #{swin_block_forward.1} parent=5 // pred_check
      %p400 = pneg %p399
    $region66: #{swin_block_forward.1} parent=5 // pred_check_branch
      %402 = sbr.rel (%p400) target = $region68
    $region67: #{swin_block_forward.1} parent=5 // pred_region
      // Predicated region
      $region69: #{swin_block_forward.1} parent=67 // pred_check
        %p403 = pneg %p40
      $region70: #{swin_block_forward.1} parent=67 // pred_check_branch
        %405 = sbr.rel (%p403) target = $region72
      $region71: #{swin_block_forward.1} parent=67 // pred_region
        %s406 = smul.u32 8, %s20
        %p407 = scmp.lt.s32.totalorder %s406, 15
        %s408 = scalar_select %p407, %s406, 15
        %s409 = smul.addr %s408, 8
        %s410 = scalar_lea.vmem %s0, %s409
        %s411 = smul.u32 8, %s20
      $region72: #{swin_block_forward.1} parent=67 // pred_fallthru
        _
    $region68: #{swin_block_forward.1} parent=5 // pred_fallthru
      _
    %p412 = scmp.le.s32.totalorder 1, %s20
    %p413 = scmp.lt.s32.totalorder %s20, 3
    %p414 = pnand %p412, %p413
    %p415 = pneg %p414
    // Predicated region
    $region73: #{swin_block_forward.1} parent=5 // pred_check
      _
    $region74: #{swin_block_forward.1} parent=5 // pred_check_branch
      %417 = sbr.rel (%p414) target = $region76
    $region75: #{swin_block_forward.1} parent=5 // pred_region
      %s418 = ssub.s32 %s20, 1
      %s419 = smul.u32 8, %s25
      %p420 = scmp.lt.s32.totalorder %s419, 15
      %s421 = scalar_select %p420, %s419, 15
      %s422 = smul.addr %s421, 8
      %s423 = scalar_lea.vmem %s0, %s422
      %p424 = pneg %p46
      %p425 = pneg %p43
      %p426 = pneg %p67
      %p427 = pneg %p64
      %p428 = pneg %p88
      %p429 = pneg %p85
      %p430 = pneg %p109
      %p431 = pneg %p106
      %p432 = pneg %p130
      %p433 = pneg %p127
      %p434 = pneg %p151
      %p435 = pneg %p148
      %p436 = pneg %p172
      %p437 = pneg %p169
      %p438 = pneg %p193
      %p439 = pneg %p190
      %p440 = pneg %p214
      %p441 = pneg %p211
      %p442 = pneg %p235
      %p443 = pneg %p232
      %p444 = pneg %p256
      %p445 = pneg %p253
      %p446 = pneg %p277
      %p447 = pneg %p274
      %p448 = pneg %p298
      %p449 = pneg %p295
      %p450 = pneg %p319
      %p451 = pneg %p316
      %p452 = pneg %p345
      %p453 = pneg %p342
      %s454 = smul.u32 8, %s25
      %p455 = scmp.lt.s32.totalorder %s454, 15
      %s456 = scalar_select %p455, %s454, 15
      %s457 = smul.addr %s456, 8
      %s458 = scalar_lea.vmem %s14, %s457
      %s459 = smul.u32 8, %s25
      %p460 = scmp.lt.s32.totalorder %s459, 15
      %s461 = scalar_select %p460, %s459, 15
      %s462 = smul.addr %s461, 8
      %s463 = scalar_lea.vmem %s0, %s462
      %s464 = smul.u32 8, %s25
      %s465 = smul.u32 8, %s25
      %p466 = scmp.lt.s32.totalorder %s465, 15
      %s467 = scalar_select %p466, %s465, 15
      %s468 = smul.addr %s467, 8
      %s469 = scalar_lea.vmem %s14, %s468
      %s470 = smul.u32 8, %s25
      %v472 = vld [vmem:[%s463] sm:$0xff]
      %v473 = vld [vmem:[%s463 + $0x8] sm:$0xff]
      %v474 = vld [vmem:[%s463 + $0x10] sm:$0xff]
      %v475 = vld [vmem:[%s463 + $0x18] sm:$0xff]
      %v476 = vld [vmem:[%s463 + $0x20] sm:$0xff]
      %v477 = vld [vmem:[%s463 + $0x28] sm:$0xff]
      %v478 = vld [vmem:[%s463 + $0x30] sm:$0xff]
      %v479 = vld [vmem:[%s463 + $0x38] sm:$0xff]
      %v480 = vld [vmem:[%s1] sm:$0x1]
      %v481 = vld [vmem:[%s2] sm:$0x1]
      %vm482 = vcmask 261120
      %v483 = vsel %vm482, %v472, 0.0
      %484 = vadd.xlane.f32.xlu0 %v483
      %v485 = vpop.xlane.xlu0 %484
      %v486 = vsel %vm482, %v473, 0.0
      %487 = vadd.xlane.f32.xlu0 %v486
      %v488 = vpop.xlane.xlu0 %487
      %v489 = vsel %vm482, %v474, 0.0
      %490 = vadd.xlane.f32.xlu0 %v489
      %v491 = vpop.xlane.xlu0 %490
      %v492 = vsel %vm482, %v475, 0.0
      %493 = vadd.xlane.f32.xlu0 %v492
      %v494 = vpop.xlane.xlu0 %493
      %v495 = vsel %vm482, %v476, 0.0
      %496 = vadd.xlane.f32.xlu0 %v495
      %v497 = vpop.xlane.xlu0 %496
      %v498 = vsel %vm482, %v477, 0.0
      %499 = vadd.xlane.f32.xlu0 %v498
      %v500 = vpop.xlane.xlu0 %499
      %v501 = vsel %vm482, %v478, 0.0
      %502 = vadd.xlane.f32.xlu0 %v501
      %v503 = vpop.xlane.xlu0 %502
      %v504 = vsel %vm482, %v479, 0.0
      %505 = vadd.xlane.f32.xlu0 %v504
      %v506 = vpop.xlane.xlu0 %505
      %v507 = vrcp.pop 32.0
      %v508 = vmul.f32 %v485, %v507
      %v509 = vmul.f32 %v488, %v507
      %v510 = vmul.f32 %v491, %v507
      %v511 = vmul.f32 %v494, %v507
      %v512 = vmul.f32 %v497, %v507
      %v513 = vmul.f32 %v500, %v507
      %v514 = vmul.f32 %v503, %v507
      %v515 = vmul.f32 %v506, %v507
      %v516 = vsub.f32 %v472, %v508
      %v517 = vsub.f32 %v473, %v509
      %v518 = vsub.f32 %v474, %v510
      %v519 = vsub.f32 %v475, %v511
      %v520 = vsub.f32 %v476, %v512
      %v521 = vsub.f32 %v477, %v513
      %v522 = vsub.f32 %v478, %v514
      %v523 = vsub.f32 %v479, %v515
      %v524 = vmul.f32 %v516, %v516
      %v525 = vmul.f32 %v517, %v517
      %v526 = vmul.f32 %v518, %v518
      %v527 = vmul.f32 %v519, %v519
      %v528 = vmul.f32 %v520, %v520
      %v529 = vmul.f32 %v521, %v521
      %v530 = vmul.f32 %v522, %v522
      %v531 = vmul.f32 %v523, %v523
      %v532 = vsel %vm482, %v524, 0.0
      %533 = vadd.xlane.f32.xlu0 %v532
      %v534 = vpop.xlane.xlu0 %533
      %v535 = vsel %vm482, %v525, 0.0
      %536 = vadd.xlane.f32.xlu0 %v535
      %v537 = vpop.xlane.xlu0 %536
      %v538 = vsel %vm482, %v526, 0.0
      %539 = vadd.xlane.f32.xlu0 %v538
      %v540 = vpop.xlane.xlu0 %539
      %v541 = vsel %vm482, %v527, 0.0
      %542 = vadd.xlane.f32.xlu0 %v541
      %v543 = vpop.xlane.xlu0 %542
      %v544 = vsel %vm482, %v528, 0.0
      %545 = vadd.xlane.f32.xlu0 %v544
      %v546 = vpop.xlane.xlu0 %545
      %v547 = vsel %vm482, %v529, 0.0
      %548 = vadd.xlane.f32.xlu0 %v547
      %v549 = vpop.xlane.xlu0 %548
      %v550 = vsel %vm482, %v530, 0.0
      %551 = vadd.xlane.f32.xlu0 %v550
      %v552 = vpop.xlane.xlu0 %551
      %v553 = vsel %vm482, %v531, 0.0
      %554 = vadd.xlane.f32.xlu0 %v553
      %v555 = vpop.xlane.xlu0 %554
      %v556 = vmul.f32 %v534, %v507
      %v557 = vmul.f32 %v537, %v507
      %v558 = vmul.f32 %v540, %v507
      %v559 = vmul.f32 %v543, %v507
      %v560 = vmul.f32 %v546, %v507
      %v561 = vmul.f32 %v549, %v507
      %v562 = vmul.f32 %v552, %v507
      %v563 = vmul.f32 %v555, %v507
      %v564 = vadd.f32 %v556, 1e-05
      %v565 = vadd.f32 %v557, 1e-05
      %v566 = vadd.f32 %v558, 1e-05
      %v567 = vadd.f32 %v559, 1e-05
      %v568 = vadd.f32 %v560, 1e-05
      %v569 = vadd.f32 %v561, 1e-05
      %v570 = vadd.f32 %v562, 1e-05
      %v571 = vadd.f32 %v563, 1e-05
      %v572 = vrsqrt.pop %v564
      %v573 = vrsqrt.pop %v565
      %v574 = vrsqrt.pop %v566
      %v575 = vrsqrt.pop %v567
      %v576 = vrsqrt.pop %v568
      %v577 = vrsqrt.pop %v569
      %v578 = vrsqrt.pop %v570
      %v579 = vrsqrt.pop %v571
      %v580 = vmul.f32 %v516, %v572
      %v581 = vmul.f32 %v517, %v573
      %v582 = vmul.f32 %v518, %v574
      %v583 = vmul.f32 %v519, %v575
      %v584 = vmul.f32 %v520, %v576
      %v585 = vmul.f32 %v521, %v577
      %v586 = vmul.f32 %v522, %v578
      %v587 = vmul.f32 %v523, %v579
      %v589 = vlaneseq
      %v590 = vshrl.u32 %v589, 7
      %v591 = vsub.s32 0, %v590
      %v592 = vrot.slane %v480, %v591
      %v594 = vmul.f32 %v580, %v592
      %v595 = vmul.f32 %v581, %v592
      %v596 = vmul.f32 %v582, %v592
      %v597 = vmul.f32 %v583, %v592
      %v598 = vmul.f32 %v584, %v592
      %v599 = vmul.f32 %v585, %v592
      %v600 = vmul.f32 %v586, %v592
      %v601 = vmul.f32 %v587, %v592
      %v603 = vlaneseq
      %v604 = vshrl.u32 %v603, 7
      %v605 = vsub.s32 0, %v604
      %v606 = vrot.slane %v481, %v605
      %v608 = vadd.f32 %v594, %v606
      %v609 = vadd.f32 %v595, %v606
      %v610 = vadd.f32 %v596, %v606
      %v611 = vadd.f32 %v597, %v606
      %v612 = vadd.f32 %v598, %v606
      %v613 = vadd.f32 %v599, %v606
      %v614 = vadd.f32 %v600, %v606
      %v615 = vadd.f32 %v601, %v606
      %v616 = vld [vmem:[%s3] sm:$0xff]
      %v617 = vld [vmem:[%s3 + $0x8] sm:$0xff]
      %v618 = vld [vmem:[%s3 + $0x10] sm:$0xff]
      %v619 = vld [vmem:[%s3 + $0x18] sm:$0xff]
      %v620 = vld [vmem:[%s4] sm:$0x1]
      %v621 = vpack.c.bf16 %v609, %v608
      %v622 = vpack.c.bf16 %v611, %v610
      %v623 = vpack.c.bf16 %v613, %v612
      %v624 = vpack.c.bf16 %v615, %v614
      %v625 = vpack.c.bf16 %v617, %v616
      %v626 = vpack.c.bf16 %v619, %v618
      %v628 = vlaneseq
      %v629 = vshrl.u32 %v628, 7
      %v630 = vsub.s32 0, %v629
      %v631 = vrot.slane %v620, %v630
      %v634 = vsel %vm482, %v621, 0
      %v637 = vsel %vm482, %v622, 0
      %v640 = vsel %vm482, %v623, 0
      %v643 = vsel %vm482, %v624, 0
      %645 = vmatprep.subr.bf16.mxu0 0
      %646 = vmatpush1.bf16.msra.mxu0 %v625
      %647 = vmatprep.subr.bf16.mxu0 0
      %648 = vmatpush1.bf16.msra.mxu0 %v626
      %649 = vmatprep.subr.bf16.mxu0 0
      %650 = vmatpush1.bf16.msra.mxu0 0
      %651 = vmatprep.subr.bf16.mxu0 0
      %652 = vmatpush1.bf16.msra.mxu0 0
      %653 = vmatprep.subr.bf16.mxu0 0
      %654 = vmatpush1.bf16.msra.mxu0 0
      %655 = vmatprep.subr.bf16.mxu0 0
      %656 = vmatpush1.bf16.msra.mxu0 0
      %657 = vmatprep.subr.bf16.mxu0 0
      %658 = vmatpush1.bf16.msra.mxu0 0
      %659 = vmatprep.subr.bf16.mxu0 0
      %660 = vmatpush1.bf16.msra.mxu0 0
      %661 = vmatprep.subr.bf16.mxu0 0
      %662 = vmatpush1.bf16.msra.mxu0 0
      %663 = vmatprep.subr.bf16.mxu0 0
      %664 = vmatpush1.bf16.msra.mxu0 0
      %665 = vmatprep.subr.bf16.mxu0 0
      %666 = vmatpush1.bf16.msra.mxu0 0
      %667 = vmatprep.subr.bf16.mxu0 0
      %668 = vmatpush1.bf16.msra.mxu0 0
      %669 = vmatprep.subr.bf16.mxu0 0
      %670 = vmatpush1.bf16.msra.mxu0 0
      %671 = vmatprep.subr.bf16.mxu0 0
      %672 = vmatpush1.bf16.msra.mxu0 0
      %673 = vmatprep.subr.bf16.mxu0 0
      %674 = vmatpush1.bf16.msra.mxu0 0
      %675 = vmatprep.subr.bf16.mxu0 0
      %676 = vmatpush1.bf16.msra.mxu0 0
      %677 = vmatprep.mubr.bf16.mxu0 0
      %678 = vmatmul.mubr.bf16.gmra.mrb[0].mxu0 %v634
      %v679 = vpop.f32.mrb[0].mxu0
      %v680 = vadd.f32 %v631, %v679
      %v681 = vpop.f32.mrb[0].mxu0
      %v682 = vpop.f32.mrb[0].mxu0
      %v683 = vadd.f32 %v631, %v682
      %v684 = vpop.f32.mrb[0].mxu0
      %685 = vmatprep.mubr.bf16.mxu0 0
      %686 = vmatmul.mubr.bf16.gmra.mrb[0].mxu0 %v637
      %v687 = vpop.f32.mrb[0].mxu0
      %v688 = vadd.f32 %v631, %v687
      %v689 = vpop.f32.mrb[0].mxu0
      %v690 = vpop.f32.mrb[0].mxu0
      %v691 = vadd.f32 %v631, %v690
      %v692 = vpop.f32.mrb[0].mxu0
      %693 = vmatprep.mubr.bf16.mxu0 0
      %694 = vmatmul.mubr.bf16.gmra.mrb[0].mxu0 %v640
      %v695 = vpop.f32.mrb[0].mxu0
      %v696 = vadd.f32 %v631, %v695
      %v697 = vpop.f32.mrb[0].mxu0
      %v698 = vpop.f32.mrb[0].mxu0
      %v699 = vadd.f32 %v631, %v698
      %v700 = vpop.f32.mrb[0].mxu0
      %701 = vmatprep.mubr.bf16.mxu0 0
      %702 = vmatmul.mubr.bf16.gmra.mrb[0].mxu0 %v643
      %v703 = vpop.f32.mrb[0].mxu0
      %v704 = vadd.f32 %v631, %v703
      %v705 = vpop.f32.mrb[0].mxu0
      %v706 = vpop.f32.mrb[0].mxu0
      %v707 = vadd.f32 %v631, %v706
      %v708 = vpop.f32.mrb[0].mxu0
      %709 = vdwg.mxu0
      %v710 = vmul.f32 %v680, 0.35355338
      %v711 = vmul.f32 %v683, 0.35355338
      %v712 = vmul.f32 %v688, 0.35355338
      %v713 = vmul.f32 %v691, 0.35355338
      %v714 = vmul.f32 %v696, 0.35355338
      %v715 = vmul.f32 %v699, 0.35355338
      %v716 = vmul.f32 %v704, 0.35355338
      %v717 = vmul.f32 %v707, 0.35355338
      %v718 = vld [vmem:[%s7] sm:$0xff]
      %v719 = vld [vmem:[%s7 + $0x8] sm:$0xff]
      %v720 = vld [vmem:[%s7 + $0x10] sm:$0xff]
      %v721 = vld [vmem:[%s7 + $0x18] sm:$0xff]
      %v722 = vld [vmem:[%s7 + $0x20] sm:$0xff]
      %v723 = vld [vmem:[%s7 + $0x28] sm:$0xff]
      %v724 = vld [vmem:[%s7 + $0x30] sm:$0xff]
      %v725 = vld [vmem:[%s7 + $0x38] sm:$0xff]
      %734 = vrot.lane.b32.xlu0 %v680, 96
      %v735 = vpop.permute.xlu0 %734
      %736 = vrot.lane.b32.xlu0 %v683, 96
      %v737 = vpop.permute.xlu0 %736
      %738 = vrot.lane.b32.xlu0 %v688, 96
      %v739 = vpop.permute.xlu0 %738
      %740 = vrot.lane.b32.xlu0 %v691, 96
      %v741 = vpop.permute.xlu0 %740
      %742 = vrot.lane.b32.xlu0 %v696, 96
      %v743 = vpop.permute.xlu0 %742
      %744 = vrot.lane.b32.xlu0 %v699, 96
      %v745 = vpop.permute.xlu0 %744
      %746 = vrot.lane.b32.xlu0 %v704, 96
      %v747 = vpop.permute.xlu0 %746
      %748 = vrot.lane.b32.xlu0 %v707, 96
      %v749 = vpop.permute.xlu0 %748
      %vm750 = vcmask 64512
      %v752 = vsel %vm750, %v710, 0
      %v755 = vsel %vm750, %v711, 0
      %v758 = vsel %vm750, %v712, 0
      %v761 = vsel %vm750, %v713, 0
      %v764 = vsel %vm750, %v714, 0
      %v767 = vsel %vm750, %v715, 0
      %v770 = vsel %vm750, %v716, 0
      %v773 = vsel %vm750, %v717, 0
      %v775 = vsel %vm750, %v735, 0
      %v777 = vsel %vm750, %v737, 0
      %v779 = vsel %vm750, %v739, 0
      %v781 = vsel %vm750, %v741, 0
      %v783 = vsel %vm750, %v743, 0
      %v785 = vsel %vm750, %v745, 0
      %v787 = vsel %vm750, %v747, 0
      %v789 = vsel %vm750, %v749, 0
      %791 = vmatprep.subr.mxu0 0.0
      %792 = vmatpush1.xpose.msra.mxu0 %v775
      %793 = vmatprep.subr.mxu0 0.0
      %794 = vmatpush1.xpose.msra.mxu0 %v777
      %795 = vmatprep.subr.mxu0 0.0
      %796 = vmatpush1.xpose.msra.mxu0 %v779
      %797 = vmatprep.subr.mxu0 0.0
      %798 = vmatpush1.xpose.msra.mxu0 %v781
      %799 = vmatprep.subr.mxu0 0.0
      %800 = vmatpush1.xpose.msra.mxu0 %v783
      %801 = vmatprep.subr.mxu0 0.0
      %802 = vmatpush1.xpose.msra.mxu0 %v785
      %803 = vmatprep.subr.mxu0 0.0
      %804 = vmatpush1.xpose.msra.mxu0 %v787
      %805 = vmatprep.subr.mxu0 0.0
      %806 = vmatpush1.xpose.msra.mxu0 %v789
      %807 = vmatprep.subr.mxu0 0.0
      %808 = vmatpush1.xpose.msra.mxu0 0.0
      %809 = vmatprep.subr.mxu0 0.0
      %810 = vmatpush1.xpose.msra.mxu0 0.0
      %811 = vmatprep.subr.mxu0 0.0
      %812 = vmatpush1.xpose.msra.mxu0 0.0
      %813 = vmatprep.subr.mxu0 0.0
      %814 = vmatpush1.xpose.msra.mxu0 0.0
      %815 = vmatprep.subr.mxu0 0.0
      %816 = vmatpush1.xpose.msra.mxu0 0.0
      %817 = vmatprep.subr.mxu0 0.0
      %818 = vmatpush1.xpose.msra.mxu0 0.0
      %819 = vmatprep.subr.mxu0 0.0
      %820 = vmatpush1.xpose.msra.mxu0 0.0
      %821 = vmatprep.subr.mxu0 0.0
      %822 = vmatpush1.xpose.msra.mxu0 0.0
      %823 = vmatprep.subr.mxu0 0.0
      %824 = vmatpush1.xpose.msra.mxu0 0.0
      %825 = vmatprep.subr.mxu0 0.0
      %826 = vmatpush1.xpose.msra.mxu0 0.0
      %827 = vmatprep.subr.mxu0 0.0
      %828 = vmatpush1.xpose.msra.mxu0 0.0
      %829 = vmatprep.subr.mxu0 0.0
      %830 = vmatpush1.xpose.msra.mxu0 0.0
      %831 = vmatprep.subr.mxu0 0.0
      %832 = vmatpush1.xpose.msra.mxu0 0.0
      %833 = vmatprep.subr.mxu0 0.0
      %834 = vmatpush1.xpose.msra.mxu0 0.0
      %835 = vmatprep.subr.mxu0 0.0
      %836 = vmatpush1.xpose.msra.mxu0 0.0
      %837 = vmatprep.subr.mxu0 0.0
      %838 = vmatpush1.xpose.msra.mxu0 0.0
      %839 = vmatprep.subr.mxu0 0.0
      %840 = vmatpush1.xpose.msra.mxu0 0.0
      %841 = vmatprep.subr.mxu0 0.0
      %842 = vmatpush1.xpose.msra.mxu0 0.0
      %843 = vmatprep.subr.mxu0 0.0
      %844 = vmatpush1.xpose.msra.mxu0 0.0
      %845 = vmatprep.subr.mxu0 0.0
      %846 = vmatpush1.xpose.msra.mxu0 0.0
      %847 = vmatprep.subr.mxu0 0.0
      %848 = vmatpush1.xpose.msra.mxu0 0.0
      %849 = vmatprep.subr.mxu0 0.0
      %850 = vmatpush1.xpose.msra.mxu0 0.0
      %851 = vmatprep.subr.mxu0 0.0
      %852 = vmatpush1.xpose.msra.mxu0 0.0
      %853 = vmatprep.subr.mxu0 0.0
      %854 = vmatpush1.xpose.msra.mxu0 0.0
      %855 = vmatprep.mubr.f32.mxu0 0.0
      %856 = vmatmul.mubr.f32.gmra.mrb[0].mxu0 %v752
      %v857 = vpop.f32.mrb[0].mxu0
      %v858 = vadd.f32 %v718, %v857
      %v859 = vpop.f32.mrb[0].mxu0
      %860 = vmatprep.mubr.f32.mxu0 0.0
      %861 = vmatmul.mubr.f32.gmra.mrb[0].mxu0 %v755
      %v862 = vpop.f32.mrb[0].mxu0
      %v863 = vadd.f32 %v719, %v862
      %v864 = vpop.f32.mrb[0].mxu0
      %865 = vmatprep.mubr.f32.mxu0 0.0
      %866 = vmatmul.mubr.f32.gmra.mrb[0].mxu0 %v758
      %v867 = vpop.f32.mrb[0].mxu0
      %v868 = vadd.f32 %v720, %v867
      %v869 = vpop.f32.mrb[0].mxu0
      %870 = vmatprep.mubr.f32.mxu0 0.0
      %871 = vmatmul.mubr.f32.gmra.mrb[0].mxu0 %v761
      %v872 = vpop.f32.mrb[0].mxu0
      %v873 = vadd.f32 %v721, %v872
      %v874 = vpop.f32.mrb[0].mxu0
      %875 = vmatprep.mubr.f32.mxu0 0.0
      %876 = vmatmul.mubr.f32.gmra.mrb[0].mxu0 %v764
      %v877 = vpop.f32.mrb[0].mxu0
      %v878 = vadd.f32 %v722, %v877
      %v879 = vpop.f32.mrb[0].mxu0
      %880 = vmatprep.mubr.f32.mxu0 0.0
      %881 = vmatmul.mubr.f32.gmra.mrb[0].mxu0 %v767
      %v882 = vpop.f32.mrb[0].mxu0
      %v883 = vadd.f32 %v723, %v882
      %v884 = vpop.f32.mrb[0].mxu0
      %885 = vmatprep.mubr.f32.mxu0 0.0
      %886 = vmatmul.mubr.f32.gmra.mrb[0].mxu0 %v770
      %v887 = vpop.f32.mrb[0].mxu0
      %v888 = vadd.f32 %v724, %v887
      %v889 = vpop.f32.mrb[0].mxu0
      %890 = vmatprep.mubr.f32.mxu0 0.0
      %891 = vmatmul.mubr.f32.gmra.mrb[0].mxu0 %v773
      %v892 = vpop.f32.mrb[0].mxu0
      %v893 = vadd.f32 %v725, %v892
      %v894 = vpop.f32.mrb[0].mxu0
      %895 = vdwg.mxu0
      %vm896 = vcmask 523264
      %v897 = vsel %vm896, %v858, -inf
      %898 = vmax.xlane.f32.xlu0 %v897
      %v899 = vpop.xlane.xlu0 %898
      %v900 = vsel %vm896, %v863, -inf
      %901 = vmax.xlane.f32.xlu0 %v900
      %v902 = vpop.xlane.xlu0 %901
      %v903 = vsel %vm896, %v868, -inf
      %904 = vmax.xlane.f32.xlu0 %v903
      %v905 = vpop.xlane.xlu0 %904
      %v906 = vsel %vm896, %v873, -inf
      %907 = vmax.xlane.f32.xlu0 %v906
      %v908 = vpop.xlane.xlu0 %907
      %v909 = vsel %vm896, %v878, -inf
      %910 = vmax.xlane.f32.xlu0 %v909
      %v911 = vpop.xlane.xlu0 %910
      %v912 = vsel %vm896, %v883, -inf
      %913 = vmax.xlane.f32.xlu0 %v912
      %v914 = vpop.xlane.xlu0 %913
      %v915 = vsel %vm896, %v888, -inf
      %916 = vmax.xlane.f32.xlu0 %v915
      %v917 = vpop.xlane.xlu0 %916
      %v918 = vsel %vm896, %v893, -inf
      %919 = vmax.xlane.f32.xlu0 %v918
      %v920 = vpop.xlane.xlu0 %919
      %v921 = vsub.f32 %v858, %v899
      %v922 = vsub.f32 %v863, %v902
      %v923 = vsub.f32 %v868, %v905
      %v924 = vsub.f32 %v873, %v908
      %v925 = vsub.f32 %v878, %v911
      %v926 = vsub.f32 %v883, %v914
      %v927 = vsub.f32 %v888, %v917
      %v928 = vsub.f32 %v893, %v920
      %v929 = vmul.f32 %v921, 1.442695
      %v930 = vpow.pop %v929
      %v931 = vmul.f32 %v922, 1.442695
      %v932 = vpow.pop %v931
      %v933 = vmul.f32 %v923, 1.442695
      %v934 = vpow.pop %v933
      %v935 = vmul.f32 %v924, 1.442695
      %v936 = vpow.pop %v935
      %v937 = vmul.f32 %v925, 1.442695
      %v938 = vpow.pop %v937
      %v939 = vmul.f32 %v926, 1.442695
      %v940 = vpow.pop %v939
      %v941 = vmul.f32 %v927, 1.442695
      %v942 = vpow.pop %v941
      %v943 = vmul.f32 %v928, 1.442695
      %v944 = vpow.pop %v943
      %v945 = vsel %vm896, %v930, 0.0
      %946 = vadd.xlane.f32.xlu0 %v945
      %v947 = vpop.xlane.xlu0 %946
      %v948 = vsel %vm896, %v932, 0.0
      %949 = vadd.xlane.f32.xlu0 %v948
      %v950 = vpop.xlane.xlu0 %949
      %v951 = vsel %vm896, %v934, 0.0
      %952 = vadd.xlane.f32.xlu0 %v951
      %v953 = vpop.xlane.xlu0 %952
      %v954 = vsel %vm896, %v936, 0.0
      %955 = vadd.xlane.f32.xlu0 %v954
      %v956 = vpop.xlane.xlu0 %955
      %v957 = vsel %vm896, %v938, 0.0
      %958 = vadd.xlane.f32.xlu0 %v957
      %v959 = vpop.xlane.xlu0 %958
      %v960 = vsel %vm896, %v940, 0.0
      %961 = vadd.xlane.f32.xlu0 %v960
      %v962 = vpop.xlane.xlu0 %961
      %v963 = vsel %vm896, %v942, 0.0
      %964 = vadd.xlane.f32.xlu0 %v963
      %v965 = vpop.xlane.xlu0 %964
      %v966 = vsel %vm896, %v944, 0.0
      %967 = vadd.xlane.f32.xlu0 %v966
      %v968 = vpop.xlane.xlu0 %967
      %v969 = vrcp.pop %v947
      %v970 = vrcp.pop %v950
      %v971 = vrcp.pop %v953
      %v972 = vrcp.pop %v956
      %v973 = vrcp.pop %v959
      %v974 = vrcp.pop %v962
      %v975 = vrcp.pop %v965
      %v976 = vrcp.pop %v968
      %v977 = vmul.f32 %v930, %v969
      %v978 = vmul.f32 %v932, %v970
      %v979 = vmul.f32 %v934, %v971
      %v980 = vmul.f32 %v936, %v972
      %v981 = vmul.f32 %v938, %v973
      %v982 = vmul.f32 %v940, %v974
      %v983 = vmul.f32 %v942, %v975
      %v984 = vmul.f32 %v944, %v976
      %985 = vrot.lane.b32.xlu0 %v680, 64
      %v986 = vpop.permute.xlu0 %985
      %987 = vrot.lane.b32.xlu0 %v683, 64
      %v988 = vpop.permute.xlu0 %987
      %989 = vrot.lane.b32.xlu0 %v688, 64
      %v990 = vpop.permute.xlu0 %989
      %991 = vrot.lane.b32.xlu0 %v691, 64
      %v992 = vpop.permute.xlu0 %991
      %993 = vrot.lane.b32.xlu0 %v696, 64
      %v994 = vpop.permute.xlu0 %993
      %995 = vrot.lane.b32.xlu0 %v699, 64
      %v996 = vpop.permute.xlu0 %995
      %997 = vrot.lane.b32.xlu0 %v704, 64
      %v998 = vpop.permute.xlu0 %997
      %999 = vrot.lane.b32.xlu0 %v707, 64
      %v1000 = vpop.permute.xlu0 %999
      %v1010 = vsel %vm896, %v977, 0
      %v1013 = vsel %vm896, %v978, 0
      %v1016 = vsel %vm896, %v979, 0
      %v1019 = vsel %vm896, %v980, 0
      %v1022 = vsel %vm896, %v981, 0
      %v1025 = vsel %vm896, %v982, 0
      %v1028 = vsel %vm896, %v983, 0
      %v1031 = vsel %vm896, %v984, 0
      %1033 = vmatprep.subr.mxu0 0.0
      %1034 = vmatpush1.msra.mxu0 %v986
      %1035 = vmatprep.subr.mxu0 0.0
      %1036 = vmatpush1.msra.mxu0 %v988
      %1037 = vmatprep.subr.mxu0 0.0
      %1038 = vmatpush1.msra.mxu0 %v990
      %1039 = vmatprep.subr.mxu0 0.0
      %1040 = vmatpush1.msra.mxu0 %v992
      %1041 = vmatprep.subr.mxu0 0.0
      %1042 = vmatpush1.msra.mxu0 %v994
      %1043 = vmatprep.subr.mxu0 0.0
      %1044 = vmatpush1.msra.mxu0 %v996
      %1045 = vmatprep.subr.mxu0 0.0
      %1046 = vmatpush1.msra.mxu0 %v998
      %1047 = vmatprep.subr.mxu0 0.0
      %1048 = vmatpush1.msra.mxu0 %v1000
      %1049 = vmatprep.subr.mxu0 0.0
      %1050 = vmatpush1.msra.mxu0 0.0
      %1051 = vmatprep.subr.mxu0 0.0
      %1052 = vmatpush1.msra.mxu0 0.0
      %1053 = vmatprep.subr.mxu0 0.0
      %1054 = vmatpush1.msra.mxu0 0.0
      %1055 = vmatprep.subr.mxu0 0.0
      %1056 = vmatpush1.msra.mxu0 0.0
      %1057 = vmatprep.subr.mxu0 0.0
      %1058 = vmatpush1.msra.mxu0 0.0
      %1059 = vmatprep.subr.mxu0 0.0
      %1060 = vmatpush1.msra.mxu0 0.0
      %1061 = vmatprep.subr.mxu0 0.0
      %1062 = vmatpush1.msra.mxu0 0.0
      %1063 = vmatprep.subr.mxu0 0.0
      %1064 = vmatpush1.msra.mxu0 0.0
      %1065 = vmatprep.subr.mxu0 0.0
      %1066 = vmatpush1.msra.mxu0 0.0
      %1067 = vmatprep.subr.mxu0 0.0
      %1068 = vmatpush1.msra.mxu0 0.0
      %1069 = vmatprep.subr.mxu0 0.0
      %1070 = vmatpush1.msra.mxu0 0.0
      %1071 = vmatprep.subr.mxu0 0.0
      %1072 = vmatpush1.msra.mxu0 0.0
      %1073 = vmatprep.subr.mxu0 0.0
      %1074 = vmatpush1.msra.mxu0 0.0
      %1075 = vmatprep.subr.mxu0 0.0
      %1076 = vmatpush1.msra.mxu0 0.0
      %1077 = vmatprep.subr.mxu0 0.0
      %1078 = vmatpush1.msra.mxu0 0.0
      %1079 = vmatprep.subr.mxu0 0.0
      %1080 = vmatpush1.msra.mxu0 0.0
      %1081 = vmatprep.subr.mxu0 0.0
      %1082 = vmatpush1.msra.mxu0 0.0
      %1083 = vmatprep.subr.mxu0 0.0
      %1084 = vmatpush1.msra.mxu0 0.0
      %1085 = vmatprep.subr.mxu0 0.0
      %1086 = vmatpush1.msra.mxu0 0.0
      %1087 = vmatprep.subr.mxu0 0.0
      %1088 = vmatpush1.msra.mxu0 0.0
      %1089 = vmatprep.subr.mxu0 0.0
      %1090 = vmatpush1.msra.mxu0 0.0
      %1091 = vmatprep.subr.mxu0 0.0
      %1092 = vmatpush1.msra.mxu0 0.0
      %1093 = vmatprep.subr.mxu0 0.0
      %1094 = vmatpush1.msra.mxu0 0.0
      %1095 = vmatprep.subr.mxu0 0.0
      %1096 = vmatpush1.msra.mxu0 0.0
      %1097 = vmatprep.mubr.f32.mxu0 0.0
      %1098 = vmatmul.mubr.f32.gmra.mrb[0].mxu0 %v1010
      %v1099 = vpop.f32.mrb[0].mxu0
      %v1100 = vadd.f32 0.0, %v1099
      %v1101 = vpop.f32.mrb[0].mxu0
      %1102 = vmatprep.mubr.f32.mxu0 0.0
      %1103 = vmatmul.mubr.f32.gmra.mrb[0].mxu0 %v1013
      %v1104 = vpop.f32.mrb[0].mxu0
      %v1105 = vadd.f32 0.0, %v1104
      %v1106 = vpop.f32.mrb[0].mxu0
      %1107 = vmatprep.mubr.f32.mxu0 0.0
      %1108 = vmatmul.mubr.f32.gmra.mrb[0].mxu0 %v1016
      %v1109 = vpop.f32.mrb[0].mxu0
      %v1110 = vadd.f32 0.0, %v1109
      %v1111 = vpop.f32.mrb[0].mxu0
      %1112 = vmatprep.mubr.f32.mxu0 0.0
      %1113 = vmatmul.mubr.f32.gmra.mrb[0].mxu0 %v1019
      %v1114 = vpop.f32.mrb[0].mxu0
      %v1115 = vadd.f32 0.0, %v1114
      %v1116 = vpop.f32.mrb[0].mxu0
      %1117 = vmatprep.mubr.f32.mxu0 0.0
      %1118 = vmatmul.mubr.f32.gmra.mrb[0].mxu0 %v1022
      %v1119 = vpop.f32.mrb[0].mxu0
      %v1120 = vadd.f32 0.0, %v1119
      %v1121 = vpop.f32.mrb[0].mxu0
      %1122 = vmatprep.mubr.f32.mxu0 0.0
      %1123 = vmatmul.mubr.f32.gmra.mrb[0].mxu0 %v1025
      %v1124 = vpop.f32.mrb[0].mxu0
      %v1125 = vadd.f32 0.0, %v1124
      %v1126 = vpop.f32.mrb[0].mxu0
      %1127 = vmatprep.mubr.f32.mxu0 0.0
      %1128 = vmatmul.mubr.f32.gmra.mrb[0].mxu0 %v1028
      %v1129 = vpop.f32.mrb[0].mxu0
      %v1130 = vadd.f32 0.0, %v1129
      %v1131 = vpop.f32.mrb[0].mxu0
      %1132 = vmatprep.mubr.f32.mxu0 0.0
      %1133 = vmatmul.mubr.f32.gmra.mrb[0].mxu0 %v1031
      %v1134 = vpop.f32.mrb[0].mxu0
      %v1135 = vadd.f32 0.0, %v1134
      %v1136 = vpop.f32.mrb[0].mxu0
      %1137 = vdwg.mxu0
      %s1138 = scalar_lea.vmem %s7, 64
      %v1139 = vld [vmem:[%s1138] sm:$0xff]
      %v1140 = vld [vmem:[%s1138 + $0x8] sm:$0xff]
      %v1141 = vld [vmem:[%s1138 + $0x10] sm:$0xff]
      %v1142 = vld [vmem:[%s1138 + $0x18] sm:$0xff]
      %v1143 = vld [vmem:[%s1138 + $0x20] sm:$0xff]
      %v1144 = vld [vmem:[%s1138 + $0x28] sm:$0xff]
      %v1145 = vld [vmem:[%s1138 + $0x30] sm:$0xff]
      %v1146 = vld [vmem:[%s1138 + $0x38] sm:$0xff]
      %1147 = vrot.lane.b32.xlu0 %v710, 120
      %v1148 = vpop.permute.xlu0 %1147
      %1149 = vrot.lane.b32.xlu0 %v711, 120
      %v1150 = vpop.permute.xlu0 %1149
      %1151 = vrot.lane.b32.xlu0 %v712, 120
      %v1152 = vpop.permute.xlu0 %1151
      %1153 = vrot.lane.b32.xlu0 %v713, 120
      %v1154 = vpop.permute.xlu0 %1153
      %1155 = vrot.lane.b32.xlu0 %v714, 120
      %v1156 = vpop.permute.xlu0 %1155
      %1157 = vrot.lane.b32.xlu0 %v715, 120
      %v1158 = vpop.permute.xlu0 %1157
      %1159 = vrot.lane.b32.xlu0 %v716, 120
      %v1160 = vpop.permute.xlu0 %1159
      %1161 = vrot.lane.b32.xlu0 %v717, 120
      %v1162 = vpop.permute.xlu0 %1161
      %1163 = vrot.lane.b32.xlu0 %v680, 88
      %v1164 = vpop.permute.xlu0 %1163
      %1165 = vrot.lane.b32.xlu0 %v683, 88
      %v1166 = vpop.permute.xlu0 %1165
      %1167 = vrot.lane.b32.xlu0 %v688, 88
      %v1168 = vpop.permute.xlu0 %1167
      %1169 = vrot.lane.b32.xlu0 %v691, 88
      %v1170 = vpop.permute.xlu0 %1169
      %1171 = vrot.lane.b32.xlu0 %v696, 88
      %v1172 = vpop.permute.xlu0 %1171
      %1173 = vrot.lane.b32.xlu0 %v699, 88
      %v1174 = vpop.permute.xlu0 %1173
      %1175 = vrot.lane.b32.xlu0 %v704, 88
      %v1176 = vpop.permute.xlu0 %1175
      %1177 = vrot.lane.b32.xlu0 %v707, 88
      %v1178 = vpop.permute.xlu0 %1177
      %v1179 = vsel %vm750, %v1148, 0
      %v1181 = vsel %vm750, %v1150, 0
      %v1183 = vsel %vm750, %v1152, 0
      %v1185 = vsel %vm750, %v1154, 0
      %v1187 = vsel %vm750, %v1156, 0
      %v1189 = vsel %vm750, %v1158, 0
      %v1191 = vsel %vm750, %v1160, 0
      %v1193 = vsel %vm750, %v1162, 0
      %v1195 = vsel %vm750, %v1164, 0
      %v1197 = vsel %vm750, %v1166, 0
      %v1199 = vsel %vm750, %v1168, 0
      %v1201 = vsel %vm750, %v1170, 0
      %v1203 = vsel %vm750, %v1172, 0
      %v1205 = vsel %vm750, %v1174, 0
      %v1207 = vsel %vm750, %v1176, 0
      %v1209 = vsel %vm750, %v1178, 0
      %1211 = vmatprep.subr.mxu0 0.0
      %1212 = vmatpush1.xpose.msra.mxu0 %v1195
      %1213 = vmatprep.subr.mxu0 0.0
      %1214 = vmatpush1.xpose.msra.mxu0 %v1197
      %1215 = vmatprep.subr.mxu0 0.0
      %1216 = vmatpush1.xpose.msra.mxu0 %v1199
      %1217 = vmatprep.subr.mxu0 0.0
      %1218 = vmatpush1.xpose.msra.mxu0 %v1201
      %1219 = vmatprep.subr.mxu0 0.0
      %1220 = vmatpush1.xpose.msra.mxu0 %v1203
      %1221 = vmatprep.subr.mxu0 0.0
      %1222 = vmatpush1.xpose.msra.mxu0 %v1205
      %1223 = vmatprep.subr.mxu0 0.0
      %1224 = vmatpush1.xpose.msra.mxu0 %v1207
      %1225 = vmatprep.subr.mxu0 0.0
      %1226 = vmatpush1.xpose.msra.mxu0 %v1209
      %1227 = vmatprep.subr.mxu0 0.0
      %1228 = vmatpush1.xpose.msra.mxu0 0.0
      %1229 = vmatprep.subr.mxu0 0.0
      %1230 = vmatpush1.xpose.msra.mxu0 0.0
      %1231 = vmatprep.subr.mxu0 0.0
      %1232 = vmatpush1.xpose.msra.mxu0 0.0
      %1233 = vmatprep.subr.mxu0 0.0
      %1234 = vmatpush1.xpose.msra.mxu0 0.0
      %1235 = vmatprep.subr.mxu0 0.0
      %1236 = vmatpush1.xpose.msra.mxu0 0.0
      %1237 = vmatprep.subr.mxu0 0.0
      %1238 = vmatpush1.xpose.msra.mxu0 0.0
      %1239 = vmatprep.subr.mxu0 0.0
      %1240 = vmatpush1.xpose.msra.mxu0 0.0
      %1241 = vmatprep.subr.mxu0 0.0
      %1242 = vmatpush1.xpose.msra.mxu0 0.0
      %1243 = vmatprep.subr.mxu0 0.0
      %1244 = vmatpush1.xpose.msra.mxu0 0.0
      %1245 = vmatprep.subr.mxu0 0.0
      %1246 = vmatpush1.xpose.msra.mxu0 0.0
      %1247 = vmatprep.subr.mxu0 0.0
      %1248 = vmatpush1.xpose.msra.mxu0 0.0
      %1249 = vmatprep.subr.mxu0 0.0
      %1250 = vmatpush1.xpose.msra.mxu0 0.0
      %1251 = vmatprep.subr.mxu0 0.0
      %1252 = vmatpush1.xpose.msra.mxu0 0.0
      %1253 = vmatprep.subr.mxu0 0.0
      %1254 = vmatpush1.xpose.msra.mxu0 0.0
      %1255 = vmatprep.subr.mxu0 0.0
      %1256 = vmatpush1.xpose.msra.mxu0 0.0
      %1257 = vmatprep.subr.mxu0 0.0
      %1258 = vmatpush1.xpose.msra.mxu0 0.0
      %1259 = vmatprep.subr.mxu0 0.0
      %1260 = vmatpush1.xpose.msra.mxu0 0.0
      %1261 = vmatprep.subr.mxu0 0.0
      %1262 = vmatpush1.xpose.msra.mxu0 0.0
      %1263 = vmatprep.subr.mxu0 0.0
      %1264 = vmatpush1.xpose.msra.mxu0 0.0
      %1265 = vmatprep.subr.mxu0 0.0
      %1266 = vmatpush1.xpose.msra.mxu0 0.0
      %1267 = vmatprep.subr.mxu0 0.0
      %1268 = vmatpush1.xpose.msra.mxu0 0.0
      %1269 = vmatprep.subr.mxu0 0.0
      %1270 = vmatpush1.xpose.msra.mxu0 0.0
      %1271 = vmatprep.subr.mxu0 0.0
      %1272 = vmatpush1.xpose.msra.mxu0 0.0
      %1273 = vmatprep.subr.mxu0 0.0
      %1274 = vmatpush1.xpose.msra.mxu0 0.0
      %1275 = vmatprep.mubr.f32.mxu0 0.0
      %1276 = vmatmul.mubr.f32.gmra.mrb[0].mxu0 %v1179
      %v1277 = vpop.f32.mrb[0].mxu0
      %v1278 = vadd.f32 %v1139, %v1277
      %v1279 = vpop.f32.mrb[0].mxu0
      %1280 = vmatprep.mubr.f32.mxu0 0.0
      %1281 = vmatmul.mubr.f32.gmra.mrb[0].mxu0 %v1181
      %v1282 = vpop.f32.mrb[0].mxu0
      %v1283 = vadd.f32 %v1140, %v1282
      %v1284 = vpop.f32.mrb[0].mxu0
      %1285 = vmatprep.mubr.f32.mxu0 0.0
      %1286 = vmatmul.mubr.f32.gmra.mrb[0].mxu0 %v1183
      %v1287 = vpop.f32.mrb[0].mxu0
      %v1288 = vadd.f32 %v1141, %v1287
      %v1289 = vpop.f32.mrb[0].mxu0
      %1290 = vmatprep.mubr.f32.mxu0 0.0
      %1291 = vmatmul.mubr.f32.gmra.mrb[0].mxu0 %v1185
      %v1292 = vpop.f32.mrb[0].mxu0
      %v1293 = vadd.f32 %v1142, %v1292
      %v1294 = vpop.f32.mrb[0].mxu0
      %1295 = vmatprep.mubr.f32.mxu0 0.0
      %1296 = vmatmul.mubr.f32.gmra.mrb[0].mxu0 %v1187
      %v1297 = vpop.f32.mrb[0].mxu0
      %v1298 = vadd.f32 %v1143, %v1297
      %v1299 = vpop.f32.mrb[0].mxu0
      %1300 = vmatprep.mubr.f32.mxu0 0.0
      %1301 = vmatmul.mubr.f32.gmra.mrb[0].mxu0 %v1189
      %v1302 = vpop.f32.mrb[0].mxu0
      %v1303 = vadd.f32 %v1144, %v1302
      %v1304 = vpop.f32.mrb[0].mxu0
      %1305 = vmatprep.mubr.f32.mxu0 0.0
      %1306 = vmatmul.mubr.f32.gmra.mrb[0].mxu0 %v1191
      %v1307 = vpop.f32.mrb[0].mxu0
      %v1308 = vadd.f32 %v1145, %v1307
      %v1309 = vpop.f32.mrb[0].mxu0
      %1310 = vmatprep.mubr.f32.mxu0 0.0
      %1311 = vmatmul.mubr.f32.gmra.mrb[0].mxu0 %v1193
      %v1312 = vpop.f32.mrb[0].mxu0
      %v1313 = vadd.f32 %v1146, %v1312
      %v1314 = vpop.f32.mrb[0].mxu0
      %1315 = vdwg.mxu0
      %v1316 = vsel %vm896, %v1278, -inf
      %1317 = vmax.xlane.f32.xlu0 %v1316
      %v1318 = vpop.xlane.xlu0 %1317
      %v1319 = vsel %vm896, %v1283, -inf
      %1320 = vmax.xlane.f32.xlu0 %v1319
      %v1321 = vpop.xlane.xlu0 %1320
      %v1322 = vsel %vm896, %v1288, -inf
      %1323 = vmax.xlane.f32.xlu0 %v1322
      %v1324 = vpop.xlane.xlu0 %1323
      %v1325 = vsel %vm896, %v1293, -inf
      %1326 = vmax.xlane.f32.xlu0 %v1325
      %v1327 = vpop.xlane.xlu0 %1326
      %v1328 = vsel %vm896, %v1298, -inf
      %1329 = vmax.xlane.f32.xlu0 %v1328
      %v1330 = vpop.xlane.xlu0 %1329
      %v1331 = vsel %vm896, %v1303, -inf
      %1332 = vmax.xlane.f32.xlu0 %v1331
      %v1333 = vpop.xlane.xlu0 %1332
      %v1334 = vsel %vm896, %v1308, -inf
      %1335 = vmax.xlane.f32.xlu0 %v1334
      %v1336 = vpop.xlane.xlu0 %1335
      %v1337 = vsel %vm896, %v1313, -inf
      %1338 = vmax.xlane.f32.xlu0 %v1337
      %v1339 = vpop.xlane.xlu0 %1338
      %v1340 = vsub.f32 %v1278, %v1318
      %v1341 = vsub.f32 %v1283, %v1321
      %v1342 = vsub.f32 %v1288, %v1324
      %v1343 = vsub.f32 %v1293, %v1327
      %v1344 = vsub.f32 %v1298, %v1330
      %v1345 = vsub.f32 %v1303, %v1333
      %v1346 = vsub.f32 %v1308, %v1336
      %v1347 = vsub.f32 %v1313, %v1339
      %v1348 = vmul.f32 %v1340, 1.442695
      %v1349 = vpow.pop %v1348
      %v1350 = vmul.f32 %v1341, 1.442695
      %v1351 = vpow.pop %v1350
      %v1352 = vmul.f32 %v1342, 1.442695
      %v1353 = vpow.pop %v1352
      %v1354 = vmul.f32 %v1343, 1.442695
      %v1355 = vpow.pop %v1354
      %v1356 = vmul.f32 %v1344, 1.442695
      %v1357 = vpow.pop %v1356
      %v1358 = vmul.f32 %v1345, 1.442695
      %v1359 = vpow.pop %v1358
      %v1360 = vmul.f32 %v1346, 1.442695
      %v1361 = vpow.pop %v1360
      %v1362 = vmul.f32 %v1347, 1.442695
      %v1363 = vpow.pop %v1362
      %v1364 = vsel %vm896, %v1349, 0.0
      %1365 = vadd.xlane.f32.xlu0 %v1364
      %v1366 = vpop.xlane.xlu0 %1365
      %v1367 = vsel %vm896, %v1351, 0.0
      %1368 = vadd.xlane.f32.xlu0 %v1367
      %v1369 = vpop.xlane.xlu0 %1368
      %v1370 = vsel %vm896, %v1353, 0.0
      %1371 = vadd.xlane.f32.xlu0 %v1370
      %v1372 = vpop.xlane.xlu0 %1371
      %v1373 = vsel %vm896, %v1355, 0.0
      %1374 = vadd.xlane.f32.xlu0 %v1373
      %v1375 = vpop.xlane.xlu0 %1374
      %v1376 = vsel %vm896, %v1357, 0.0
      %1377 = vadd.xlane.f32.xlu0 %v1376
      %v1378 = vpop.xlane.xlu0 %1377
      %v1379 = vsel %vm896, %v1359, 0.0
      %1380 = vadd.xlane.f32.xlu0 %v1379
      %v1381 = vpop.xlane.xlu0 %1380
      %v1382 = vsel %vm896, %v1361, 0.0
      %1383 = vadd.xlane.f32.xlu0 %v1382
      %v1384 = vpop.xlane.xlu0 %1383
      %v1385 = vsel %vm896, %v1363, 0.0
      %1386 = vadd.xlane.f32.xlu0 %v1385
      %v1387 = vpop.xlane.xlu0 %1386
      %v1388 = vrcp.pop %v1366
      %v1389 = vrcp.pop %v1369
      %v1390 = vrcp.pop %v1372
      %v1391 = vrcp.pop %v1375
      %v1392 = vrcp.pop %v1378
      %v1393 = vrcp.pop %v1381
      %v1394 = vrcp.pop %v1384
      %v1395 = vrcp.pop %v1387
      %v1396 = vmul.f32 %v1349, %v1388
      %v1397 = vmul.f32 %v1351, %v1389
      %v1398 = vmul.f32 %v1353, %v1390
      %v1399 = vmul.f32 %v1355, %v1391
      %v1400 = vmul.f32 %v1357, %v1392
      %v1401 = vmul.f32 %v1359, %v1393
      %v1402 = vmul.f32 %v1361, %v1394
      %v1403 = vmul.f32 %v1363, %v1395
      %1404 = vrot.lane.b32.xlu0 %v680, 56
      %v1405 = vpop.permute.xlu0 %1404
      %1406 = vrot.lane.b32.xlu0 %v683, 56
      %v1407 = vpop.permute.xlu0 %1406
      %1408 = vrot.lane.b32.xlu0 %v688, 56
      %v1409 = vpop.permute.xlu0 %1408
      %1410 = vrot.lane.b32.xlu0 %v691, 56
      %v1411 = vpop.permute.xlu0 %1410
      %1412 = vrot.lane.b32.xlu0 %v696, 56
      %v1413 = vpop.permute.xlu0 %1412
      %1414 = vrot.lane.b32.xlu0 %v699, 56
      %v1415 = vpop.permute.xlu0 %1414
      %1416 = vrot.lane.b32.xlu0 %v704, 56
      %v1417 = vpop.permute.xlu0 %1416
      %1418 = vrot.lane.b32.xlu0 %v707, 56
      %v1419 = vpop.permute.xlu0 %1418
      %v1429 = vsel %vm896, %v1396, 0
      %v1432 = vsel %vm896, %v1397, 0
      %v1435 = vsel %vm896, %v1398, 0
      %v1438 = vsel %vm896, %v1399, 0
      %v1441 = vsel %vm896, %v1400, 0
      %v1444 = vsel %vm896, %v1401, 0
      %v1447 = vsel %vm896, %v1402, 0
      %v1450 = vsel %vm896, %v1403, 0
      %1452 = vmatprep.subr.mxu0 0.0
      %1453 = vmatpush1.msra.mxu0 %v1405
      %1454 = vmatprep.subr.mxu0 0.0
      %1455 = vmatpush1.msra.mxu0 %v1407
      %1456 = vmatprep.subr.mxu0 0.0
      %1457 = vmatpush1.msra.mxu0 %v1409
      %1458 = vmatprep.subr.mxu0 0.0
      %1459 = vmatpush1.msra.mxu0 %v1411
      %1460 = vmatprep.subr.mxu0 0.0
      %1461 = vmatpush1.msra.mxu0 %v1413
      %1462 = vmatprep.subr.mxu0 0.0
      %1463 = vmatpush1.msra.mxu0 %v1415
      %1464 = vmatprep.subr.mxu0 0.0
      %1465 = vmatpush1.msra.mxu0 %v1417
      %1466 = vmatprep.subr.mxu0 0.0
      %1467 = vmatpush1.msra.mxu0 %v1419
      %1468 = vmatprep.subr.mxu0 0.0
      %1469 = vmatpush1.msra.mxu0 0.0
      %1470 = vmatprep.subr.mxu0 0.0
      %1471 = vmatpush1.msra.mxu0 0.0
      %1472 = vmatprep.subr.mxu0 0.0
      %1473 = vmatpush1.msra.mxu0 0.0
      %1474 = vmatprep.subr.mxu0 0.0
      %1475 = vmatpush1.msra.mxu0 0.0
      %1476 = vmatprep.subr.mxu0 0.0
      %1477 = vmatpush1.msra.mxu0 0.0
      %1478 = vmatprep.subr.mxu0 0.0
      %1479 = vmatpush1.msra.mxu0 0.0
      %1480 = vmatprep.subr.mxu0 0.0
      %1481 = vmatpush1.msra.mxu0 0.0
      %1482 = vmatprep.subr.mxu0 0.0
      %1483 = vmatpush1.msra.mxu0 0.0
      %1484 = vmatprep.subr.mxu0 0.0
      %1485 = vmatpush1.msra.mxu0 0.0
      %1486 = vmatprep.subr.mxu0 0.0
      %1487 = vmatpush1.msra.mxu0 0.0
      %1488 = vmatprep.subr.mxu0 0.0
      %1489 = vmatpush1.msra.mxu0 0.0
      %1490 = vmatprep.subr.mxu0 0.0
      %1491 = vmatpush1.msra.mxu0 0.0
      %1492 = vmatprep.subr.mxu0 0.0
      %1493 = vmatpush1.msra.mxu0 0.0
      %1494 = vmatprep.subr.mxu0 0.0
      %1495 = vmatpush1.msra.mxu0 0.0
      %1496 = vmatprep.subr.mxu0 0.0
      %1497 = vmatpush1.msra.mxu0 0.0
      %1498 = vmatprep.subr.mxu0 0.0
      %1499 = vmatpush1.msra.mxu0 0.0
      %1500 = vmatprep.subr.mxu0 0.0
      %1501 = vmatpush1.msra.mxu0 0.0
      %1502 = vmatprep.subr.mxu0 0.0
      %1503 = vmatpush1.msra.mxu0 0.0
      %1504 = vmatprep.subr.mxu0 0.0
      %1505 = vmatpush1.msra.mxu0 0.0
      %1506 = vmatprep.subr.mxu0 0.0
      %1507 = vmatpush1.msra.mxu0 0.0
      %1508 = vmatprep.subr.mxu0 0.0
      %1509 = vmatpush1.msra.mxu0 0.0
      %1510 = vmatprep.subr.mxu0 0.0
      %1511 = vmatpush1.msra.mxu0 0.0
      %1512 = vmatprep.subr.mxu0 0.0
      %1513 = vmatpush1.msra.mxu0 0.0
      %1514 = vmatprep.subr.mxu0 0.0
      %1515 = vmatpush1.msra.mxu0 0.0
      %1516 = vmatprep.mubr.f32.mxu0 0.0
      %1517 = vmatmul.mubr.f32.gmra.mrb[0].mxu0 %v1429
      %v1518 = vpop.f32.mrb[0].mxu0
      %v1519 = vadd.f32 0.0, %v1518
      %v1520 = vpop.f32.mrb[0].mxu0
      %1521 = vmatprep.mubr.f32.mxu0 0.0
      %1522 = vmatmul.mubr.f32.gmra.mrb[0].mxu0 %v1432
      %v1523 = vpop.f32.mrb[0].mxu0
      %v1524 = vadd.f32 0.0, %v1523
      %v1525 = vpop.f32.mrb[0].mxu0
      %1526 = vmatprep.mubr.f32.mxu0 0.0
      %1527 = vmatmul.mubr.f32.gmra.mrb[0].mxu0 %v1435
      %v1528 = vpop.f32.mrb[0].mxu0
      %v1529 = vadd.f32 0.0, %v1528
      %v1530 = vpop.f32.mrb[0].mxu0
      %1531 = vmatprep.mubr.f32.mxu0 0.0
      %1532 = vmatmul.mubr.f32.gmra.mrb[0].mxu0 %v1438
      %v1533 = vpop.f32.mrb[0].mxu0
      %v1534 = vadd.f32 0.0, %v1533
      %v1535 = vpop.f32.mrb[0].mxu0
      %1536 = vmatprep.mubr.f32.mxu0 0.0
      %1537 = vmatmul.mubr.f32.gmra.mrb[0].mxu0 %v1441
      %v1538 = vpop.f32.mrb[0].mxu0
      %v1539 = vadd.f32 0.0, %v1538
      %v1540 = vpop.f32.mrb[0].mxu0
      %1541 = vmatprep.mubr.f32.mxu0 0.0
      %1542 = vmatmul.mubr.f32.gmra.mrb[0].mxu0 %v1444
      %v1543 = vpop.f32.mrb[0].mxu0
      %v1544 = vadd.f32 0.0, %v1543
      %v1545 = vpop.f32.mrb[0].mxu0
      %1546 = vmatprep.mubr.f32.mxu0 0.0
      %1547 = vmatmul.mubr.f32.gmra.mrb[0].mxu0 %v1447
      %v1548 = vpop.f32.mrb[0].mxu0
      %v1549 = vadd.f32 0.0, %v1548
      %v1550 = vpop.f32.mrb[0].mxu0
      %1551 = vmatprep.mubr.f32.mxu0 0.0
      %1552 = vmatmul.mubr.f32.gmra.mrb[0].mxu0 %v1450
      %v1553 = vpop.f32.mrb[0].mxu0
      %v1554 = vadd.f32 0.0, %v1553
      %v1555 = vpop.f32.mrb[0].mxu0
      %1556 = vdwg.mxu0
      %s1557 = scalar_lea.vmem %s7, 128
      %v1558 = vld [vmem:[%s1557] sm:$0xff]
      %v1559 = vld [vmem:[%s1557 + $0x8] sm:$0xff]
      %v1560 = vld [vmem:[%s1557 + $0x10] sm:$0xff]
      %v1561 = vld [vmem:[%s1557 + $0x18] sm:$0xff]
      %v1562 = vld [vmem:[%s1557 + $0x20] sm:$0xff]
      %v1563 = vld [vmem:[%s1557 + $0x28] sm:$0xff]
      %v1564 = vld [vmem:[%s1557 + $0x30] sm:$0xff]
      %v1565 = vld [vmem:[%s1557 + $0x38] sm:$0xff]
      %1566 = vrot.lane.b32.xlu0 %v710, 112
      %v1567 = vpop.permute.xlu0 %1566
      %1568 = vrot.lane.b32.xlu0 %v711, 112
      %v1569 = vpop.permute.xlu0 %1568
      %1570 = vrot.lane.b32.xlu0 %v712, 112
      %v1571 = vpop.permute.xlu0 %1570
      %1572 = vrot.lane.b32.xlu0 %v713, 112
      %v1573 = vpop.permute.xlu0 %1572
      %1574 = vrot.lane.b32.xlu0 %v714, 112
      %v1575 = vpop.permute.xlu0 %1574
      %1576 = vrot.lane.b32.xlu0 %v715, 112
      %v1577 = vpop.permute.xlu0 %1576
      %1578 = vrot.lane.b32.xlu0 %v716, 112
      %v1579 = vpop.permute.xlu0 %1578
      %1580 = vrot.lane.b32.xlu0 %v717, 112
      %v1581 = vpop.permute.xlu0 %1580
      %1582 = vrot.lane.b32.xlu0 %v680, 80
      %v1583 = vpop.permute.xlu0 %1582
      %1584 = vrot.lane.b32.xlu0 %v683, 80
      %v1585 = vpop.permute.xlu0 %1584
      %1586 = vrot.lane.b32.xlu0 %v688, 80
      %v1587 = vpop.permute.xlu0 %1586
      %1588 = vrot.lane.b32.xlu0 %v691, 80
      %v1589 = vpop.permute.xlu0 %1588
      %1590 = vrot.lane.b32.xlu0 %v696, 80
      %v1591 = vpop.permute.xlu0 %1590
      %1592 = vrot.lane.b32.xlu0 %v699, 80
      %v1593 = vpop.permute.xlu0 %1592
      %1594 = vrot.lane.b32.xlu0 %v704, 80
      %v1595 = vpop.permute.xlu0 %1594
      %1596 = vrot.lane.b32.xlu0 %v707, 80
      %v1597 = vpop.permute.xlu0 %1596
      %v1598 = vsel %vm750, %v1567, 0
      %v1600 = vsel %vm750, %v1569, 0
      %v1602 = vsel %vm750, %v1571, 0
      %v1604 = vsel %vm750, %v1573, 0
      %v1606 = vsel %vm750, %v1575, 0
      %v1608 = vsel %vm750, %v1577, 0
      %v1610 = vsel %vm750, %v1579, 0
      %v1612 = vsel %vm750, %v1581, 0
      %v1614 = vsel %vm750, %v1583, 0
      %v1616 = vsel %vm750, %v1585, 0
      %v1618 = vsel %vm750, %v1587, 0
      %v1620 = vsel %vm750, %v1589, 0
      %v1622 = vsel %vm750, %v1591, 0
      %v1624 = vsel %vm750, %v1593, 0
      %v1626 = vsel %vm750, %v1595, 0
      %v1628 = vsel %vm750, %v1597, 0
      %1630 = vmatprep.subr.mxu0 0.0
      %1631 = vmatpush1.xpose.msra.mxu0 %v1614
      %1632 = vmatprep.subr.mxu0 0.0
      %1633 = vmatpush1.xpose.msra.mxu0 %v1616
      %1634 = vmatprep.subr.mxu0 0.0
      %1635 = vmatpush1.xpose.msra.mxu0 %v1618
      %1636 = vmatprep.subr.mxu0 0.0
      %1637 = vmatpush1.xpose.msra.mxu0 %v1620
      %1638 = vmatprep.subr.mxu0 0.0
      %1639 = vmatpush1.xpose.msra.mxu0 %v1622
      %1640 = vmatprep.subr.mxu0 0.0
      %1641 = vmatpush1.xpose.msra.mxu0 %v1624
      %1642 = vmatprep.subr.mxu0 0.0
      %1643 = vmatpush1.xpose.msra.mxu0 %v1626
      %1644 = vmatprep.subr.mxu0 0.0
      %1645 = vmatpush1.xpose.msra.mxu0 %v1628
      %1646 = vmatprep.subr.mxu0 0.0
      %1647 = vmatpush1.xpose.msra.mxu0 0.0
      %1648 = vmatprep.subr.mxu0 0.0
      %1649 = vmatpush1.xpose.msra.mxu0 0.0
      %1650 = vmatprep.subr.mxu0 0.0
      %1651 = vmatpush1.xpose.msra.mxu0 0.0
      %1652 = vmatprep.subr.mxu0 0.0
      %1653 = vmatpush1.xpose.msra.mxu0 0.0
      %1654 = vmatprep.subr.mxu0 0.0
      %1655 = vmatpush1.xpose.msra.mxu0 0.0
      %1656 = vmatprep.subr.mxu0 0.0
      %1657 = vmatpush1.xpose.msra.mxu0 0.0
      %1658 = vmatprep.subr.mxu0 0.0
      %1659 = vmatpush1.xpose.msra.mxu0 0.0
      %1660 = vmatprep.subr.mxu0 0.0
      %1661 = vmatpush1.xpose.msra.mxu0 0.0
      %1662 = vmatprep.subr.mxu0 0.0
      %1663 = vmatpush1.xpose.msra.mxu0 0.0
      %1664 = vmatprep.subr.mxu0 0.0
      %1665 = vmatpush1.xpose.msra.mxu0 0.0
      %1666 = vmatprep.subr.mxu0 0.0
      %1667 = vmatpush1.xpose.msra.mxu0 0.0
      %1668 = vmatprep.subr.mxu0 0.0
      %1669 = vmatpush1.xpose.msra.mxu0 0.0
      %1670 = vmatprep.subr.mxu0 0.0
      %1671 = vmatpush1.xpose.msra.mxu0 0.0
      %1672 = vmatprep.subr.mxu0 0.0
      %1673 = vmatpush1.xpose.msra.mxu0 0.0
      %1674 = vmatprep.subr.mxu0 0.0
      %1675 = vmatpush1.xpose.msra.mxu0 0.0
      %1676 = vmatprep.subr.mxu0 0.0
      %1677 = vmatpush1.xpose.msra.mxu0 0.0
      %1678 = vmatprep.subr.mxu0 0.0
      %1679 = vmatpush1.xpose.msra.mxu0 0.0
      %1680 = vmatprep.subr.mxu0 0.0
      %1681 = vmatpush1.xpose.msra.mxu0 0.0
      %1682 = vmatprep.subr.mxu0 0.0
      %1683 = vmatpush1.xpose.msra.mxu0 0.0
      %1684 = vmatprep.subr.mxu0 0.0
      %1685 = vmatpush1.xpose.msra.mxu0 0.0
      %1686 = vmatprep.subr.mxu0 0.0
      %1687 = vmatpush1.xpose.msra.mxu0 0.0
      %1688 = vmatprep.subr.mxu0 0.0
      %1689 = vmatpush1.xpose.msra.mxu0 0.0
      %1690 = vmatprep.subr.mxu0 0.0
      %1691 = vmatpush1.xpose.msra.mxu0 0.0
      %1692 = vmatprep.subr.mxu0 0.0
      %1693 = vmatpush1.xpose.msra.mxu0 0.0
      %1694 = vmatprep.mubr.f32.mxu0 0.0
      %1695 = vmatmul.mubr.f32.gmra.mrb[0].mxu0 %v1598
      %v1696 = vpop.f32.mrb[0].mxu0
      %v1697 = vadd.f32 %v1558, %v1696
      %v1698 = vpop.f32.mrb[0].mxu0
      %1699 = vmatprep.mubr.f32.mxu0 0.0
      %1700 = vmatmul.mubr.f32.gmra.mrb[0].mxu0 %v1600
      %v1701 = vpop.f32.mrb[0].mxu0
      %v1702 = vadd.f32 %v1559, %v1701
      %v1703 = vpop.f32.mrb[0].mxu0
      %1704 = vmatprep.mubr.f32.mxu0 0.0
      %1705 = vmatmul.mubr.f32.gmra.mrb[0].mxu0 %v1602
      %v1706 = vpop.f32.mrb[0].mxu0
      %v1707 = vadd.f32 %v1560, %v1706
      %v1708 = vpop.f32.mrb[0].mxu0
      %1709 = vmatprep.mubr.f32.mxu0 0.0
      %1710 = vmatmul.mubr.f32.gmra.mrb[0].mxu0 %v1604
      %v1711 = vpop.f32.mrb[0].mxu0
      %v1712 = vadd.f32 %v1561, %v1711
      %v1713 = vpop.f32.mrb[0].mxu0
      %1714 = vmatprep.mubr.f32.mxu0 0.0
      %1715 = vmatmul.mubr.f32.gmra.mrb[0].mxu0 %v1606
      %v1716 = vpop.f32.mrb[0].mxu0
      %v1717 = vadd.f32 %v1562, %v1716
      %v1718 = vpop.f32.mrb[0].mxu0
      %1719 = vmatprep.mubr.f32.mxu0 0.0
      %1720 = vmatmul.mubr.f32.gmra.mrb[0].mxu0 %v1608
      %v1721 = vpop.f32.mrb[0].mxu0
      %v1722 = vadd.f32 %v1563, %v1721
      %v1723 = vpop.f32.mrb[0].mxu0
      %1724 = vmatprep.mubr.f32.mxu0 0.0
      %1725 = vmatmul.mubr.f32.gmra.mrb[0].mxu0 %v1610
      %v1726 = vpop.f32.mrb[0].mxu0
      %v1727 = vadd.f32 %v1564, %v1726
      %v1728 = vpop.f32.mrb[0].mxu0
      %1729 = vmatprep.mubr.f32.mxu0 0.0
      %1730 = vmatmul.mubr.f32.gmra.mrb[0].mxu0 %v1612
      %v1731 = vpop.f32.mrb[0].mxu0
      %v1732 = vadd.f32 %v1565, %v1731
      %v1733 = vpop.f32.mrb[0].mxu0
      %1734 = vdwg.mxu0
      %v1735 = vsel %vm896, %v1697, -inf
      %1736 = vmax.xlane.f32.xlu0 %v1735
      %v1737 = vpop.xlane.xlu0 %1736
      %v1738 = vsel %vm896, %v1702, -inf
      %1739 = vmax.xlane.f32.xlu0 %v1738
      %v1740 = vpop.xlane.xlu0 %1739
      %v1741 = vsel %vm896, %v1707, -inf
      %1742 = vmax.xlane.f32.xlu0 %v1741
      %v1743 = vpop.xlane.xlu0 %1742
      %v1744 = vsel %vm896, %v1712, -inf
      %1745 = vmax.xlane.f32.xlu0 %v1744
      %v1746 = vpop.xlane.xlu0 %1745
      %v1747 = vsel %vm896, %v1717, -inf
      %1748 = vmax.xlane.f32.xlu0 %v1747
      %v1749 = vpop.xlane.xlu0 %1748
      %v1750 = vsel %vm896, %v1722, -inf
      %1751 = vmax.xlane.f32.xlu0 %v1750
      %v1752 = vpop.xlane.xlu0 %1751
      %v1753 = vsel %vm896, %v1727, -inf
      %1754 = vmax.xlane.f32.xlu0 %v1753
      %v1755 = vpop.xlane.xlu0 %1754
      %v1756 = vsel %vm896, %v1732, -inf
      %1757 = vmax.xlane.f32.xlu0 %v1756
      %v1758 = vpop.xlane.xlu0 %1757
      %v1759 = vsub.f32 %v1697, %v1737
      %v1760 = vsub.f32 %v1702, %v1740
      %v1761 = vsub.f32 %v1707, %v1743
      %v1762 = vsub.f32 %v1712, %v1746
      %v1763 = vsub.f32 %v1717, %v1749
      %v1764 = vsub.f32 %v1722, %v1752
      %v1765 = vsub.f32 %v1727, %v1755
      %v1766 = vsub.f32 %v1732, %v1758
      %v1767 = vmul.f32 %v1759, 1.442695
      %v1768 = vpow.pop %v1767
      %v1769 = vmul.f32 %v1760, 1.442695
      %v1770 = vpow.pop %v1769
      %v1771 = vmul.f32 %v1761, 1.442695
      %v1772 = vpow.pop %v1771
      %v1773 = vmul.f32 %v1762, 1.442695
      %v1774 = vpow.pop %v1773
      %v1775 = vmul.f32 %v1763, 1.442695
      %v1776 = vpow.pop %v1775
      %v1777 = vmul.f32 %v1764, 1.442695
      %v1778 = vpow.pop %v1777
      %v1779 = vmul.f32 %v1765, 1.442695
      %v1780 = vpow.pop %v1779
      %v1781 = vmul.f32 %v1766, 1.442695
      %v1782 = vpow.pop %v1781
      %v1783 = vsel %vm896, %v1768, 0.0
      %1784 = vadd.xlane.f32.xlu0 %v1783
      %v1785 = vpop.xlane.xlu0 %1784
      %v1786 = vsel %vm896, %v1770, 0.0
      %1787 = vadd.xlane.f32.xlu0 %v1786
      %v1788 = vpop.xlane.xlu0 %1787
      %v1789 = vsel %vm896, %v1772, 0.0
      %1790 = vadd.xlane.f32.xlu0 %v1789
      %v1791 = vpop.xlane.xlu0 %1790
      %v1792 = vsel %vm896, %v1774, 0.0
      %1793 = vadd.xlane.f32.xlu0 %v1792
      %v1794 = vpop.xlane.xlu0 %1793
      %v1795 = vsel %vm896, %v1776, 0.0
      %1796 = vadd.xlane.f32.xlu0 %v1795
      %v1797 = vpop.xlane.xlu0 %1796
      %v1798 = vsel %vm896, %v1778, 0.0
      %1799 = vadd.xlane.f32.xlu0 %v1798
      %v1800 = vpop.xlane.xlu0 %1799
      %v1801 = vsel %vm896, %v1780, 0.0
      %1802 = vadd.xlane.f32.xlu0 %v1801
      %v1803 = vpop.xlane.xlu0 %1802
      %v1804 = vsel %vm896, %v1782, 0.0
      %1805 = vadd.xlane.f32.xlu0 %v1804
      %v1806 = vpop.xlane.xlu0 %1805
      %v1807 = vrcp.pop %v1785
      %v1808 = vrcp.pop %v1788
      %v1809 = vrcp.pop %v1791
      %v1810 = vrcp.pop %v1794
      %v1811 = vrcp.pop %v1797
      %v1812 = vrcp.pop %v1800
      %v1813 = vrcp.pop %v1803
      %v1814 = vrcp.pop %v1806
      %v1815 = vmul.f32 %v1768, %v1807
      %v1816 = vmul.f32 %v1770, %v1808
      %v1817 = vmul.f32 %v1772, %v1809
      %v1818 = vmul.f32 %v1774, %v1810
      %v1819 = vmul.f32 %v1776, %v1811
      %v1820 = vmul.f32 %v1778, %v1812
      %v1821 = vmul.f32 %v1780, %v1813
      %v1822 = vmul.f32 %v1782, %v1814
      %1823 = vrot.lane.b32.xlu0 %v680, 48
      %v1824 = vpop.permute.xlu0 %1823
      %1825 = vrot.lane.b32.xlu0 %v683, 48
      %v1826 = vpop.permute.xlu0 %1825
      %1827 = vrot.lane.b32.xlu0 %v688, 48
      %v1828 = vpop.permute.xlu0 %1827
      %1829 = vrot.lane.b32.xlu0 %v691, 48
      %v1830 = vpop.permute.xlu0 %1829
      %1831 = vrot.lane.b32.xlu0 %v696, 48
      %v1832 = vpop.permute.xlu0 %1831
      %1833 = vrot.lane.b32.xlu0 %v699, 48
      %v1834 = vpop.permute.xlu0 %1833
      %1835 = vrot.lane.b32.xlu0 %v704, 48
      %v1836 = vpop.permute.xlu0 %1835
      %1837 = vrot.lane.b32.xlu0 %v707, 48
      %v1838 = vpop.permute.xlu0 %1837
      %v1848 = vsel %vm896, %v1815, 0
      %v1851 = vsel %vm896, %v1816, 0
      %v1854 = vsel %vm896, %v1817, 0
      %v1857 = vsel %vm896, %v1818, 0
      %v1860 = vsel %vm896, %v1819, 0
      %v1863 = vsel %vm896, %v1820, 0
      %v1866 = vsel %vm896, %v1821, 0
      %v1869 = vsel %vm896, %v1822, 0
      %1871 = vmatprep.subr.mxu0 0.0
      %1872 = vmatpush1.msra.mxu0 %v1824
      %1873 = vmatprep.subr.mxu0 0.0
      %1874 = vmatpush1.msra.mxu0 %v1826
      %1875 = vmatprep.subr.mxu0 0.0
      %1876 = vmatpush1.msra.mxu0 %v1828
      %1877 = vmatprep.subr.mxu0 0.0
      %1878 = vmatpush1.msra.mxu0 %v1830
      %1879 = vmatprep.subr.mxu0 0.0
      %1880 = vmatpush1.msra.mxu0 %v1832
      %1881 = vmatprep.subr.mxu0 0.0
      %1882 = vmatpush1.msra.mxu0 %v1834
      %1883 = vmatprep.subr.mxu0 0.0
      %1884 = vmatpush1.msra.mxu0 %v1836
      %1885 = vmatprep.subr.mxu0 0.0
      %1886 = vmatpush1.msra.mxu0 %v1838
      %1887 = vmatprep.subr.mxu0 0.0
      %1888 = vmatpush1.msra.mxu0 0.0
      %1889 = vmatprep.subr.mxu0 0.0
      %1890 = vmatpush1.msra.mxu0 0.0
      %1891 = vmatprep.subr.mxu0 0.0
      %1892 = vmatpush1.msra.mxu0 0.0
      %1893 = vmatprep.subr.mxu0 0.0
      %1894 = vmatpush1.msra.mxu0 0.0
      %1895 = vmatprep.subr.mxu0 0.0
      %1896 = vmatpush1.msra.mxu0 0.0
      %1897 = vmatprep.subr.mxu0 0.0
      %1898 = vmatpush1.msra.mxu0 0.0
      %1899 = vmatprep.subr.mxu0 0.0
      %1900 = vmatpush1.msra.mxu0 0.0
      %1901 = vmatprep.subr.mxu0 0.0
      %1902 = vmatpush1.msra.mxu0 0.0
      %1903 = vmatprep.subr.mxu0 0.0
      %1904 = vmatpush1.msra.mxu0 0.0
      %1905 = vmatprep.subr.mxu0 0.0
      %1906 = vmatpush1.msra.mxu0 0.0
      %1907 = vmatprep.subr.mxu0 0.0
      %1908 = vmatpush1.msra.mxu0 0.0
      %1909 = vmatprep.subr.mxu0 0.0
      %1910 = vmatpush1.msra.mxu0 0.0
      %1911 = vmatprep.subr.mxu0 0.0
      %1912 = vmatpush1.msra.mxu0 0.0
      %1913 = vmatprep.subr.mxu0 0.0
      %1914 = vmatpush1.msra.mxu0 0.0
      %1915 = vmatprep.subr.mxu0 0.0
      %1916 = vmatpush1.msra.mxu0 0.0
      %1917 = vmatprep.subr.mxu0 0.0
      %1918 = vmatpush1.msra.mxu0 0.0
      %1919 = vmatprep.subr.mxu0 0.0
      %1920 = vmatpush1.msra.mxu0 0.0
      %1921 = vmatprep.subr.mxu0 0.0
      %1922 = vmatpush1.msra.mxu0 0.0
      %1923 = vmatprep.subr.mxu0 0.0
      %1924 = vmatpush1.msra.mxu0 0.0
      %1925 = vmatprep.subr.mxu0 0.0
      %1926 = vmatpush1.msra.mxu0 0.0
      %1927 = vmatprep.subr.mxu0 0.0
      %1928 = vmatpush1.msra.mxu0 0.0
      %1929 = vmatprep.subr.mxu0 0.0
      %1930 = vmatpush1.msra.mxu0 0.0
      %1931 = vmatprep.subr.mxu0 0.0
      %1932 = vmatpush1.msra.mxu0 0.0
      %1933 = vmatprep.subr.mxu0 0.0
      %1934 = vmatpush1.msra.mxu0 0.0
      %1935 = vmatprep.mubr.f32.mxu0 0.0
      %1936 = vmatmul.mubr.f32.gmra.mrb[0].mxu0 %v1848
      %v1937 = vpop.f32.mrb[0].mxu0
      %v1938 = vadd.f32 0.0, %v1937
      %v1939 = vpop.f32.mrb[0].mxu0
      %1940 = vmatprep.mubr.f32.mxu0 0.0
      %1941 = vmatmul.mubr.f32.gmra.mrb[0].mxu0 %v1851
      %v1942 = vpop.f32.mrb[0].mxu0
      %v1943 = vadd.f32 0.0, %v1942
      %v1944 = vpop.f32.mrb[0].mxu0
      %1945 = vmatprep.mubr.f32.mxu0 0.0
      %1946 = vmatmul.mubr.f32.gmra.mrb[0].mxu0 %v1854
      %v1947 = vpop.f32.mrb[0].mxu0
      %v1948 = vadd.f32 0.0, %v1947
      %v1949 = vpop.f32.mrb[0].mxu0
      %1950 = vmatprep.mubr.f32.mxu0 0.0
      %1951 = vmatmul.mubr.f32.gmra.mrb[0].mxu0 %v1857
      %v1952 = vpop.f32.mrb[0].mxu0
      %v1953 = vadd.f32 0.0, %v1952
      %v1954 = vpop.f32.mrb[0].mxu0
      %1955 = vmatprep.mubr.f32.mxu0 0.0
      %1956 = vmatmul.mubr.f32.gmra.mrb[0].mxu0 %v1860
      %v1957 = vpop.f32.mrb[0].mxu0
      %v1958 = vadd.f32 0.0, %v1957
      %v1959 = vpop.f32.mrb[0].mxu0
      %1960 = vmatprep.mubr.f32.mxu0 0.0
      %1961 = vmatmul.mubr.f32.gmra.mrb[0].mxu0 %v1863
      %v1962 = vpop.f32.mrb[0].mxu0
      %v1963 = vadd.f32 0.0, %v1962
      %v1964 = vpop.f32.mrb[0].mxu0
      %1965 = vmatprep.mubr.f32.mxu0 0.0
      %1966 = vmatmul.mubr.f32.gmra.mrb[0].mxu0 %v1866
      %v1967 = vpop.f32.mrb[0].mxu0
      %v1968 = vadd.f32 0.0, %v1967
      %v1969 = vpop.f32.mrb[0].mxu0
      %1970 = vmatprep.mubr.f32.mxu0 0.0
      %1971 = vmatmul.mubr.f32.gmra.mrb[0].mxu0 %v1869
      %v1972 = vpop.f32.mrb[0].mxu0
      %v1973 = vadd.f32 0.0, %v1972
      %v1974 = vpop.f32.mrb[0].mxu0
      %1975 = vdwg.mxu0
      %s1976 = scalar_lea.vmem %s7, 192
      %v1977 = vld [vmem:[%s1976] sm:$0xff]
      %v1978 = vld [vmem:[%s1976 + $0x8] sm:$0xff]
      %v1979 = vld [vmem:[%s1976 + $0x10] sm:$0xff]
      %v1980 = vld [vmem:[%s1976 + $0x18] sm:$0xff]
      %v1981 = vld [vmem:[%s1976 + $0x20] sm:$0xff]
      %v1982 = vld [vmem:[%s1976 + $0x28] sm:$0xff]
      %v1983 = vld [vmem:[%s1976 + $0x30] sm:$0xff]
      %v1984 = vld [vmem:[%s1976 + $0x38] sm:$0xff]
      %1985 = vrot.lane.b32.xlu0 %v710, 104
      %v1986 = vpop.permute.xlu0 %1985
      %1987 = vrot.lane.b32.xlu0 %v711, 104
      %v1988 = vpop.permute.xlu0 %1987
      %1989 = vrot.lane.b32.xlu0 %v712, 104
      %v1990 = vpop.permute.xlu0 %1989
      %1991 = vrot.lane.b32.xlu0 %v713, 104
      %v1992 = vpop.permute.xlu0 %1991
      %1993 = vrot.lane.b32.xlu0 %v714, 104
      %v1994 = vpop.permute.xlu0 %1993
      %1995 = vrot.lane.b32.xlu0 %v715, 104
      %v1996 = vpop.permute.xlu0 %1995
      %1997 = vrot.lane.b32.xlu0 %v716, 104
      %v1998 = vpop.permute.xlu0 %1997
      %1999 = vrot.lane.b32.xlu0 %v717, 104
      %v2000 = vpop.permute.xlu0 %1999
      %2001 = vrot.lane.b32.xlu0 %v680, 72
      %v2002 = vpop.permute.xlu0 %2001
      %2003 = vrot.lane.b32.xlu0 %v683, 72
      %v2004 = vpop.permute.xlu0 %2003
      %2005 = vrot.lane.b32.xlu0 %v688, 72
      %v2006 = vpop.permute.xlu0 %2005
      %2007 = vrot.lane.b32.xlu0 %v691, 72
      %v2008 = vpop.permute.xlu0 %2007
      %2009 = vrot.lane.b32.xlu0 %v696, 72
      %v2010 = vpop.permute.xlu0 %2009
      %2011 = vrot.lane.b32.xlu0 %v699, 72
      %v2012 = vpop.permute.xlu0 %2011
      %2013 = vrot.lane.b32.xlu0 %v704, 72
      %v2014 = vpop.permute.xlu0 %2013
      %2015 = vrot.lane.b32.xlu0 %v707, 72
      %v2016 = vpop.permute.xlu0 %2015
      %v2017 = vsel %vm750, %v1986, 0
      %v2019 = vsel %vm750, %v1988, 0
      %v2021 = vsel %vm750, %v1990, 0
      %v2023 = vsel %vm750, %v1992, 0
      %v2025 = vsel %vm750, %v1994, 0
      %v2027 = vsel %vm750, %v1996, 0
      %v2029 = vsel %vm750, %v1998, 0
      %v2031 = vsel %vm750, %v2000, 0
      %v2033 = vsel %vm750, %v2002, 0
      %v2035 = vsel %vm750, %v2004, 0
      %v2037 = vsel %vm750, %v2006, 0
      %v2039 = vsel %vm750, %v2008, 0
      %v2041 = vsel %vm750, %v2010, 0
      %v2043 = vsel %vm750, %v2012, 0
      %v2045 = vsel %vm750, %v2014, 0
      %v2047 = vsel %vm750, %v2016, 0
      %2049 = vmatprep.subr.mxu0 0.0
      %2050 = vmatpush1.xpose.msra.mxu0 %v2033
      %2051 = vmatprep.subr.mxu0 0.0
      %2052 = vmatpush1.xpose.msra.mxu0 %v2035
      %2053 = vmatprep.subr.mxu0 0.0
      %2054 = vmatpush1.xpose.msra.mxu0 %v2037
      %2055 = vmatprep.subr.mxu0 0.0
      %2056 = vmatpush1.xpose.msra.mxu0 %v2039
      %2057 = vmatprep.subr.mxu0 0.0
      %2058 = vmatpush1.xpose.msra.mxu0 %v2041
      %2059 = vmatprep.subr.mxu0 0.0
      %2060 = vmatpush1.xpose.msra.mxu0 %v2043
      %2061 = vmatprep.subr.mxu0 0.0
      %2062 = vmatpush1.xpose.msra.mxu0 %v2045
      %2063 = vmatprep.subr.mxu0 0.0
      %2064 = vmatpush1.xpose.msra.mxu0 %v2047
      %2065 = vmatprep.subr.mxu0 0.0
      %2066 = vmatpush1.xpose.msra.mxu0 0.0
      %2067 = vmatprep.subr.mxu0 0.0
      %2068 = vmatpush1.xpose.msra.mxu0 0.0
      %2069 = vmatprep.subr.mxu0 0.0
      %2070 = vmatpush1.xpose.msra.mxu0 0.0
      %2071 = vmatprep.subr.mxu0 0.0
      %2072 = vmatpush1.xpose.msra.mxu0 0.0
      %2073 = vmatprep.subr.mxu0 0.0
      %2074 = vmatpush1.xpose.msra.mxu0 0.0
      %2075 = vmatprep.subr.mxu0 0.0
      %2076 = vmatpush1.xpose.msra.mxu0 0.0
      %2077 = vmatprep.subr.mxu0 0.0
      %2078 = vmatpush1.xpose.msra.mxu0 0.0
      %2079 = vmatprep.subr.mxu0 0.0
      %2080 = vmatpush1.xpose.msra.mxu0 0.0
      %2081 = vmatprep.subr.mxu0 0.0
      %2082 = vmatpush1.xpose.msra.mxu0 0.0
      %2083 = vmatprep.subr.mxu0 0.0
      %2084 = vmatpush1.xpose.msra.mxu0 0.0
      %2085 = vmatprep.subr.mxu0 0.0
      %2086 = vmatpush1.xpose.msra.mxu0 0.0
      %2087 = vmatprep.subr.mxu0 0.0
      %2088 = vmatpush1.xpose.msra.mxu0 0.0
      %2089 = vmatprep.subr.mxu0 0.0
      %2090 = vmatpush1.xpose.msra.mxu0 0.0
      %2091 = vmatprep.subr.mxu0 0.0
      %2092 = vmatpush1.xpose.msra.mxu0 0.0
      %2093 = vmatprep.subr.mxu0 0.0
      %2094 = vmatpush1.xpose.msra.mxu0 0.0
      %2095 = vmatprep.subr.mxu0 0.0
      %2096 = vmatpush1.xpose.msra.mxu0 0.0
      %2097 = vmatprep.subr.mxu0 0.0
      %2098 = vmatpush1.xpose.msra.mxu0 0.0
      %2099 = vmatprep.subr.mxu0 0.0
      %2100 = vmatpush1.xpose.msra.mxu0 0.0
      %2101 = vmatprep.subr.mxu0 0.0
      %2102 = vmatpush1.xpose.msra.mxu0 0.0
      %2103 = vmatprep.subr.mxu0 0.0
      %2104 = vmatpush1.xpose.msra.mxu0 0.0
      %2105 = vmatprep.subr.mxu0 0.0
      %2106 = vmatpush1.xpose.msra.mxu0 0.0
      %2107 = vmatprep.subr.mxu0 0.0
      %2108 = vmatpush1.xpose.msra.mxu0 0.0
      %2109 = vmatprep.subr.mxu0 0.0
      %2110 = vmatpush1.xpose.msra.mxu0 0.0
      %2111 = vmatprep.subr.mxu0 0.0
      %2112 = vmatpush1.xpose.msra.mxu0 0.0
      %2113 = vmatprep.mubr.f32.mxu0 0.0
      %2114 = vmatmul.mubr.f32.gmra.mrb[0].mxu0 %v2017
      %v2115 = vpop.f32.mrb[0].mxu0
      %v2116 = vadd.f32 %v1977, %v2115
      %v2117 = vpop.f32.mrb[0].mxu0
      %2118 = vmatprep.mubr.f32.mxu0 0.0
      %2119 = vmatmul.mubr.f32.gmra.mrb[0].mxu0 %v2019
      %v2120 = vpop.f32.mrb[0].mxu0
      %v2121 = vadd.f32 %v1978, %v2120
      %v2122 = vpop.f32.mrb[0].mxu0
      %2123 = vmatprep.mubr.f32.mxu0 0.0
      %2124 = vmatmul.mubr.f32.gmra.mrb[0].mxu0 %v2021
      %v2125 = vpop.f32.mrb[0].mxu0
      %v2126 = vadd.f32 %v1979, %v2125
      %v2127 = vpop.f32.mrb[0].mxu0
      %2128 = vmatprep.mubr.f32.mxu0 0.0
      %2129 = vmatmul.mubr.f32.gmra.mrb[0].mxu0 %v2023
      %v2130 = vpop.f32.mrb[0].mxu0
      %v2131 = vadd.f32 %v1980, %v2130
      %v2132 = vpop.f32.mrb[0].mxu0
      %2133 = vmatprep.mubr.f32.mxu0 0.0
      %2134 = vmatmul.mubr.f32.gmra.mrb[0].mxu0 %v2025
      %v2135 = vpop.f32.mrb[0].mxu0
      %v2136 = vadd.f32 %v1981, %v2135
      %v2137 = vpop.f32.mrb[0].mxu0
      %2138 = vmatprep.mubr.f32.mxu0 0.0
      %2139 = vmatmul.mubr.f32.gmra.mrb[0].mxu0 %v2027
      %v2140 = vpop.f32.mrb[0].mxu0
      %v2141 = vadd.f32 %v1982, %v2140
      %v2142 = vpop.f32.mrb[0].mxu0
      %2143 = vmatprep.mubr.f32.mxu0 0.0
      %2144 = vmatmul.mubr.f32.gmra.mrb[0].mxu0 %v2029
      %v2145 = vpop.f32.mrb[0].mxu0
      %v2146 = vadd.f32 %v1983, %v2145
      %v2147 = vpop.f32.mrb[0].mxu0
      %2148 = vmatprep.mubr.f32.mxu0 0.0
      %2149 = vmatmul.mubr.f32.gmra.mrb[0].mxu0 %v2031
      %v2150 = vpop.f32.mrb[0].mxu0
      %v2151 = vadd.f32 %v1984, %v2150
      %v2152 = vpop.f32.mrb[0].mxu0
      %2153 = vdwg.mxu0
      %v2154 = vsel %vm896, %v2116, -inf
      %2155 = vmax.xlane.f32.xlu0 %v2154
      %v2156 = vpop.xlane.xlu0 %2155
      %v2157 = vsel %vm896, %v2121, -inf
      %2158 = vmax.xlane.f32.xlu0 %v2157
      %v2159 = vpop.xlane.xlu0 %2158
      %v2160 = vsel %vm896, %v2126, -inf
      %2161 = vmax.xlane.f32.xlu0 %v2160
      %v2162 = vpop.xlane.xlu0 %2161
      %v2163 = vsel %vm896, %v2131, -inf
      %2164 = vmax.xlane.f32.xlu0 %v2163
      %v2165 = vpop.xlane.xlu0 %2164
      %v2166 = vsel %vm896, %v2136, -inf
      %2167 = vmax.xlane.f32.xlu0 %v2166
      %v2168 = vpop.xlane.xlu0 %2167
      %v2169 = vsel %vm896, %v2141, -inf
      %2170 = vmax.xlane.f32.xlu0 %v2169
      %v2171 = vpop.xlane.xlu0 %2170
      %v2172 = vsel %vm896, %v2146, -inf
      %2173 = vmax.xlane.f32.xlu0 %v2172
      %v2174 = vpop.xlane.xlu0 %2173
      %v2175 = vsel %vm896, %v2151, -inf
      %2176 = vmax.xlane.f32.xlu0 %v2175
      %v2177 = vpop.xlane.xlu0 %2176
      %v2178 = vsub.f32 %v2116, %v2156
      %v2179 = vsub.f32 %v2121, %v2159
      %v2180 = vsub.f32 %v2126, %v2162
      %v2181 = vsub.f32 %v2131, %v2165
      %v2182 = vsub.f32 %v2136, %v2168
      %v2183 = vsub.f32 %v2141, %v2171
      %v2184 = vsub.f32 %v2146, %v2174
      %v2185 = vsub.f32 %v2151, %v2177
      %v2186 = vmul.f32 %v2178, 1.442695
      %v2187 = vpow.pop %v2186
      %v2188 = vmul.f32 %v2179, 1.442695
      %v2189 = vpow.pop %v2188
      %v2190 = vmul.f32 %v2180, 1.442695
      %v2191 = vpow.pop %v2190
      %v2192 = vmul.f32 %v2181, 1.442695
      %v2193 = vpow.pop %v2192
      %v2194 = vmul.f32 %v2182, 1.442695
      %v2195 = vpow.pop %v2194
      %v2196 = vmul.f32 %v2183, 1.442695
      %v2197 = vpow.pop %v2196
      %v2198 = vmul.f32 %v2184, 1.442695
      %v2199 = vpow.pop %v2198
      %v2200 = vmul.f32 %v2185, 1.442695
      %v2201 = vpow.pop %v2200
      %v2202 = vsel %vm896, %v2187, 0.0
      %2203 = vadd.xlane.f32.xlu0 %v2202
      %v2204 = vpop.xlane.xlu0 %2203
      %v2205 = vsel %vm896, %v2189, 0.0
      %2206 = vadd.xlane.f32.xlu0 %v2205
      %v2207 = vpop.xlane.xlu0 %2206
      %v2208 = vsel %vm896, %v2191, 0.0
      %2209 = vadd.xlane.f32.xlu0 %v2208
      %v2210 = vpop.xlane.xlu0 %2209
      %v2211 = vsel %vm896, %v2193, 0.0
      %2212 = vadd.xlane.f32.xlu0 %v2211
      %v2213 = vpop.xlane.xlu0 %2212
      %v2214 = vsel %vm896, %v2195, 0.0
      %2215 = vadd.xlane.f32.xlu0 %v2214
      %v2216 = vpop.xlane.xlu0 %2215
      %v2217 = vsel %vm896, %v2197, 0.0
      %2218 = vadd.xlane.f32.xlu0 %v2217
      %v2219 = vpop.xlane.xlu0 %2218
      %v2220 = vsel %vm896, %v2199, 0.0
      %2221 = vadd.xlane.f32.xlu0 %v2220
      %v2222 = vpop.xlane.xlu0 %2221
      %v2223 = vsel %vm896, %v2201, 0.0
      %2224 = vadd.xlane.f32.xlu0 %v2223
      %v2225 = vpop.xlane.xlu0 %2224
      %v2226 = vrcp.pop %v2204
      %v2227 = vrcp.pop %v2207
      %v2228 = vrcp.pop %v2210
      %v2229 = vrcp.pop %v2213
      %v2230 = vrcp.pop %v2216
      %v2231 = vrcp.pop %v2219
      %v2232 = vrcp.pop %v2222
      %v2233 = vrcp.pop %v2225
      %v2234 = vmul.f32 %v2187, %v2226
      %v2235 = vmul.f32 %v2189, %v2227
      %v2236 = vmul.f32 %v2191, %v2228
      %v2237 = vmul.f32 %v2193, %v2229
      %v2238 = vmul.f32 %v2195, %v2230
      %v2239 = vmul.f32 %v2197, %v2231
      %v2240 = vmul.f32 %v2199, %v2232
      %v2241 = vmul.f32 %v2201, %v2233
      %2242 = vrot.lane.b32.xlu0 %v680, 40
      %v2243 = vpop.permute.xlu0 %2242
      %2244 = vrot.lane.b32.xlu0 %v683, 40
      %v2245 = vpop.permute.xlu0 %2244
      %2246 = vrot.lane.b32.xlu0 %v688, 40
      %v2247 = vpop.permute.xlu0 %2246
      %2248 = vrot.lane.b32.xlu0 %v691, 40
      %v2249 = vpop.permute.xlu0 %2248
      %2250 = vrot.lane.b32.xlu0 %v696, 40
      %v2251 = vpop.permute.xlu0 %2250
      %2252 = vrot.lane.b32.xlu0 %v699, 40
      %v2253 = vpop.permute.xlu0 %2252
      %2254 = vrot.lane.b32.xlu0 %v704, 40
      %v2255 = vpop.permute.xlu0 %2254
      %2256 = vrot.lane.b32.xlu0 %v707, 40
      %v2257 = vpop.permute.xlu0 %2256
      %v2267 = vsel %vm896, %v2234, 0
      %v2270 = vsel %vm896, %v2235, 0
      %v2273 = vsel %vm896, %v2236, 0
      %v2276 = vsel %vm896, %v2237, 0
      %v2279 = vsel %vm896, %v2238, 0
      %v2282 = vsel %vm896, %v2239, 0
      %v2285 = vsel %vm896, %v2240, 0
      %v2288 = vsel %vm896, %v2241, 0
      %2290 = vmatprep.subr.mxu0 0.0
      %2291 = vmatpush1.msra.mxu0 %v2243
      %2292 = vmatprep.subr.mxu0 0.0
      %2293 = vmatpush1.msra.mxu0 %v2245
      %2294 = vmatprep.subr.mxu0 0.0
      %2295 = vmatpush1.msra.mxu0 %v2247
      %2296 = vmatprep.subr.mxu0 0.0
      %2297 = vmatpush1.msra.mxu0 %v2249
      %2298 = vmatprep.subr.mxu0 0.0
      %2299 = vmatpush1.msra.mxu0 %v2251
      %2300 = vmatprep.subr.mxu0 0.0
      %2301 = vmatpush1.msra.mxu0 %v2253
      %2302 = vmatprep.subr.mxu0 0.0
      %2303 = vmatpush1.msra.mxu0 %v2255
      %2304 = vmatprep.subr.mxu0 0.0
      %2305 = vmatpush1.msra.mxu0 %v2257
      %2306 = vmatprep.subr.mxu0 0.0
      %2307 = vmatpush1.msra.mxu0 0.0
      %2308 = vmatprep.subr.mxu0 0.0
      %2309 = vmatpush1.msra.mxu0 0.0
      %2310 = vmatprep.subr.mxu0 0.0
      %2311 = vmatpush1.msra.mxu0 0.0
      %2312 = vmatprep.subr.mxu0 0.0
      %2313 = vmatpush1.msra.mxu0 0.0
      %2314 = vmatprep.subr.mxu0 0.0
      %2315 = vmatpush1.msra.mxu0 0.0
      %2316 = vmatprep.subr.mxu0 0.0
      %2317 = vmatpush1.msra.mxu0 0.0
      %2318 = vmatprep.subr.mxu0 0.0
      %2319 = vmatpush1.msra.mxu0 0.0
      %2320 = vmatprep.subr.mxu0 0.0
      %2321 = vmatpush1.msra.mxu0 0.0
      %2322 = vmatprep.subr.mxu0 0.0
      %2323 = vmatpush1.msra.mxu0 0.0
      %2324 = vmatprep.subr.mxu0 0.0
      %2325 = vmatpush1.msra.mxu0 0.0
      %2326 = vmatprep.subr.mxu0 0.0
      %2327 = vmatpush1.msra.mxu0 0.0
      %2328 = vmatprep.subr.mxu0 0.0
      %2329 = vmatpush1.msra.mxu0 0.0
      %2330 = vmatprep.subr.mxu0 0.0
      %2331 = vmatpush1.msra.mxu0 0.0
      %2332 = vmatprep.subr.mxu0 0.0
      %2333 = vmatpush1.msra.mxu0 0.0
      %2334 = vmatprep.subr.mxu0 0.0
      %2335 = vmatpush1.msra.mxu0 0.0
      %2336 = vmatprep.subr.mxu0 0.0
      %2337 = vmatpush1.msra.mxu0 0.0
      %2338 = vmatprep.subr.mxu0 0.0
      %2339 = vmatpush1.msra.mxu0 0.0
      %2340 = vmatprep.subr.mxu0 0.0
      %2341 = vmatpush1.msra.mxu0 0.0
      %2342 = vmatprep.subr.mxu0 0.0
      %2343 = vmatpush1.msra.mxu0 0.0
      %2344 = vmatprep.subr.mxu0 0.0
      %2345 = vmatpush1.msra.mxu0 0.0
      %2346 = vmatprep.subr.mxu0 0.0
      %2347 = vmatpush1.msra.mxu0 0.0
      %2348 = vmatprep.subr.mxu0 0.0
      %2349 = vmatpush1.msra.mxu0 0.0
      %2350 = vmatprep.subr.mxu0 0.0
      %2351 = vmatpush1.msra.mxu0 0.0
      %2352 = vmatprep.subr.mxu0 0.0
      %2353 = vmatpush1.msra.mxu0 0.0
      %2354 = vmatprep.mubr.f32.mxu0 0.0
      %2355 = vmatmul.mubr.f32.gmra.mrb[0].mxu0 %v2267
      %v2356 = vpop.f32.mrb[0].mxu0
      %v2357 = vadd.f32 0.0, %v2356
      %v2358 = vpop.f32.mrb[0].mxu0
      %2359 = vmatprep.mubr.f32.mxu0 0.0
      %2360 = vmatmul.mubr.f32.gmra.mrb[0].mxu0 %v2270
      %v2361 = vpop.f32.mrb[0].mxu0
      %v2362 = vadd.f32 0.0, %v2361
      %v2363 = vpop.f32.mrb[0].mxu0
      %2364 = vmatprep.mubr.f32.mxu0 0.0
      %2365 = vmatmul.mubr.f32.gmra.mrb[0].mxu0 %v2273
      %v2366 = vpop.f32.mrb[0].mxu0
      %v2367 = vadd.f32 0.0, %v2366
      %v2368 = vpop.f32.mrb[0].mxu0
      %2369 = vmatprep.mubr.f32.mxu0 0.0
      %2370 = vmatmul.mubr.f32.gmra.mrb[0].mxu0 %v2276
      %v2371 = vpop.f32.mrb[0].mxu0
      %v2372 = vadd.f32 0.0, %v2371
      %v2373 = vpop.f32.mrb[0].mxu0
      %2374 = vmatprep.mubr.f32.mxu0 0.0
      %2375 = vmatmul.mubr.f32.gmra.mrb[0].mxu0 %v2279
      %v2376 = vpop.f32.mrb[0].mxu0
      %v2377 = vadd.f32 0.0, %v2376
      %v2378 = vpop.f32.mrb[0].mxu0
      %2379 = vmatprep.mubr.f32.mxu0 0.0
      %2380 = vmatmul.mubr.f32.gmra.mrb[0].mxu0 %v2282
      %v2381 = vpop.f32.mrb[0].mxu0
      %v2382 = vadd.f32 0.0, %v2381
      %v2383 = vpop.f32.mrb[0].mxu0
      %2384 = vmatprep.mubr.f32.mxu0 0.0
      %2385 = vmatmul.mubr.f32.gmra.mrb[0].mxu0 %v2285
      %v2386 = vpop.f32.mrb[0].mxu0
      %v2387 = vadd.f32 0.0, %v2386
      %v2388 = vpop.f32.mrb[0].mxu0
      %2389 = vmatprep.mubr.f32.mxu0 0.0
      %2390 = vmatmul.mubr.f32.gmra.mrb[0].mxu0 %v2288
      %v2391 = vpop.f32.mrb[0].mxu0
      %v2392 = vadd.f32 0.0, %v2391
      %v2393 = vpop.f32.mrb[0].mxu0
      %2394 = vdwg.mxu0
      %2403 = vrot.lane.b32.xlu0 %v1519, 8
      %v2404 = vpop.permute.xlu0 %2403
      %2405 = vrot.lane.b32.xlu0 %v1524, 8
      %v2406 = vpop.permute.xlu0 %2405
      %2407 = vrot.lane.b32.xlu0 %v1529, 8
      %v2408 = vpop.permute.xlu0 %2407
      %2409 = vrot.lane.b32.xlu0 %v1534, 8
      %v2410 = vpop.permute.xlu0 %2409
      %2411 = vrot.lane.b32.xlu0 %v1539, 8
      %v2412 = vpop.permute.xlu0 %2411
      %2413 = vrot.lane.b32.xlu0 %v1544, 8
      %v2414 = vpop.permute.xlu0 %2413
      %2415 = vrot.lane.b32.xlu0 %v1549, 8
      %v2416 = vpop.permute.xlu0 %2415
      %2417 = vrot.lane.b32.xlu0 %v1554, 8
      %v2418 = vpop.permute.xlu0 %2417
      %2435 = vrot.lane.b32.xlu0 %v1938, 16
      %v2436 = vpop.permute.xlu0 %2435
      %2437 = vrot.lane.b32.xlu0 %v1943, 16
      %v2438 = vpop.permute.xlu0 %2437
      %2439 = vrot.lane.b32.xlu0 %v1948, 16
      %v2440 = vpop.permute.xlu0 %2439
      %2441 = vrot.lane.b32.xlu0 %v1953, 16
      %v2442 = vpop.permute.xlu0 %2441
      %2443 = vrot.lane.b32.xlu0 %v1958, 16
      %v2444 = vpop.permute.xlu0 %2443
      %2445 = vrot.lane.b32.xlu0 %v1963, 16
      %v2446 = vpop.permute.xlu0 %2445
      %2447 = vrot.lane.b32.xlu0 %v1968, 16
      %v2448 = vpop.permute.xlu0 %2447
      %2449 = vrot.lane.b32.xlu0 %v1973, 16
      %v2450 = vpop.permute.xlu0 %2449
      %2467 = vrot.lane.b32.xlu0 %v2357, 24
      %v2468 = vpop.permute.xlu0 %2467
      %2469 = vrot.lane.b32.xlu0 %v2362, 24
      %v2470 = vpop.permute.xlu0 %2469
      %2471 = vrot.lane.b32.xlu0 %v2367, 24
      %v2472 = vpop.permute.xlu0 %2471
      %2473 = vrot.lane.b32.xlu0 %v2372, 24
      %v2474 = vpop.permute.xlu0 %2473
      %2475 = vrot.lane.b32.xlu0 %v2377, 24
      %v2476 = vpop.permute.xlu0 %2475
      %2477 = vrot.lane.b32.xlu0 %v2382, 24
      %v2478 = vpop.permute.xlu0 %2477
      %2479 = vrot.lane.b32.xlu0 %v2387, 24
      %v2480 = vpop.permute.xlu0 %2479
      %2481 = vrot.lane.b32.xlu0 %v2392, 24
      %v2482 = vpop.permute.xlu0 %2481
      %v2491 = vsel %vm750, %v1100, %v2404
      %v2492 = vsel %vm750, %v1105, %v2406
      %v2493 = vsel %vm750, %v1110, %v2408
      %v2494 = vsel %vm750, %v1115, %v2410
      %v2495 = vsel %vm750, %v1120, %v2412
      %v2496 = vsel %vm750, %v1125, %v2414
      %v2497 = vsel %vm750, %v1130, %v2416
      %v2498 = vsel %vm750, %v1135, %v2418
      %vm2499 = vcmask 130048
      %v2500 = vsel %vm2499, %v2491, %v2436
      %v2501 = vsel %vm2499, %v2492, %v2438
      %v2502 = vsel %vm2499, %v2493, %v2440
      %v2503 = vsel %vm2499, %v2494, %v2442
      %v2504 = vsel %vm2499, %v2495, %v2444
      %v2505 = vsel %vm2499, %v2496, %v2446
      %v2506 = vsel %vm2499, %v2497, %v2448
      %v2507 = vsel %vm2499, %v2498, %v2450
      %vm2508 = vcmask 195584
      %v2509 = vsel %vm2508, %v2500, %v2468
      %v2510 = vsel %vm2508, %v2501, %v2470
      %v2511 = vsel %vm2508, %v2502, %v2472
      %v2512 = vsel %vm2508, %v2503, %v2474
      %v2513 = vsel %vm2508, %v2504, %v2476
      %v2514 = vsel %vm2508, %v2505, %v2478
      %v2515 = vsel %vm2508, %v2506, %v2480
      %v2516 = vsel %vm2508, %v2507, %v2482
      %v2517 = vld [vmem:[%s5] sm:$0xff]
      %v2518 = vld [vmem:[%s5 + $0x8] sm:$0xff]
      %v2519 = vld [vmem:[%s5 + $0x10] sm:$0xff]
      %v2520 = vld [vmem:[%s5 + $0x18] sm:$0xff]
      %v2521 = vld [vmem:[%s6] sm:$0x1]
      %v2522 = vpack.c.bf16 %v2510, %v2509
      %v2523 = vpack.c.bf16 %v2512, %v2511
      %v2524 = vpack.c.bf16 %v2514, %v2513
      %v2525 = vpack.c.bf16 %v2516, %v2515
      %v2526 = vpack.c.bf16 %v2518, %v2517
      %v2527 = vpack.c.bf16 %v2520, %v2519
      %v2529 = vlaneseq
      %v2530 = vshrl.u32 %v2529, 7
      %v2531 = vsub.s32 0, %v2530
      %v2532 = vrot.slane %v2521, %v2531
      %v2535 = vsel %vm482, %v2522, 0
      %v2538 = vsel %vm482, %v2523, 0
      %v2541 = vsel %vm482, %v2524, 0
      %v2544 = vsel %vm482, %v2525, 0
      %2546 = vmatprep.subr.bf16.mxu0 0
      %2547 = vmatpush1.bf16.msra.mxu0 %v2526
      %2548 = vmatprep.subr.bf16.mxu0 0
      %2549 = vmatpush1.bf16.msra.mxu0 %v2527
      %2550 = vmatprep.subr.bf16.mxu0 0
      %2551 = vmatpush1.bf16.msra.mxu0 0
      %2552 = vmatprep.subr.bf16.mxu0 0
      %2553 = vmatpush1.bf16.msra.mxu0 0
      %2554 = vmatprep.subr.bf16.mxu0 0
      %2555 = vmatpush1.bf16.msra.mxu0 0
      %2556 = vmatprep.subr.bf16.mxu0 0
      %2557 = vmatpush1.bf16.msra.mxu0 0
      %2558 = vmatprep.subr.bf16.mxu0 0
      %2559 = vmatpush1.bf16.msra.mxu0 0
      %2560 = vmatprep.subr.bf16.mxu0 0
      %2561 = vmatpush1.bf16.msra.mxu0 0
      %2562 = vmatprep.subr.bf16.mxu0 0
      %2563 = vmatpush1.bf16.msra.mxu0 0
      %2564 = vmatprep.subr.bf16.mxu0 0
      %2565 = vmatpush1.bf16.msra.mxu0 0
      %2566 = vmatprep.subr.bf16.mxu0 0
      %2567 = vmatpush1.bf16.msra.mxu0 0
      %2568 = vmatprep.subr.bf16.mxu0 0
      %2569 = vmatpush1.bf16.msra.mxu0 0
      %2570 = vmatprep.subr.bf16.mxu0 0
      %2571 = vmatpush1.bf16.msra.mxu0 0
      %2572 = vmatprep.subr.bf16.mxu0 0
      %2573 = vmatpush1.bf16.msra.mxu0 0
      %2574 = vmatprep.subr.bf16.mxu0 0
      %2575 = vmatpush1.bf16.msra.mxu0 0
      %2576 = vmatprep.subr.bf16.mxu0 0
      %2577 = vmatpush1.bf16.msra.mxu0 0
      %2578 = vmatprep.mubr.bf16.mxu0 0
      %2579 = vmatmul.mubr.bf16.gmra.mrb[0].mxu0 %v2535
      %v2580 = vpop.f32.mrb[0].mxu0
      %v2581 = vadd.f32 %v2532, %v2580
      %v2582 = vpop.f32.mrb[0].mxu0
      %v2583 = vpop.f32.mrb[0].mxu0
      %v2584 = vadd.f32 %v2532, %v2583
      %v2585 = vpop.f32.mrb[0].mxu0
      %2586 = vmatprep.mubr.bf16.mxu0 0
      %2587 = vmatmul.mubr.bf16.gmra.mrb[0].mxu0 %v2538
      %v2588 = vpop.f32.mrb[0].mxu0
      %v2589 = vadd.f32 %v2532, %v2588
      %v2590 = vpop.f32.mrb[0].mxu0
      %v2591 = vpop.f32.mrb[0].mxu0
      %v2592 = vadd.f32 %v2532, %v2591
      %v2593 = vpop.f32.mrb[0].mxu0
      %2594 = vmatprep.mubr.bf16.mxu0 0
      %2595 = vmatmul.mubr.bf16.gmra.mrb[0].mxu0 %v2541
      %v2596 = vpop.f32.mrb[0].mxu0
      %v2597 = vadd.f32 %v2532, %v2596
      %v2598 = vpop.f32.mrb[0].mxu0
      %v2599 = vpop.f32.mrb[0].mxu0
      %v2600 = vadd.f32 %v2532, %v2599
      %v2601 = vpop.f32.mrb[0].mxu0
      %2602 = vmatprep.mubr.bf16.mxu0 0
      %2603 = vmatmul.mubr.bf16.gmra.mrb[0].mxu0 %v2544
      %v2604 = vpop.f32.mrb[0].mxu0
      %v2605 = vadd.f32 %v2532, %v2604
      %v2606 = vpop.f32.mrb[0].mxu0
      %v2607 = vpop.f32.mrb[0].mxu0
      %v2608 = vadd.f32 %v2532, %v2607
      %v2609 = vpop.f32.mrb[0].mxu0
      %2610 = vdwg.mxu0
      %v2611 = vadd.f32 %v472, %v2581
      %v2612 = vadd.f32 %v473, %v2584
      %v2613 = vadd.f32 %v474, %v2589
      %v2614 = vadd.f32 %v475, %v2592
      %v2615 = vadd.f32 %v476, %v2597
      %v2616 = vadd.f32 %v477, %v2600
      %v2617 = vadd.f32 %v478, %v2605
      %v2618 = vadd.f32 %v479, %v2608
      %v2619 = vld [vmem:[%s8] sm:$0x1]
      %v2620 = vld [vmem:[%s9] sm:$0x1]
      %v2621 = vsel %vm482, %v2611, 0.0
      %2622 = vadd.xlane.f32.xlu0 %v2621
      %v2623 = vpop.xlane.xlu0 %2622
      %v2624 = vsel %vm482, %v2612, 0.0
      %2625 = vadd.xlane.f32.xlu0 %v2624
      %v2626 = vpop.xlane.xlu0 %2625
      %v2627 = vsel %vm482, %v2613, 0.0
      %2628 = vadd.xlane.f32.xlu0 %v2627
      %v2629 = vpop.xlane.xlu0 %2628
      %v2630 = vsel %vm482, %v2614, 0.0
      %2631 = vadd.xlane.f32.xlu0 %v2630
      %v2632 = vpop.xlane.xlu0 %2631
      %v2633 = vsel %vm482, %v2615, 0.0
      %2634 = vadd.xlane.f32.xlu0 %v2633
      %v2635 = vpop.xlane.xlu0 %2634
      %v2636 = vsel %vm482, %v2616, 0.0
      %2637 = vadd.xlane.f32.xlu0 %v2636
      %v2638 = vpop.xlane.xlu0 %2637
      %v2639 = vsel %vm482, %v2617, 0.0
      %2640 = vadd.xlane.f32.xlu0 %v2639
      %v2641 = vpop.xlane.xlu0 %2640
      %v2642 = vsel %vm482, %v2618, 0.0
      %2643 = vadd.xlane.f32.xlu0 %v2642
      %v2644 = vpop.xlane.xlu0 %2643
      %v2645 = vmul.f32 %v2623, %v507
      %v2646 = vmul.f32 %v2626, %v507
      %v2647 = vmul.f32 %v2629, %v507
      %v2648 = vmul.f32 %v2632, %v507
      %v2649 = vmul.f32 %v2635, %v507
      %v2650 = vmul.f32 %v2638, %v507
      %v2651 = vmul.f32 %v2641, %v507
      %v2652 = vmul.f32 %v2644, %v507
      %v2653 = vsub.f32 %v2611, %v2645
      %v2654 = vsub.f32 %v2612, %v2646
      %v2655 = vsub.f32 %v2613, %v2647
      %v2656 = vsub.f32 %v2614, %v2648
      %v2657 = vsub.f32 %v2615, %v2649
      %v2658 = vsub.f32 %v2616, %v2650
      %v2659 = vsub.f32 %v2617, %v2651
      %v2660 = vsub.f32 %v2618, %v2652
      %v2661 = vmul.f32 %v2653, %v2653
      %v2662 = vmul.f32 %v2654, %v2654
      %v2663 = vmul.f32 %v2655, %v2655
      %v2664 = vmul.f32 %v2656, %v2656
      %v2665 = vmul.f32 %v2657, %v2657
      %v2666 = vmul.f32 %v2658, %v2658
      %v2667 = vmul.f32 %v2659, %v2659
      %v2668 = vmul.f32 %v2660, %v2660
      %v2669 = vsel %vm482, %v2661, 0.0
      %2670 = vadd.xlane.f32.xlu0 %v2669
      %v2671 = vpop.xlane.xlu0 %2670
      %v2672 = vsel %vm482, %v2662, 0.0
      %2673 = vadd.xlane.f32.xlu0 %v2672
      %v2674 = vpop.xlane.xlu0 %2673
      %v2675 = vsel %vm482, %v2663, 0.0
      %2676 = vadd.xlane.f32.xlu0 %v2675
      %v2677 = vpop.xlane.xlu0 %2676
      %v2678 = vsel %vm482, %v2664, 0.0
      %2679 = vadd.xlane.f32.xlu0 %v2678
      %v2680 = vpop.xlane.xlu0 %2679
      %v2681 = vsel %vm482, %v2665, 0.0
      %2682 = vadd.xlane.f32.xlu0 %v2681
      %v2683 = vpop.xlane.xlu0 %2682
      %v2684 = vsel %vm482, %v2666, 0.0
      %2685 = vadd.xlane.f32.xlu0 %v2684
      %v2686 = vpop.xlane.xlu0 %2685
      %v2687 = vsel %vm482, %v2667, 0.0
      %2688 = vadd.xlane.f32.xlu0 %v2687
      %v2689 = vpop.xlane.xlu0 %2688
      %v2690 = vsel %vm482, %v2668, 0.0
      %2691 = vadd.xlane.f32.xlu0 %v2690
      %v2692 = vpop.xlane.xlu0 %2691
      %v2693 = vmul.f32 %v2671, %v507
      %v2694 = vmul.f32 %v2674, %v507
      %v2695 = vmul.f32 %v2677, %v507
      %v2696 = vmul.f32 %v2680, %v507
      %v2697 = vmul.f32 %v2683, %v507
      %v2698 = vmul.f32 %v2686, %v507
      %v2699 = vmul.f32 %v2689, %v507
      %v2700 = vmul.f32 %v2692, %v507
      %v2701 = vadd.f32 %v2693, 1e-05
      %v2702 = vadd.f32 %v2694, 1e-05
      %v2703 = vadd.f32 %v2695, 1e-05
      %v2704 = vadd.f32 %v2696, 1e-05
      %v2705 = vadd.f32 %v2697, 1e-05
      %v2706 = vadd.f32 %v2698, 1e-05
      %v2707 = vadd.f32 %v2699, 1e-05
      %v2708 = vadd.f32 %v2700, 1e-05
      %v2709 = vrsqrt.pop %v2701
      %v2710 = vrsqrt.pop %v2702
      %v2711 = vrsqrt.pop %v2703
      %v2712 = vrsqrt.pop %v2704
      %v2713 = vrsqrt.pop %v2705
      %v2714 = vrsqrt.pop %v2706
      %v2715 = vrsqrt.pop %v2707
      %v2716 = vrsqrt.pop %v2708
      %v2717 = vmul.f32 %v2653, %v2709
      %v2718 = vmul.f32 %v2654, %v2710
      %v2719 = vmul.f32 %v2655, %v2711
      %v2720 = vmul.f32 %v2656, %v2712
      %v2721 = vmul.f32 %v2657, %v2713
      %v2722 = vmul.f32 %v2658, %v2714
      %v2723 = vmul.f32 %v2659, %v2715
      %v2724 = vmul.f32 %v2660, %v2716
      %v2726 = vlaneseq
      %v2727 = vshrl.u32 %v2726, 7
      %v2728 = vsub.s32 0, %v2727
      %v2729 = vrot.slane %v2619, %v2728
      %v2731 = vmul.f32 %v2717, %v2729
      %v2732 = vmul.f32 %v2718, %v2729
      %v2733 = vmul.f32 %v2719, %v2729
      %v2734 = vmul.f32 %v2720, %v2729
      %v2735 = vmul.f32 %v2721, %v2729
      %v2736 = vmul.f32 %v2722, %v2729
      %v2737 = vmul.f32 %v2723, %v2729
      %v2738 = vmul.f32 %v2724, %v2729
      %v2740 = vlaneseq
      %v2741 = vshrl.u32 %v2740, 7
      %v2742 = vsub.s32 0, %v2741
      %v2743 = vrot.slane %v2620, %v2742
      %v2745 = vadd.f32 %v2731, %v2743
      %v2746 = vadd.f32 %v2732, %v2743
      %v2747 = vadd.f32 %v2733, %v2743
      %v2748 = vadd.f32 %v2734, %v2743
      %v2749 = vadd.f32 %v2735, %v2743
      %v2750 = vadd.f32 %v2736, %v2743
      %v2751 = vadd.f32 %v2737, %v2743
      %v2752 = vadd.f32 %v2738, %v2743
      %v2753 = vld [vmem:[%s10] sm:$0xff]
      %v2754 = vld [vmem:[%s10 + $0x8] sm:$0xff]
      %v2755 = vld [vmem:[%s10 + $0x10] sm:$0xff]
      %v2756 = vld [vmem:[%s10 + $0x18] sm:$0xff]
      %v2757 = vld [vmem:[%s11] sm:$0x1]
      %v2758 = vpack.c.bf16 %v2746, %v2745
      %v2759 = vpack.c.bf16 %v2748, %v2747
      %v2760 = vpack.c.bf16 %v2750, %v2749
      %v2761 = vpack.c.bf16 %v2752, %v2751
      %v2762 = vpack.c.bf16 %v2754, %v2753
      %v2763 = vpack.c.bf16 %v2756, %v2755
      %v2765 = vlaneseq
      %v2766 = vshrl.u32 %v2765, 7
      %v2767 = vsub.s32 0, %v2766
      %v2768 = vrot.slane %v2757, %v2767
      %v2771 = vsel %vm482, %v2758, 0
      %v2774 = vsel %vm482, %v2759, 0
      %v2777 = vsel %vm482, %v2760, 0
      %v2780 = vsel %vm482, %v2761, 0
      %2782 = vmatprep.subr.bf16.mxu0 0
      %2783 = vmatpush1.bf16.msra.mxu0 %v2762
      %2784 = vmatprep.subr.bf16.mxu0 0
      %2785 = vmatpush1.bf16.msra.mxu0 %v2763
      %2786 = vmatprep.subr.bf16.mxu0 0
      %2787 = vmatpush1.bf16.msra.mxu0 0
      %2788 = vmatprep.subr.bf16.mxu0 0
      %2789 = vmatpush1.bf16.msra.mxu0 0
      %2790 = vmatprep.subr.bf16.mxu0 0
      %2791 = vmatpush1.bf16.msra.mxu0 0
      %2792 = vmatprep.subr.bf16.mxu0 0
      %2793 = vmatpush1.bf16.msra.mxu0 0
      %2794 = vmatprep.subr.bf16.mxu0 0
      %2795 = vmatpush1.bf16.msra.mxu0 0
      %2796 = vmatprep.subr.bf16.mxu0 0
      %2797 = vmatpush1.bf16.msra.mxu0 0
      %2798 = vmatprep.subr.bf16.mxu0 0
      %2799 = vmatpush1.bf16.msra.mxu0 0
      %2800 = vmatprep.subr.bf16.mxu0 0
      %2801 = vmatpush1.bf16.msra.mxu0 0
      %2802 = vmatprep.subr.bf16.mxu0 0
      %2803 = vmatpush1.bf16.msra.mxu0 0
      %2804 = vmatprep.subr.bf16.mxu0 0
      %2805 = vmatpush1.bf16.msra.mxu0 0
      %2806 = vmatprep.subr.bf16.mxu0 0
      %2807 = vmatpush1.bf16.msra.mxu0 0
      %2808 = vmatprep.subr.bf16.mxu0 0
      %2809 = vmatpush1.bf16.msra.mxu0 0
      %2810 = vmatprep.subr.bf16.mxu0 0
      %2811 = vmatpush1.bf16.msra.mxu0 0
      %2812 = vmatprep.subr.bf16.mxu0 0
      %2813 = vmatpush1.bf16.msra.mxu0 0
      %2814 = vmatprep.mubr.bf16.mxu0 0
      %2815 = vmatmul.mubr.bf16.gmra.mrb[0].mxu0 %v2771
      %v2816 = vpop.f32.mrb[0].mxu0
      %v2817 = vadd.f32 %v2768, %v2816
      %v2818 = vpop.f32.mrb[0].mxu0
      %v2819 = vpop.f32.mrb[0].mxu0
      %v2820 = vadd.f32 %v2768, %v2819
      %v2821 = vpop.f32.mrb[0].mxu0
      %2822 = vmatprep.mubr.bf16.mxu0 0
      %2823 = vmatmul.mubr.bf16.gmra.mrb[0].mxu0 %v2774
      %v2824 = vpop.f32.mrb[0].mxu0
      %v2825 = vadd.f32 %v2768, %v2824
      %v2826 = vpop.f32.mrb[0].mxu0
      %v2827 = vpop.f32.mrb[0].mxu0
      %v2828 = vadd.f32 %v2768, %v2827
      %v2829 = vpop.f32.mrb[0].mxu0
      %2830 = vmatprep.mubr.bf16.mxu0 0
      %2831 = vmatmul.mubr.bf16.gmra.mrb[0].mxu0 %v2777
      %v2832 = vpop.f32.mrb[0].mxu0
      %v2833 = vadd.f32 %v2768, %v2832
      %v2834 = vpop.f32.mrb[0].mxu0
      %v2835 = vpop.f32.mrb[0].mxu0
      %v2836 = vadd.f32 %v2768, %v2835
      %v2837 = vpop.f32.mrb[0].mxu0
      %2838 = vmatprep.mubr.bf16.mxu0 0
      %2839 = vmatmul.mubr.bf16.gmra.mrb[0].mxu0 %v2780
      %v2840 = vpop.f32.mrb[0].mxu0
      %v2841 = vadd.f32 %v2768, %v2840
      %v2842 = vpop.f32.mrb[0].mxu0
      %v2843 = vpop.f32.mrb[0].mxu0
      %v2844 = vadd.f32 %v2768, %v2843
      %v2845 = vpop.f32.mrb[0].mxu0
      %2846 = vdwg.mxu0
      %v2847 = vmul.f32 %v2817, 0.5
      %v2848 = vmul.f32 %v2820, 0.5
      %v2849 = vmul.f32 %v2825, 0.5
      %v2850 = vmul.f32 %v2828, 0.5
      %v2851 = vmul.f32 %v2833, 0.5
      %v2852 = vmul.f32 %v2836, 0.5
      %v2853 = vmul.f32 %v2841, 0.5
      %v2854 = vmul.f32 %v2844, 0.5
      %v2855 = vmul.f32 %v2817, 0.70710677
      %v2856 = vmul.f32 %v2820, 0.70710677
      %v2857 = vmul.f32 %v2825, 0.70710677
      %v2858 = vmul.f32 %v2828, 0.70710677
      %v2859 = vmul.f32 %v2833, 0.70710677
      %v2860 = vmul.f32 %v2836, 0.70710677
      %v2861 = vmul.f32 %v2841, 0.70710677
      %v2862 = vmul.f32 %v2844, 0.70710677
      %vm2863 = vcmp.ge.f32.partialorder %v2855, 0.0
      %vm2864 = vcmp.ge.f32.partialorder %v2856, 0.0
      %vm2865 = vcmp.ge.f32.partialorder %v2857, 0.0
      %vm2866 = vcmp.ge.f32.partialorder %v2858, 0.0
      %vm2867 = vcmp.ge.f32.partialorder %v2859, 0.0
      %vm2868 = vcmp.ge.f32.partialorder %v2860, 0.0
      %vm2869 = vcmp.ge.f32.partialorder %v2861, 0.0
      %vm2870 = vcmp.ge.f32.partialorder %v2862, 0.0
      %v2871 = vsel %vm2863, 1.0, -1.0
      %v2872 = vsel %vm2864, 1.0, -1.0
      %v2873 = vsel %vm2865, 1.0, -1.0
      %v2874 = vsel %vm2866, 1.0, -1.0
      %v2875 = vsel %vm2867, 1.0, -1.0
      %v2876 = vsel %vm2868, 1.0, -1.0
      %v2877 = vsel %vm2869, 1.0, -1.0
      %v2878 = vsel %vm2870, 1.0, -1.0
      %v2879 = vand.u32 2147483647, %v2855
      %v2880 = vand.u32 2147483647, %v2856
      %v2881 = vand.u32 2147483647, %v2857
      %v2882 = vand.u32 2147483647, %v2858
      %v2883 = vand.u32 2147483647, %v2859
      %v2884 = vand.u32 2147483647, %v2860
      %v2885 = vand.u32 2147483647, %v2861
      %v2886 = vand.u32 2147483647, %v2862
      %v2887 = vmul.f32 %v2879, 0.3275911
      %v2888 = vmul.f32 %v2880, 0.3275911
      %v2889 = vmul.f32 %v2881, 0.3275911
      %v2890 = vmul.f32 %v2882, 0.3275911
      %v2891 = vmul.f32 %v2883, 0.3275911
      %v2892 = vmul.f32 %v2884, 0.3275911
      %v2893 = vmul.f32 %v2885, 0.3275911
      %v2894 = vmul.f32 %v2886, 0.3275911
      %v2895 = vadd.f32 %v2887, 1.0
      %v2896 = vadd.f32 %v2888, 1.0
      %v2897 = vadd.f32 %v2889, 1.0
      %v2898 = vadd.f32 %v2890, 1.0
      %v2899 = vadd.f32 %v2891, 1.0
      %v2900 = vadd.f32 %v2892, 1.0
      %v2901 = vadd.f32 %v2893, 1.0
      %v2902 = vadd.f32 %v2894, 1.0
      %v2903 = vrcp.pop %v2895
      %v2904 = vmul.f32 1.0, %v2903
      %v2905 = vrcp.pop %v2896
      %v2906 = vmul.f32 1.0, %v2905
      %v2907 = vrcp.pop %v2897
      %v2908 = vmul.f32 1.0, %v2907
      %v2909 = vrcp.pop %v2898
      %v2910 = vmul.f32 1.0, %v2909
      %v2911 = vrcp.pop %v2899
      %v2912 = vmul.f32 1.0, %v2911
      %v2913 = vrcp.pop %v2900
      %v2914 = vmul.f32 1.0, %v2913
      %v2915 = vrcp.pop %v2901
      %v2916 = vmul.f32 1.0, %v2915
      %v2917 = vrcp.pop %v2902
      %v2918 = vmul.f32 1.0, %v2917
      %v2919 = vmul.f32 %v2904, 1.0614054
      %v2920 = vmul.f32 %v2906, 1.0614054
      %v2921 = vmul.f32 %v2908, 1.0614054
      %v2922 = vmul.f32 %v2910, 1.0614054
      %v2923 = vmul.f32 %v2912, 1.0614054
      %v2924 = vmul.f32 %v2914, 1.0614054
      %v2925 = vmul.f32 %v2916, 1.0614054
      %v2926 = vmul.f32 %v2918, 1.0614054
      %v2927 = vadd.f32 %v2919, -1.4531521
      %v2928 = vadd.f32 %v2920, -1.4531521
      %v2929 = vadd.f32 %v2921, -1.4531521
      %v2930 = vadd.f32 %v2922, -1.4531521
      %v2931 = vadd.f32 %v2923, -1.4531521
      %v2932 = vadd.f32 %v2924, -1.4531521
      %v2933 = vadd.f32 %v2925, -1.4531521
      %v2934 = vadd.f32 %v2926, -1.4531521
      %v2935 = vmul.f32 %v2927, %v2904
      %v2936 = vmul.f32 %v2928, %v2906
      %v2937 = vmul.f32 %v2929, %v2908
      %v2938 = vmul.f32 %v2930, %v2910
      %v2939 = vmul.f32 %v2931, %v2912
      %v2940 = vmul.f32 %v2932, %v2914
      %v2941 = vmul.f32 %v2933, %v2916
      %v2942 = vmul.f32 %v2934, %v2918
      %v2943 = vadd.f32 %v2935, 1.4214138
      %v2944 = vadd.f32 %v2936, 1.4214138
      %v2945 = vadd.f32 %v2937, 1.4214138
      %v2946 = vadd.f32 %v2938, 1.4214138
      %v2947 = vadd.f32 %v2939, 1.4214138
      %v2948 = vadd.f32 %v2940, 1.4214138
      %v2949 = vadd.f32 %v2941, 1.4214138
      %v2950 = vadd.f32 %v2942, 1.4214138
      %v2951 = vmul.f32 %v2943, %v2904
      %v2952 = vmul.f32 %v2944, %v2906
      %v2953 = vmul.f32 %v2945, %v2908
      %v2954 = vmul.f32 %v2946, %v2910
      %v2955 = vmul.f32 %v2947, %v2912
      %v2956 = vmul.f32 %v2948, %v2914
      %v2957 = vmul.f32 %v2949, %v2916
      %v2958 = vmul.f32 %v2950, %v2918
      %v2959 = vadd.f32 %v2951, -0.28449672
      %v2960 = vadd.f32 %v2952, -0.28449672
      %v2961 = vadd.f32 %v2953, -0.28449672
      %v2962 = vadd.f32 %v2954, -0.28449672
      %v2963 = vadd.f32 %v2955, -0.28449672
      %v2964 = vadd.f32 %v2956, -0.28449672
      %v2965 = vadd.f32 %v2957, -0.28449672
      %v2966 = vadd.f32 %v2958, -0.28449672
      %v2967 = vmul.f32 %v2959, %v2904
      %v2968 = vmul.f32 %v2960, %v2906
      %v2969 = vmul.f32 %v2961, %v2908
      %v2970 = vmul.f32 %v2962, %v2910
      %v2971 = vmul.f32 %v2963, %v2912
      %v2972 = vmul.f32 %v2964, %v2914
      %v2973 = vmul.f32 %v2965, %v2916
      %v2974 = vmul.f32 %v2966, %v2918
      %v2975 = vadd.f32 %v2967, 0.2548296
      %v2976 = vadd.f32 %v2968, 0.2548296
      %v2977 = vadd.f32 %v2969, 0.2548296
      %v2978 = vadd.f32 %v2970, 0.2548296
      %v2979 = vadd.f32 %v2971, 0.2548296
      %v2980 = vadd.f32 %v2972, 0.2548296
      %v2981 = vadd.f32 %v2973, 0.2548296
      %v2982 = vadd.f32 %v2974, 0.2548296
      %v2983 = vmul.f32 %v2975, %v2904
      %v2984 = vmul.f32 %v2976, %v2906
      %v2985 = vmul.f32 %v2977, %v2908
      %v2986 = vmul.f32 %v2978, %v2910
      %v2987 = vmul.f32 %v2979, %v2912
      %v2988 = vmul.f32 %v2980, %v2914
      %v2989 = vmul.f32 %v2981, %v2916
      %v2990 = vmul.f32 %v2982, %v2918
      %v2991 = vsub.f32 0.0, %v2879
      %v2992 = vsub.f32 0.0, %v2880
      %v2993 = vsub.f32 0.0, %v2881
      %v2994 = vsub.f32 0.0, %v2882
      %v2995 = vsub.f32 0.0, %v2883
      %v2996 = vsub.f32 0.0, %v2884
      %v2997 = vsub.f32 0.0, %v2885
      %v2998 = vsub.f32 0.0, %v2886
      %v2999 = vmul.f32 %v2991, %v2879
      %v3000 = vmul.f32 %v2992, %v2880
      %v3001 = vmul.f32 %v2993, %v2881
      %v3002 = vmul.f32 %v2994, %v2882
      %v3003 = vmul.f32 %v2995, %v2883
      %v3004 = vmul.f32 %v2996, %v2884
      %v3005 = vmul.f32 %v2997, %v2885
      %v3006 = vmul.f32 %v2998, %v2886
      %v3007 = vmul.f32 %v2999, 1.442695
      %v3008 = vpow.pop %v3007
      %v3009 = vmul.f32 %v3000, 1.442695
      %v3010 = vpow.pop %v3009
      %v3011 = vmul.f32 %v3001, 1.442695
      %v3012 = vpow.pop %v3011
      %v3013 = vmul.f32 %v3002, 1.442695
      %v3014 = vpow.pop %v3013
      %v3015 = vmul.f32 %v3003, 1.442695
      %v3016 = vpow.pop %v3015
      %v3017 = vmul.f32 %v3004, 1.442695
      %v3018 = vpow.pop %v3017
      %v3019 = vmul.f32 %v3005, 1.442695
      %v3020 = vpow.pop %v3019
      %v3021 = vmul.f32 %v3006, 1.442695
      %v3022 = vpow.pop %v3021
      %v3023 = vmul.f32 %v2983, %v3008
      %v3024 = vmul.f32 %v2984, %v3010
      %v3025 = vmul.f32 %v2985, %v3012
      %v3026 = vmul.f32 %v2986, %v3014
      %v3027 = vmul.f32 %v2987, %v3016
      %v3028 = vmul.f32 %v2988, %v3018
      %v3029 = vmul.f32 %v2989, %v3020
      %v3030 = vmul.f32 %v2990, %v3022
      %v3031 = vsub.f32 1.0, %v3023
      %v3032 = vsub.f32 1.0, %v3024
      %v3033 = vsub.f32 1.0, %v3025
      %v3034 = vsub.f32 1.0, %v3026
      %v3035 = vsub.f32 1.0, %v3027
      %v3036 = vsub.f32 1.0, %v3028
      %v3037 = vsub.f32 1.0, %v3029
      %v3038 = vsub.f32 1.0, %v3030
      %v3039 = vmul.f32 %v2871, %v3031
      %v3040 = vmul.f32 %v2872, %v3032
      %v3041 = vmul.f32 %v2873, %v3033
      %v3042 = vmul.f32 %v2874, %v3034
      %v3043 = vmul.f32 %v2875, %v3035
      %v3044 = vmul.f32 %v2876, %v3036
      %v3045 = vmul.f32 %v2877, %v3037
      %v3046 = vmul.f32 %v2878, %v3038
      %v3047 = vadd.f32 %v3039, 1.0
      %v3048 = vadd.f32 %v3040, 1.0
      %v3049 = vadd.f32 %v3041, 1.0
      %v3050 = vadd.f32 %v3042, 1.0
      %v3051 = vadd.f32 %v3043, 1.0
      %v3052 = vadd.f32 %v3044, 1.0
      %v3053 = vadd.f32 %v3045, 1.0
      %v3054 = vadd.f32 %v3046, 1.0
      %v3055 = vmul.f32 %v2847, %v3047
      %v3056 = vmul.f32 %v2848, %v3048
      %v3057 = vmul.f32 %v2849, %v3049
      %v3058 = vmul.f32 %v2850, %v3050
      %v3059 = vmul.f32 %v2851, %v3051
      %v3060 = vmul.f32 %v2852, %v3052
      %v3061 = vmul.f32 %v2853, %v3053
      %v3062 = vmul.f32 %v2854, %v3054
      %v3063 = vld [vmem:[%s12] sm:$0xff]
      %v3064 = vld [vmem:[%s12 + $0x8] sm:$0xff]
      %v3065 = vld [vmem:[%s12 + $0x10] sm:$0xff]
      %v3066 = vld [vmem:[%s12 + $0x18] sm:$0xff]
      %v3067 = vld [vmem:[%s12 + $0x20] sm:$0xff]
      %v3068 = vld [vmem:[%s12 + $0x28] sm:$0xff]
      %v3069 = vld [vmem:[%s12 + $0x30] sm:$0xff]
      %v3070 = vld [vmem:[%s12 + $0x38] sm:$0xff]
      %v3071 = vld [vmem:[%s12 + $0x40] sm:$0xff]
      %v3072 = vld [vmem:[%s12 + $0x48] sm:$0xff]
      %v3073 = vld [vmem:[%s12 + $0x50] sm:$0xff]
      %v3074 = vld [vmem:[%s12 + $0x58] sm:$0xff]
      %v3075 = vld [vmem:[%s12 + $0x60] sm:$0xff]
      %v3076 = vld [vmem:[%s12 + $0x68] sm:$0xff]
      %v3077 = vld [vmem:[%s12 + $0x70] sm:$0xff]
      %v3078 = vld [vmem:[%s12 + $0x78] sm:$0xff]
      %v3079 = vld [vmem:[%s13] sm:$0x1]
      %v3080 = vpack.c.bf16 %v3056, %v3055
      %v3081 = vpack.c.bf16 %v3058, %v3057
      %v3082 = vpack.c.bf16 %v3060, %v3059
      %v3083 = vpack.c.bf16 %v3062, %v3061
      %v3084 = vpack.c.bf16 %v3064, %v3063
      %v3085 = vpack.c.bf16 %v3066, %v3065
      %v3086 = vpack.c.bf16 %v3068, %v3067
      %v3087 = vpack.c.bf16 %v3070, %v3069
      %v3088 = vpack.c.bf16 %v3072, %v3071
      %v3089 = vpack.c.bf16 %v3074, %v3073
      %v3090 = vpack.c.bf16 %v3076, %v3075
      %v3091 = vpack.c.bf16 %v3078, %v3077
      %v3093 = vlaneseq
      %v3094 = vshrl.u32 %v3093, 7
      %v3095 = vsub.s32 0, %v3094
      %v3096 = vrot.slane %v3079, %v3095
      %3098 = vmatprep.subr.bf16.mxu0 0
      %3099 = vmatpush1.bf16.msra.mxu0 %v3084
      %3100 = vmatprep.subr.bf16.mxu0 0
      %3101 = vmatpush1.bf16.msra.mxu0 %v3085
      %3102 = vmatprep.subr.bf16.mxu0 0
      %3103 = vmatpush1.bf16.msra.mxu0 %v3086
      %3104 = vmatprep.subr.bf16.mxu0 0
      %3105 = vmatpush1.bf16.msra.mxu0 %v3087
      %3106 = vmatprep.subr.bf16.mxu0 0
      %3107 = vmatpush1.bf16.msra.mxu0 %v3088
      %3108 = vmatprep.subr.bf16.mxu0 0
      %3109 = vmatpush1.bf16.msra.mxu0 %v3089
      %3110 = vmatprep.subr.bf16.mxu0 0
      %3111 = vmatpush1.bf16.msra.mxu0 %v3090
      %3112 = vmatprep.subr.bf16.mxu0 0
      %3113 = vmatpush1.bf16.msra.mxu0 %v3091
      %3114 = vmatprep.subr.bf16.mxu0 0
      %3115 = vmatpush1.bf16.msra.mxu0 0
      %3116 = vmatprep.subr.bf16.mxu0 0
      %3117 = vmatpush1.bf16.msra.mxu0 0
      %3118 = vmatprep.subr.bf16.mxu0 0
      %3119 = vmatpush1.bf16.msra.mxu0 0
      %3120 = vmatprep.subr.bf16.mxu0 0
      %3121 = vmatpush1.bf16.msra.mxu0 0
      %3122 = vmatprep.subr.bf16.mxu0 0
      %3123 = vmatpush1.bf16.msra.mxu0 0
      %3124 = vmatprep.subr.bf16.mxu0 0
      %3125 = vmatpush1.bf16.msra.mxu0 0
      %3126 = vmatprep.subr.bf16.mxu0 0
      %3127 = vmatpush1.bf16.msra.mxu0 0
      %3128 = vmatprep.subr.bf16.mxu0 0
      %3129 = vmatpush1.bf16.msra.mxu0 0
      %3130 = vmatprep.mubr.bf16.mxu0 0
      %3131 = vmatmul.mubr.bf16.gmra.mrb[0].mxu0 %v3080
      %v3132 = vpop.f32.mrb[0].mxu0
      %v3133 = vadd.f32 %v3096, %v3132
      %v3134 = vpop.f32.mrb[0].mxu0
      %v3135 = vpop.f32.mrb[0].mxu0
      %v3136 = vadd.f32 %v3096, %v3135
      %v3137 = vpop.f32.mrb[0].mxu0
      %3138 = vmatprep.mubr.bf16.mxu0 0
      %3139 = vmatmul.mubr.bf16.gmra.mrb[0].mxu0 %v3081
      %v3140 = vpop.f32.mrb[0].mxu0
      %v3141 = vadd.f32 %v3096, %v3140
      %v3142 = vpop.f32.mrb[0].mxu0
      %v3143 = vpop.f32.mrb[0].mxu0
      %v3144 = vadd.f32 %v3096, %v3143
      %v3145 = vpop.f32.mrb[0].mxu0
      %3146 = vmatprep.mubr.bf16.mxu0 0
      %3147 = vmatmul.mubr.bf16.gmra.mrb[0].mxu0 %v3082
      %v3148 = vpop.f32.mrb[0].mxu0
      %v3149 = vadd.f32 %v3096, %v3148
      %v3150 = vpop.f32.mrb[0].mxu0
      %v3151 = vpop.f32.mrb[0].mxu0
      %v3152 = vadd.f32 %v3096, %v3151
      %v3153 = vpop.f32.mrb[0].mxu0
      %3154 = vmatprep.mubr.bf16.mxu0 0
      %3155 = vmatmul.mubr.bf16.gmra.mrb[0].mxu0 %v3083
      %v3156 = vpop.f32.mrb[0].mxu0
      %v3157 = vadd.f32 %v3096, %v3156
      %v3158 = vpop.f32.mrb[0].mxu0
      %v3159 = vpop.f32.mrb[0].mxu0
      %v3160 = vadd.f32 %v3096, %v3159
      %v3161 = vpop.f32.mrb[0].mxu0
      %3162 = vdwg.mxu0
      %v3163 = vadd.f32 %v2611, %v3133
      %v3164 = vadd.f32 %v2612, %v3136
      %v3165 = vadd.f32 %v2613, %v3141
      %v3166 = vadd.f32 %v2614, %v3144
      %v3167 = vadd.f32 %v2615, %v3149
      %v3168 = vadd.f32 %v2616, %v3152
      %v3169 = vadd.f32 %v2617, %v3157
      %v3170 = vadd.f32 %v2618, %v3160
      %3171 = vst.msk [vmem:[%s469] sm:$0xff] %vm482, %v3163
      %3172 = vst.msk [vmem:[%s469 + $0x8] sm:$0xff] %vm482, %v3164
      %3173 = vst.msk [vmem:[%s469 + $0x10] sm:$0xff] %vm482, %v3165
      %3174 = vst.msk [vmem:[%s469 + $0x18] sm:$0xff] %vm482, %v3166
      %3175 = vst.msk [vmem:[%s469 + $0x20] sm:$0xff] %vm482, %v3167
      %3176 = vst.msk [vmem:[%s469 + $0x28] sm:$0xff] %vm482, %v3168
      %3177 = vst.msk [vmem:[%s469 + $0x30] sm:$0xff] %vm482, %v3169
      %3178 = vst.msk [vmem:[%s469 + $0x38] sm:$0xff] %vm482, %v3170
      %s3179 = smul.u32 8, %s25
      %p3180 = scmp.lt.s32.totalorder %s3179, 15
      %s3181 = scalar_select %p3180, %s3179, 15
      %s3182 = smul.addr %s3181, 8
      %s3183 = scalar_lea.vmem %s14, %s3182
      // Predicated region
      $region77: #{swin_block_forward.1} parent=75 // pred_check
        %p3184 = pneg %p342
      $region78: #{swin_block_forward.1} parent=75 // pred_check_branch
        %3186 = sbr.rel (%p3184) target = $region80
      $region79: #{swin_block_forward.1} parent=75 // pred_region
        %s3187 = smul.u32 8, %s25
      $region80: #{swin_block_forward.1} parent=75 // pred_fallthru
        _
    $region76: #{swin_block_forward.1} parent=5 // pred_fallthru
      _
    %p3188 = scmp.le.s32.totalorder 2, %s20
    // Predicated region
    $region81: #{swin_block_forward.1} parent=5 // pred_check
      %p3189 = pneg %p3188
    $region82: #{swin_block_forward.1} parent=5 // pred_check_branch
      %3191 = sbr.rel (%p3189) target = $region84
    $region83: #{swin_block_forward.1} parent=5 // pred_region
      %s3192 = ssub.s32 %s20, 2
      // Predicated region
      $region85: #{swin_block_forward.1} parent=83 // pred_check
        %p3193 = pneg %p348
      $region86: #{swin_block_forward.1} parent=83 // pred_check_branch
        %3195 = sbr.rel (%p3193) target = $region88
      $region87: #{swin_block_forward.1} parent=83 // pred_region
        %s3196 = smul.u32 8, %s26
        %p3197 = scmp.lt.s32.totalorder %s3196, 15
        %s3198 = scalar_select %p3197, %s3196, 15
        %s3199 = smul.addr %s3198, 8
        %s3200 = scalar_lea.vmem %s14, %s3199
      $region88: #{swin_block_forward.1} parent=83 // pred_fallthru
        _
    $region84: #{swin_block_forward.1} parent=5 // pred_fallthru
      _
  $region6: #{swin_block_forward.1} parent=0 // loop_footer
    %s24 = sadd.s32 1, %s20
  $region7: #{swin_block_forward.1} parent=0 // loop_footer_branch
    %19 = sbr.rel target = $region3
  $region8: #{swin_block_forward.1} parent=0 // loop_exit
    _

</llo_original>
